<compile_context>
chip_gen: v5e
topology: v5e:2x2
jax: 0.10.0
libtpu: 0.0.40
codegen_flags: <defaults>
</compile_context>

<pallas_src>
import jax
import jax.numpy as jnp
from jax import lax
from jax.experimental import pallas as pl
from jax.experimental.pallas import tpu as pltpu


def lstm_recurrence_kernel(gx_ref, whh_hbm, h_out_ref,
                           whh_vmem, dma_sem, h_scr, c_scr):
    """One grid step = T LSTM time steps (recurrence only).

    gx_ref   : (T*B, 4H) bf16  precomputed x @ W_ih^T + b, time-major flat
    whh_hbm  : (H, 4H)   bf16  hidden->gates weights in HBM (pl.ANY)
    h_out_ref: (T*B, H)  bf16  hidden states for these steps (time-major flat)
    whh_vmem : (H, 4H)   bf16  single-buffered VMEM copy of W_hh (scratch)
    dma_sem  : DMA semaphore for the one-time weight copy
    h_scr    : (B, H)    f32   carried hidden state (VMEM scratch)
    c_scr    : (B, H)    f32   carried cell state   (VMEM scratch)
    """
    B, H = h_scr.shape
    T = gx_ref.shape[0] // B

    @pl.when(pl.program_id(0) == 0)
    def _():
        h_scr[...] = jnp.zeros_like(h_scr)
        c_scr[...] = jnp.zeros_like(c_scr)
        # One-time HBM -> VMEM copy of the loop-invariant weight (no
        # double-buffer reserved, never re-DMA'd on later grid steps).
        cp = pltpu.make_async_copy(whh_hbm, whh_vmem, dma_sem)
        cp.start()
        cp.wait()

    h = h_scr[...]                       # (B, H) f32
    c = c_scr[...]                       # (B, H) f32

    # Static Python unroll: T is small/static, slice starts are compile-time
    # constants -> dense, statically addressed loads/stores.  Live state per
    # iteration is tiny (h, c = 1 vreg each; gates = 4 vregs), no spill risk.
    for tt in range(T):
        rows = pl.ds(tt * B, B)          # static offset
        gates = gx_ref[rows, :].astype(jnp.float32) + jnp.dot(
            h.astype(jnp.bfloat16), whh_vmem[...],       # read weight from VMEM
            preferred_element_type=jnp.float32)           # (B, 4H) f32; i,f,g,o
        i_g = jax.nn.sigmoid(gates[:, 0 * H:1 * H])
        f_g = jax.nn.sigmoid(gates[:, 1 * H:2 * H])
        g_g = jnp.tanh(gates[:, 2 * H:3 * H])
        o_g = jax.nn.sigmoid(gates[:, 3 * H:4 * H])
        c = f_g * c + i_g * g_g
        h = o_g * jnp.tanh(c)
        h_out_ref[rows, :] = h.astype(h_out_ref.dtype)

    h_scr[...] = h
    c_scr[...] = c


def init_params(key, embed_size, hidden_size, vocab_size):
    ks = jax.random.split(key, 7)
    s = 0.1
    return {
        "embed": s * jax.random.normal(ks[0], (vocab_size, embed_size), jnp.float32),
        "w_ih":  s * jax.random.normal(ks[1], (4 * hidden_size, embed_size), jnp.float32),
        "w_hh":  s * jax.random.normal(ks[2], (4 * hidden_size, hidden_size), jnp.float32),
        "b_ih":  s * jax.random.normal(ks[3], (4 * hidden_size,), jnp.float32),
        "b_hh":  s * jax.random.normal(ks[4], (4 * hidden_size,), jnp.float32),
        "w_lin": s * jax.random.normal(ks[5], (vocab_size, hidden_size), jnp.float32),
        "b_lin": s * jax.random.normal(ks[6], (vocab_size,), jnp.float32),
    }


def decoder_forward_pallas(features, captions, params, *, block_t=16):
    """features: (B, E) float32, captions: (B, L) int32 -> (B, L, V) float32."""
    emb = jnp.take(params["embed"], captions, axis=0)                 # (B, L, E)
    # Only the first L inputs matter (the last LSTM output is dropped).
    x = jnp.concatenate([features[:, None, :], emb[:, :-1, :]], axis=1)
    x_tm = jnp.transpose(x, (1, 0, 2)).astype(jnp.float32)            # (L, B, E)

    L, B, E = x_tm.shape
    H = params["w_hh"].shape[1]
    V = params["w_lin"].shape[0]

    # ---- hoisted input->gates GEMM: one (L*B, E) x (E, 4H) matmul ----------
    w_ih_t = params["w_ih"].T.astype(jnp.bfloat16)                    # (E, 4H)
    b = (params["b_ih"] + params["b_hh"]).astype(jnp.float32)         # (4H,)
    gates_x = jnp.dot(x_tm.reshape(L * B, E).astype(jnp.bfloat16), w_ih_t,
                      preferred_element_type=jnp.float32)
    # Store the dominant HBM stream in bf16 (halves writeback + per-step DMA).
    gates_x = (gates_x.reshape(L, B, 4 * H) + b).astype(jnp.bfloat16)

    # ---- recurrent Pallas kernel: BLOCK_T steps per grid iteration ---------
    T = min(block_t, L)
    n_blocks = pl.cdiv(L, T)
    L_pad = n_blocks * T
    if L_pad != L:
        gates_x = jnp.pad(gates_x, ((0, L_pad - L), (0, 0), (0, 0)))
    gates_x = gates_x.reshape(L_pad * B, 4 * H)                       # time-major flat

    w_hh_t = params["w_hh"].T.astype(jnp.bfloat16)                    # (H, 4H)

    h_flat = pl.pallas_call(
        lstm_recurrence_kernel,
        out_shape=jax.ShapeDtypeStruct((L_pad * B, H), jnp.bfloat16),
        grid_spec=pltpu.PrefetchScalarGridSpec(
            num_scalar_prefetch=0,
            grid=(n_blocks,),
            in_specs=[
                pl.BlockSpec((T * B, 4 * H), lambda t: (t, 0)),       # gates stream
                pl.BlockSpec(memory_space=pl.ANY),                    # W_hh stays in HBM
            ],
            out_specs=pl.BlockSpec((T * B, H), lambda t: (t, 0)),
            scratch_shapes=[
                pltpu.VMEM((H, 4 * H), jnp.bfloat16),                 # single-buffered W_hh
                pltpu.SemaphoreType.DMA(()),
                pltpu.VMEM((B, H), jnp.float32),                      # carried h
                pltpu.VMEM((B, H), jnp.float32),                      # carried c
            ],
        ),
        compiler_params=pltpu.CompilerParams(
            dimension_semantics=("arbitrary",),       # true recurrence: sequential grid
            vmem_limit_bytes=32 * 1024 * 1024,        # explicit (v5e default is 16 MiB)
        ),
    )(gates_x, w_hh_t)
    h_flat = h_flat[: L * B]                                          # (L*B, H) bf16

    # ---- hoisted output projection: one (L*B, H) x (H, V) matmul -----------
    w_out_t = params["w_lin"].T.astype(jnp.bfloat16)                  # (H, V)
    out = jnp.dot(h_flat, w_out_t, preferred_element_type=jnp.float32)
    out = out.reshape(L, B, V) + params["b_lin"].astype(jnp.float32)
    return jnp.transpose(out, (1, 0, 2))                              # (B, L, V)


def decoder_forward_ref(features, captions, params):
    """Pure-JAX reference reproducing the PyTorch forward with the kernel's
    precision policy (bf16 matmul operands + bf16 gates_x storage, f32 state
    and accumulation)."""
    emb = jnp.take(params["embed"], captions, axis=0)                 # (B, L, E)
    x = jnp.concatenate([features[:, None, :], emb], axis=1)          # (B, L+1, E)
    B, Lp1, E = x.shape
    H = params["w_hh"].shape[1]
    w_ih_t = params["w_ih"].T.astype(jnp.bfloat16)
    w_hh_t = params["w_hh"].T.astype(jnp.bfloat16)
    b = (params["b_ih"] + params["b_hh"]).astype(jnp.float32)

    x_tm = jnp.transpose(x, (1, 0, 2))                                # (L+1, B, E)
    gates_x = (jnp.dot(x_tm.reshape(-1, E).astype(jnp.bfloat16), w_ih_t,
                       preferred_element_type=jnp.float32)
               .reshape(Lp1, B, 4 * H) + b).astype(jnp.bfloat16)

    def step(carry, gx_t):
        h, c = carry
        gates = gx_t.astype(jnp.float32) + jnp.dot(
            h.astype(jnp.bfloat16), w_hh_t, preferred_element_type=jnp.float32)
        i = jax.nn.sigmoid(gates[:, 0 * H:1 * H])
        f = jax.nn.sigmoid(gates[:, 1 * H:2 * H])
        g = jnp.tanh(gates[:, 2 * H:3 * H])
        o = jax.nn.sigmoid(gates[:, 3 * H:4 * H])
        c = f * c + i * g
        h = o * jnp.tanh(c)
        return (h, c), h

    h0 = jnp.zeros((B, H), jnp.float32)
    c0 = jnp.zeros((B, H), jnp.float32)
    _, h_seq = lax.scan(step, (h0, c0), gates_x)                      # (L+1, B, H)
    h_seq = jnp.transpose(h_seq, (1, 0, 2))[:, :-1, :]                # (B, L, H)
    out = jnp.dot(h_seq.astype(jnp.bfloat16),
                  params["w_lin"].T.astype(jnp.bfloat16),
                  preferred_element_type=jnp.float32) + params["b_lin"]
    return out


if __name__ == "__main__":
    # Lane/sublane-aligned small shapes: B=8 sublanes, E=H=128 lanes, V=2*128.
    B, L = 8, 16             # batch, caption length
    E, H, V = 128, 128, 256  # embed_size, hidden_size, vocab_size

    key = jax.random.PRNGKey(0)
    k_par, k_feat, k_cap = jax.random.split(key, 3)

    params = init_params(k_par, E, H, V)
    features = jax.random.normal(k_feat, (B, E), jnp.float32)
    captions = jax.random.randint(k_cap, (B, L), 0, V, jnp.int32)

    out = jax.block_until_ready(decoder_forward_pallas(features, captions, params))
    ref = jax.block_until_ready(decoder_forward_ref(features, captions, params))

    assert out.shape == (B, L, V), out.shape
    # Tolerance reflects the shared bf16-operand / bf16-gates precision policy.
    err = float(jnp.max(jnp.abs(out - ref)))
    assert jnp.allclose(out, ref, atol=2e-2, rtol=2e-2), err

    print("KERNEL_OK")
</pallas_src>

<mosaic_0001>
module attributes {stable_mosaic.version = 11 : i64} {
  func.func @lstm_recurrence_kernel(%arg0: i32, %arg1: memref<128x512xbf16, #tpu.memory_space<vmem>>, %arg2: memref<128x512xbf16, #tpu.memory_space<any>>, %arg3: memref<128x128xbf16, #tpu.memory_space<vmem>>, %arg4: memref<128x512xbf16, #tpu.memory_space<vmem>>, %arg5: memref<!tpu.dma_semaphore, #tpu.memory_space<semaphore_mem>>, %arg6: memref<8x128xf32, #tpu.memory_space<vmem>>, %arg7: memref<8x128xf32, #tpu.memory_space<vmem>>) attributes {dimension_semantics = [#tpu.dimension_semantics<arbitrary>], iteration_bounds = array<i64: 1>, scalar_prefetch = 0 : i64, scratch_operands = 4 : i64, tpu.core_type = #tpu.core_type<tc>, window_params = [{transform_indices = @transform_0, window_bounds = array<i64: 128, 512>}, {}, {transform_indices = @transform_2, window_bounds = array<i64: 128, 128>}]} {
    %c0_i32 = arith.constant 0 : i32
    %0 = arith.cmpi eq, %arg0, %c0_i32 : i32
    %1 = arith.extui %0 : i1 to i32
    %c0_i32_0 = arith.constant 0 : i32
    %2 = arith.cmpi ne, %1, %c0_i32_0 : i32
    scf.if %2 {
      %cst_152 = arith.constant 0.000000e+00 : f32
      %535 = vector.broadcast %cst_152 : f32 to vector<8x128xf32>
      %c0_153 = arith.constant 0 : index
      %c0_154 = arith.constant 0 : index
      %536 = vector.load %arg6[%c0_153, %c0_154] : memref<8x128xf32, #tpu.memory_space<vmem>>, vector<8x128xf32>
      tpu.vector_store %arg6[%c0_153, %c0_154], %535 {strides = array<i32>} : memref<8x128xf32, #tpu.memory_space<vmem>>, vector<8x128xf32>,
      %cst_155 = arith.constant 0.000000e+00 : f32
      %537 = vector.broadcast %cst_155 : f32 to vector<8x128xf32>
      %c0_156 = arith.constant 0 : index
      %c0_157 = arith.constant 0 : index
      %538 = vector.load %arg7[%c0_156, %c0_157] : memref<8x128xf32, #tpu.memory_space<vmem>>, vector<8x128xf32>
      tpu.vector_store %arg7[%c0_156, %c0_157], %537 {strides = array<i32>} : memref<8x128xf32, #tpu.memory_space<vmem>>, vector<8x128xf32>,
      tpu.enqueue_dma source(%arg2 : memref<128x512xbf16, #tpu.memory_space<any>>) target(%arg4 : memref<128x512xbf16, #tpu.memory_space<vmem>>) target_semaphore(%arg5 : memref<!tpu.dma_semaphore, #tpu.memory_space<semaphore_mem>>)
      tpu.wait_dma2 semaphore(%arg5 : memref<!tpu.dma_semaphore, #tpu.memory_space<semaphore_mem>>) src(%arg2 : memref<128x512xbf16, #tpu.memory_space<any>>) dst(%arg4 : memref<128x512xbf16, #tpu.memory_space<vmem>>)
    } else {
    }
    %c0 = arith.constant 0 : index
    %c0_1 = arith.constant 0 : index
    %3 = vector.load %arg6[%c0, %c0_1] : memref<8x128xf32, #tpu.memory_space<vmem>>, vector<8x128xf32>
    %c0_2 = arith.constant 0 : index
    %c0_3 = arith.constant 0 : index
    %4 = vector.load %arg7[%c0_2, %c0_3] : memref<8x128xf32, #tpu.memory_space<vmem>>, vector<8x128xf32>
    %c0_4 = arith.constant 0 : index
    %c0_5 = arith.constant 0 : index
    %5 = vector.load %arg1[%c0_4, %c0_5] : memref<128x512xbf16, #tpu.memory_space<vmem>>, vector<8x512xbf16>
    %6 = arith.extf %5 : vector<8x512xbf16> to vector<8x512xf32>
    %7 = arith.truncf %3 : vector<8x128xf32> to vector<8x128xbf16>
    %c0_6 = arith.constant 0 : index
    %c0_7 = arith.constant 0 : index
    %8 = vector.load %arg4[%c0_6, %c0_7] : memref<128x512xbf16, #tpu.memory_space<vmem>>, vector<128x512xbf16>
    %cst = arith.constant dense<0.000000e+00> : vector<8x512xf32>
    %9 = tpu.matmul %7, %8, %cst {dimension_numbers = #tpu.dot_dimension_numbers<[1], [0], [0], [1], [0, 0, 1, 1], [], []>} : vector<8x128xbf16>, vector<128x512xbf16>, vector<8x512xf32> -> vector<8x512xf32>
    %10 = arith.addf %6, %9 : vector<8x512xf32>
    %11 = vector.extract_strided_slice %10 {offsets = [0, 0], sizes = [8, 128], strides = [1, 1]} : vector<8x512xf32> to vector<8x128xf32>
    %12 = arith.negf %11 : vector<8x128xf32>
    %13 = math.exp %12 : vector<8x128xf32>
    %cst_8 = arith.constant 1.000000e+00 : f32
    %14 = vector.broadcast %cst_8 : f32 to vector<8x128xf32>
    %15 = arith.addf %14, %13 : vector<8x128xf32>
    %16 = arith.divf %14, %15 : vector<8x128xf32>
    %17 = vector.extract_strided_slice %10 {offsets = [0, 128], sizes = [8, 128], strides = [1, 1]} : vector<8x512xf32> to vector<8x128xf32>
    %18 = arith.negf %17 : vector<8x128xf32>
    %19 = math.exp %18 : vector<8x128xf32>
    %cst_9 = arith.constant 1.000000e+00 : f32
    %20 = vector.broadcast %cst_9 : f32 to vector<8x128xf32>
    %21 = arith.addf %20, %19 : vector<8x128xf32>
    %22 = arith.divf %20, %21 : vector<8x128xf32>
    %23 = vector.extract_strided_slice %10 {offsets = [0, 256], sizes = [8, 128], strides = [1, 1]} : vector<8x512xf32> to vector<8x128xf32>
    %24 = math.tanh %23 : vector<8x128xf32>
    %25 = vector.extract_strided_slice %10 {offsets = [0, 384], sizes = [8, 128], strides = [1, 1]} : vector<8x512xf32> to vector<8x128xf32>
    %26 = arith.negf %25 : vector<8x128xf32>
    %27 = math.exp %26 : vector<8x128xf32>
    %cst_10 = arith.constant 1.000000e+00 : f32
    %28 = vector.broadcast %cst_10 : f32 to vector<8x128xf32>
    %29 = arith.addf %28, %27 : vector<8x128xf32>
    %30 = arith.divf %28, %29 : vector<8x128xf32>
    %31 = arith.mulf %22, %4 : vector<8x128xf32>
    %32 = arith.mulf %16, %24 : vector<8x128xf32>
    %33 = arith.addf %31, %32 : vector<8x128xf32>
    %34 = math.tanh %33 : vector<8x128xf32>
    %35 = arith.mulf %30, %34 : vector<8x128xf32>
    %36 = arith.truncf %35 : vector<8x128xf32> to vector<8x128xbf16>
    %c0_11 = arith.constant 0 : index
    %c0_12 = arith.constant 0 : index
    %37 = vector.load %arg3[%c0_11, %c0_12] : memref<128x128xbf16, #tpu.memory_space<vmem>>, vector<8x128xbf16>
    tpu.vector_store %arg3[%c0_11, %c0_12], %36 {strides = array<i32>} : memref<128x128xbf16, #tpu.memory_space<vmem>>, vector<8x128xbf16>,
    %c8 = arith.constant 8 : index
    %c0_13 = arith.constant 0 : index
    %38 = vector.load %arg1[%c8, %c0_13] : memref<128x512xbf16, #tpu.memory_space<vmem>>, vector<8x512xbf16>
    %39 = arith.extf %38 : vector<8x512xbf16> to vector<8x512xf32>
    %40 = arith.truncf %35 : vector<8x128xf32> to vector<8x128xbf16>
    %c0_14 = arith.constant 0 : index
    %c0_15 = arith.constant 0 : index
    %41 = vector.load %arg4[%c0_14, %c0_15] : memref<128x512xbf16, #tpu.memory_space<vmem>>, vector<128x512xbf16>
    %cst_16 = arith.constant dense<0.000000e+00> : vector<8x512xf32>
    %42 = tpu.matmul %40, %41, %cst_16 {dimension_numbers = #tpu.dot_dimension_numbers<[1], [0], [0], [1], [0, 0, 1, 1], [], []>} : vector<8x128xbf16>, vector<128x512xbf16>, vector<8x512xf32> -> vector<8x512xf32>
    %43 = arith.addf %39, %42 : vector<8x512xf32>
    %44 = vector.extract_strided_slice %43 {offsets = [0, 0], sizes = [8, 128], strides = [1, 1]} : vector<8x512xf32> to vector<8x128xf32>
    %45 = arith.negf %44 : vector<8x128xf32>
    %46 = math.exp %45 : vector<8x128xf32>
    %cst_17 = arith.constant 1.000000e+00 : f32
    %47 = vector.broadcast %cst_17 : f32 to vector<8x128xf32>
    %48 = arith.addf %47, %46 : vector<8x128xf32>
    %49 = arith.divf %47, %48 : vector<8x128xf32>
    %50 = vector.extract_strided_slice %43 {offsets = [0, 128], sizes = [8, 128], strides = [1, 1]} : vector<8x512xf32> to vector<8x128xf32>
    %51 = arith.negf %50 : vector<8x128xf32>
    %52 = math.exp %51 : vector<8x128xf32>
    %cst_18 = arith.constant 1.000000e+00 : f32
    %53 = vector.broadcast %cst_18 : f32 to vector<8x128xf32>
    %54 = arith.addf %53, %52 : vector<8x128xf32>
    %55 = arith.divf %53, %54 : vector<8x128xf32>
    %56 = vector.extract_strided_slice %43 {offsets = [0, 256], sizes = [8, 128], strides = [1, 1]} : vector<8x512xf32> to vector<8x128xf32>
    %57 = math.tanh %56 : vector<8x128xf32>
    %58 = vector.extract_strided_slice %43 {offsets = [0, 384], sizes = [8, 128], strides = [1, 1]} : vector<8x512xf32> to vector<8x128xf32>
    %59 = arith.negf %58 : vector<8x128xf32>
    %60 = math.exp %59 : vector<8x128xf32>
    %cst_19 = arith.constant 1.000000e+00 : f32
    %61 = vector.broadcast %cst_19 : f32 to vector<8x128xf32>
    %62 = arith.addf %61, %60 : vector<8x128xf32>
    %63 = arith.divf %61, %62 : vector<8x128xf32>
    %64 = arith.mulf %55, %33 : vector<8x128xf32>
    %65 = arith.mulf %49, %57 : vector<8x128xf32>
    %66 = arith.addf %64, %65 : vector<8x128xf32>
    %67 = math.tanh %66 : vector<8x128xf32>
    %68 = arith.mulf %63, %67 : vector<8x128xf32>
    %69 = arith.truncf %68 : vector<8x128xf32> to vector<8x128xbf16>
    %c8_20 = arith.constant 8 : index
    %c0_21 = arith.constant 0 : index
    %70 = vector.load %arg3[%c8_20, %c0_21] : memref<128x128xbf16, #tpu.memory_space<vmem>>, vector<8x128xbf16>
    tpu.vector_store %arg3[%c8_20, %c0_21], %69 {strides = array<i32>} : memref<128x128xbf16, #tpu.memory_space<vmem>>, vector<8x128xbf16>,
    %c16 = arith.constant 16 : index
    %c0_22 = arith.constant 0 : index
    %71 = vector.load %arg1[%c16, %c0_22] : memref<128x512xbf16, #tpu.memory_space<vmem>>, vector<8x512xbf16>
    %72 = arith.extf %71 : vector<8x512xbf16> to vector<8x512xf32>
    %73 = arith.truncf %68 : vector<8x128xf32> to vector<8x128xbf16>
    %c0_23 = arith.constant 0 : index
    %c0_24 = arith.constant 0 : index
    %74 = vector.load %arg4[%c0_23, %c0_24] : memref<128x512xbf16, #tpu.memory_space<vmem>>, vector<128x512xbf16>
    %cst_25 = arith.constant dense<0.000000e+00> : vector<8x512xf32>
    %75 = tpu.matmul %73, %74, %cst_25 {dimension_numbers = #tpu.dot_dimension_numbers<[1], [0], [0], [1], [0, 0, 1, 1], [], []>} : vector<8x128xbf16>, vector<128x512xbf16>, vector<8x512xf32> -> vector<8x512xf32>
    %76 = arith.addf %72, %75 : vector<8x512xf32>
    %77 = vector.extract_strided_slice %76 {offsets = [0, 0], sizes = [8, 128], strides = [1, 1]} : vector<8x512xf32> to vector<8x128xf32>
    %78 = arith.negf %77 : vector<8x128xf32>
    %79 = math.exp %78 : vector<8x128xf32>
    %cst_26 = arith.constant 1.000000e+00 : f32
    %80 = vector.broadcast %cst_26 : f32 to vector<8x128xf32>
    %81 = arith.addf %80, %79 : vector<8x128xf32>
    %82 = arith.divf %80, %81 : vector<8x128xf32>
    %83 = vector.extract_strided_slice %76 {offsets = [0, 128], sizes = [8, 128], strides = [1, 1]} : vector<8x512xf32> to vector<8x128xf32>
    %84 = arith.negf %83 : vector<8x128xf32>
    %85 = math.exp %84 : vector<8x128xf32>
    %cst_27 = arith.constant 1.000000e+00 : f32
    %86 = vector.broadcast %cst_27 : f32 to vector<8x128xf32>
    %87 = arith.addf %86, %85 : vector<8x128xf32>
    %88 = arith.divf %86, %87 : vector<8x128xf32>
    %89 = vector.extract_strided_slice %76 {offsets = [0, 256], sizes = [8, 128], strides = [1, 1]} : vector<8x512xf32> to vector<8x128xf32>
    %90 = math.tanh %89 : vector<8x128xf32>
    %91 = vector.extract_strided_slice %76 {offsets = [0, 384], sizes = [8, 128], strides = [1, 1]} : vector<8x512xf32> to vector<8x128xf32>
    %92 = arith.negf %91 : vector<8x128xf32>
    %93 = math.exp %92 : vector<8x128xf32>
    %cst_28 = arith.constant 1.000000e+00 : f32
    %94 = vector.broadcast %cst_28 : f32 to vector<8x128xf32>
    %95 = arith.addf %94, %93 : vector<8x128xf32>
    %96 = arith.divf %94, %95 : vector<8x128xf32>
    %97 = arith.mulf %88, %66 : vector<8x128xf32>
    %98 = arith.mulf %82, %90 : vector<8x128xf32>
    %99 = arith.addf %97, %98 : vector<8x128xf32>
    %100 = math.tanh %99 : vector<8x128xf32>
    %101 = arith.mulf %96, %100 : vector<8x128xf32>
    %102 = arith.truncf %101 : vector<8x128xf32> to vector<8x128xbf16>
    %c16_29 = arith.constant 16 : index
    %c0_30 = arith.constant 0 : index
    %103 = vector.load %arg3[%c16_29, %c0_30] : memref<128x128xbf16, #tpu.memory_space<vmem>>, vector<8x128xbf16>
    tpu.vector_store %arg3[%c16_29, %c0_30], %102 {strides = array<i32>} : memref<128x128xbf16, #tpu.memory_space<vmem>>, vector<8x128xbf16>,
    %c24 = arith.constant 24 : index
    %c0_31 = arith.constant 0 : index
    %104 = vector.load %arg1[%c24, %c0_31] : memref<128x512xbf16, #tpu.memory_space<vmem>>, vector<8x512xbf16>
    %105 = arith.extf %104 : vector<8x512xbf16> to vector<8x512xf32>
    %106 = arith.truncf %101 : vector<8x128xf32> to vector<8x128xbf16>
    %c0_32 = arith.constant 0 : index
    %c0_33 = arith.constant 0 : index
    %107 = vector.load %arg4[%c0_32, %c0_33] : memref<128x512xbf16, #tpu.memory_space<vmem>>, vector<128x512xbf16>
    %cst_34 = arith.constant dense<0.000000e+00> : vector<8x512xf32>
    %108 = tpu.matmul %106, %107, %cst_34 {dimension_numbers = #tpu.dot_dimension_numbers<[1], [0], [0], [1], [0, 0, 1, 1], [], []>} : vector<8x128xbf16>, vector<128x512xbf16>, vector<8x512xf32> -> vector<8x512xf32>
    %109 = arith.addf %105, %108 : vector<8x512xf32>
    %110 = vector.extract_strided_slice %109 {offsets = [0, 0], sizes = [8, 128], strides = [1, 1]} : vector<8x512xf32> to vector<8x128xf32>
    %111 = arith.negf %110 : vector<8x128xf32>
    %112 = math.exp %111 : vector<8x128xf32>
    %cst_35 = arith.constant 1.000000e+00 : f32
    %113 = vector.broadcast %cst_35 : f32 to vector<8x128xf32>
    %114 = arith.addf %113, %112 : vector<8x128xf32>
    %115 = arith.divf %113, %114 : vector<8x128xf32>
    %116 = vector.extract_strided_slice %109 {offsets = [0, 128], sizes = [8, 128], strides = [1, 1]} : vector<8x512xf32> to vector<8x128xf32>
    %117 = arith.negf %116 : vector<8x128xf32>
    %118 = math.exp %117 : vector<8x128xf32>
    %cst_36 = arith.constant 1.000000e+00 : f32
    %119 = vector.broadcast %cst_36 : f32 to vector<8x128xf32>
    %120 = arith.addf %119, %118 : vector<8x128xf32>
    %121 = arith.divf %119, %120 : vector<8x128xf32>
    %122 = vector.extract_strided_slice %109 {offsets = [0, 256], sizes = [8, 128], strides = [1, 1]} : vector<8x512xf32> to vector<8x128xf32>
    %123 = math.tanh %122 : vector<8x128xf32>
    %124 = vector.extract_strided_slice %109 {offsets = [0, 384], sizes = [8, 128], strides = [1, 1]} : vector<8x512xf32> to vector<8x128xf32>
    %125 = arith.negf %124 : vector<8x128xf32>
    %126 = math.exp %125 : vector<8x128xf32>
    %cst_37 = arith.constant 1.000000e+00 : f32
    %127 = vector.broadcast %cst_37 : f32 to vector<8x128xf32>
    %128 = arith.addf %127, %126 : vector<8x128xf32>
    %129 = arith.divf %127, %128 : vector<8x128xf32>
    %130 = arith.mulf %121, %99 : vector<8x128xf32>
    %131 = arith.mulf %115, %123 : vector<8x128xf32>
    %132 = arith.addf %130, %131 : vector<8x128xf32>
    %133 = math.tanh %132 : vector<8x128xf32>
    %134 = arith.mulf %129, %133 : vector<8x128xf32>
    %135 = arith.truncf %134 : vector<8x128xf32> to vector<8x128xbf16>
    %c24_38 = arith.constant 24 : index
    %c0_39 = arith.constant 0 : index
    %136 = vector.load %arg3[%c24_38, %c0_39] : memref<128x128xbf16, #tpu.memory_space<vmem>>, vector<8x128xbf16>
    tpu.vector_store %arg3[%c24_38, %c0_39], %135 {strides = array<i32>} : memref<128x128xbf16, #tpu.memory_space<vmem>>, vector<8x128xbf16>,
    %c32 = arith.constant 32 : index
    %c0_40 = arith.constant 0 : index
    %137 = vector.load %arg1[%c32, %c0_40] : memref<128x512xbf16, #tpu.memory_space<vmem>>, vector<8x512xbf16>
    %138 = arith.extf %137 : vector<8x512xbf16> to vector<8x512xf32>
    %139 = arith.truncf %134 : vector<8x128xf32> to vector<8x128xbf16>
    %c0_41 = arith.constant 0 : index
    %c0_42 = arith.constant 0 : index
    %140 = vector.load %arg4[%c0_41, %c0_42] : memref<128x512xbf16, #tpu.memory_space<vmem>>, vector<128x512xbf16>
    %cst_43 = arith.constant dense<0.000000e+00> : vector<8x512xf32>
    %141 = tpu.matmul %139, %140, %cst_43 {dimension_numbers = #tpu.dot_dimension_numbers<[1], [0], [0], [1], [0, 0, 1, 1], [], []>} : vector<8x128xbf16>, vector<128x512xbf16>, vector<8x512xf32> -> vector<8x512xf32>
    %142 = arith.addf %138, %141 : vector<8x512xf32>
    %143 = vector.extract_strided_slice %142 {offsets = [0, 0], sizes = [8, 128], strides = [1, 1]} : vector<8x512xf32> to vector<8x128xf32>
    %144 = arith.negf %143 : vector<8x128xf32>
    %145 = math.exp %144 : vector<8x128xf32>
    %cst_44 = arith.constant 1.000000e+00 : f32
    %146 = vector.broadcast %cst_44 : f32 to vector<8x128xf32>
    %147 = arith.addf %146, %145 : vector<8x128xf32>
    %148 = arith.divf %146, %147 : vector<8x128xf32>
    %149 = vector.extract_strided_slice %142 {offsets = [0, 128], sizes = [8, 128], strides = [1, 1]} : vector<8x512xf32> to vector<8x128xf32>
    %150 = arith.negf %149 : vector<8x128xf32>
    %151 = math.exp %150 : vector<8x128xf32>
    %cst_45 = arith.constant 1.000000e+00 : f32
    %152 = vector.broadcast %cst_45 : f32 to vector<8x128xf32>
    %153 = arith.addf %152, %151 : vector<8x128xf32>
    %154 = arith.divf %152, %153 : vector<8x128xf32>
    %155 = vector.extract_strided_slice %142 {offsets = [0, 256], sizes = [8, 128], strides = [1, 1]} : vector<8x512xf32> to vector<8x128xf32>
    %156 = math.tanh %155 : vector<8x128xf32>
    %157 = vector.extract_strided_slice %142 {offsets = [0, 384], sizes = [8, 128], strides = [1, 1]} : vector<8x512xf32> to vector<8x128xf32>
    %158 = arith.negf %157 : vector<8x128xf32>
    %159 = math.exp %158 : vector<8x128xf32>
    %cst_46 = arith.constant 1.000000e+00 : f32
    %160 = vector.broadcast %cst_46 : f32 to vector<8x128xf32>
    %161 = arith.addf %160, %159 : vector<8x128xf32>
    %162 = arith.divf %160, %161 : vector<8x128xf32>
    %163 = arith.mulf %154, %132 : vector<8x128xf32>
    %164 = arith.mulf %148, %156 : vector<8x128xf32>
    %165 = arith.addf %163, %164 : vector<8x128xf32>
    %166 = math.tanh %165 : vector<8x128xf32>
    %167 = arith.mulf %162, %166 : vector<8x128xf32>
    %168 = arith.truncf %167 : vector<8x128xf32> to vector<8x128xbf16>
    %c32_47 = arith.constant 32 : index
    %c0_48 = arith.constant 0 : index
    %169 = vector.load %arg3[%c32_47, %c0_48] : memref<128x128xbf16, #tpu.memory_space<vmem>>, vector<8x128xbf16>
    tpu.vector_store %arg3[%c32_47, %c0_48], %168 {strides = array<i32>} : memref<128x128xbf16, #tpu.memory_space<vmem>>, vector<8x128xbf16>,
    %c40 = arith.constant 40 : index
    %c0_49 = arith.constant 0 : index
    %170 = vector.load %arg1[%c40, %c0_49] : memref<128x512xbf16, #tpu.memory_space<vmem>>, vector<8x512xbf16>
    %171 = arith.extf %170 : vector<8x512xbf16> to vector<8x512xf32>
    %172 = arith.truncf %167 : vector<8x128xf32> to vector<8x128xbf16>
    %c0_50 = arith.constant 0 : index
    %c0_51 = arith.constant 0 : index
    %173 = vector.load %arg4[%c0_50, %c0_51] : memref<128x512xbf16, #tpu.memory_space<vmem>>, vector<128x512xbf16>
    %cst_52 = arith.constant dense<0.000000e+00> : vector<8x512xf32>
    %174 = tpu.matmul %172, %173, %cst_52 {dimension_numbers = #tpu.dot_dimension_numbers<[1], [0], [0], [1], [0, 0, 1, 1], [], []>} : vector<8x128xbf16>, vector<128x512xbf16>, vector<8x512xf32> -> vector<8x512xf32>
    %175 = arith.addf %171, %174 : vector<8x512xf32>
    %176 = vector.extract_strided_slice %175 {offsets = [0, 0], sizes = [8, 128], strides = [1, 1]} : vector<8x512xf32> to vector<8x128xf32>
    %177 = arith.negf %176 : vector<8x128xf32>
    %178 = math.exp %177 : vector<8x128xf32>
    %cst_53 = arith.constant 1.000000e+00 : f32
    %179 = vector.broadcast %cst_53 : f32 to vector<8x128xf32>
    %180 = arith.addf %179, %178 : vector<8x128xf32>
    %181 = arith.divf %179, %180 : vector<8x128xf32>
    %182 = vector.extract_strided_slice %175 {offsets = [0, 128], sizes = [8, 128], strides = [1, 1]} : vector<8x512xf32> to vector<8x128xf32>
    %183 = arith.negf %182 : vector<8x128xf32>
    %184 = math.exp %183 : vector<8x128xf32>
    %cst_54 = arith.constant 1.000000e+00 : f32
    %185 = vector.broadcast %cst_54 : f32 to vector<8x128xf32>
    %186 = arith.addf %185, %184 : vector<8x128xf32>
    %187 = arith.divf %185, %186 : vector<8x128xf32>
    %188 = vector.extract_strided_slice %175 {offsets = [0, 256], sizes = [8, 128], strides = [1, 1]} : vector<8x512xf32> to vector<8x128xf32>
    %189 = math.tanh %188 : vector<8x128xf32>
    %190 = vector.extract_strided_slice %175 {offsets = [0, 384], sizes = [8, 128], strides = [1, 1]} : vector<8x512xf32> to vector<8x128xf32>
    %191 = arith.negf %190 : vector<8x128xf32>
    %192 = math.exp %191 : vector<8x128xf32>
    %cst_55 = arith.constant 1.000000e+00 : f32
    %193 = vector.broadcast %cst_55 : f32 to vector<8x128xf32>
    %194 = arith.addf %193, %192 : vector<8x128xf32>
    %195 = arith.divf %193, %194 : vector<8x128xf32>
    %196 = arith.mulf %187, %165 : vector<8x128xf32>
    %197 = arith.mulf %181, %189 : vector<8x128xf32>
    %198 = arith.addf %196, %197 : vector<8x128xf32>
    %199 = math.tanh %198 : vector<8x128xf32>
    %200 = arith.mulf %195, %199 : vector<8x128xf32>
    %201 = arith.truncf %200 : vector<8x128xf32> to vector<8x128xbf16>
    %c40_56 = arith.constant 40 : index
    %c0_57 = arith.constant 0 : index
    %202 = vector.load %arg3[%c40_56, %c0_57] : memref<128x128xbf16, #tpu.memory_space<vmem>>, vector<8x128xbf16>
    tpu.vector_store %arg3[%c40_56, %c0_57], %201 {strides = array<i32>} : memref<128x128xbf16, #tpu.memory_space<vmem>>, vector<8x128xbf16>,
    %c48 = arith.constant 48 : index
    %c0_58 = arith.constant 0 : index
    %203 = vector.load %arg1[%c48, %c0_58] : memref<128x512xbf16, #tpu.memory_space<vmem>>, vector<8x512xbf16>
    %204 = arith.extf %203 : vector<8x512xbf16> to vector<8x512xf32>
    %205 = arith.truncf %200 : vector<8x128xf32> to vector<8x128xbf16>
    %c0_59 = arith.constant 0 : index
    %c0_60 = arith.constant 0 : index
    %206 = vector.load %arg4[%c0_59, %c0_60] : memref<128x512xbf16, #tpu.memory_space<vmem>>, vector<128x512xbf16>
    %cst_61 = arith.constant dense<0.000000e+00> : vector<8x512xf32>
    %207 = tpu.matmul %205, %206, %cst_61 {dimension_numbers = #tpu.dot_dimension_numbers<[1], [0], [0], [1], [0, 0, 1, 1], [], []>} : vector<8x128xbf16>, vector<128x512xbf16>, vector<8x512xf32> -> vector<8x512xf32>
    %208 = arith.addf %204, %207 : vector<8x512xf32>
    %209 = vector.extract_strided_slice %208 {offsets = [0, 0], sizes = [8, 128], strides = [1, 1]} : vector<8x512xf32> to vector<8x128xf32>
    %210 = arith.negf %209 : vector<8x128xf32>
    %211 = math.exp %210 : vector<8x128xf32>
    %cst_62 = arith.constant 1.000000e+00 : f32
    %212 = vector.broadcast %cst_62 : f32 to vector<8x128xf32>
    %213 = arith.addf %212, %211 : vector<8x128xf32>
    %214 = arith.divf %212, %213 : vector<8x128xf32>
    %215 = vector.extract_strided_slice %208 {offsets = [0, 128], sizes = [8, 128], strides = [1, 1]} : vector<8x512xf32> to vector<8x128xf32>
    %216 = arith.negf %215 : vector<8x128xf32>
    %217 = math.exp %216 : vector<8x128xf32>
    %cst_63 = arith.constant 1.000000e+00 : f32
    %218 = vector.broadcast %cst_63 : f32 to vector<8x128xf32>
    %219 = arith.addf %218, %217 : vector<8x128xf32>
    %220 = arith.divf %218, %219 : vector<8x128xf32>
    %221 = vector.extract_strided_slice %208 {offsets = [0, 256], sizes = [8, 128], strides = [1, 1]} : vector<8x512xf32> to vector<8x128xf32>
    %222 = math.tanh %221 : vector<8x128xf32>
    %223 = vector.extract_strided_slice %208 {offsets = [0, 384], sizes = [8, 128], strides = [1, 1]} : vector<8x512xf32> to vector<8x128xf32>
    %224 = arith.negf %223 : vector<8x128xf32>
    %225 = math.exp %224 : vector<8x128xf32>
    %cst_64 = arith.constant 1.000000e+00 : f32
    %226 = vector.broadcast %cst_64 : f32 to vector<8x128xf32>
    %227 = arith.addf %226, %225 : vector<8x128xf32>
    %228 = arith.divf %226, %227 : vector<8x128xf32>
    %229 = arith.mulf %220, %198 : vector<8x128xf32>
    %230 = arith.mulf %214, %222 : vector<8x128xf32>
    %231 = arith.addf %229, %230 : vector<8x128xf32>
    %232 = math.tanh %231 : vector<8x128xf32>
    %233 = arith.mulf %228, %232 : vector<8x128xf32>
    %234 = arith.truncf %233 : vector<8x128xf32> to vector<8x128xbf16>
    %c48_65 = arith.constant 48 : index
    %c0_66 = arith.constant 0 : index
    %235 = vector.load %arg3[%c48_65, %c0_66] : memref<128x128xbf16, #tpu.memory_space<vmem>>, vector<8x128xbf16>
    tpu.vector_store %arg3[%c48_65, %c0_66], %234 {strides = array<i32>} : memref<128x128xbf16, #tpu.memory_space<vmem>>, vector<8x128xbf16>,
    %c56 = arith.constant 56 : index
    %c0_67 = arith.constant 0 : index
    %236 = vector.load %arg1[%c56, %c0_67] : memref<128x512xbf16, #tpu.memory_space<vmem>>, vector<8x512xbf16>
    %237 = arith.extf %236 : vector<8x512xbf16> to vector<8x512xf32>
    %238 = arith.truncf %233 : vector<8x128xf32> to vector<8x128xbf16>
    %c0_68 = arith.constant 0 : index
    %c0_69 = arith.constant 0 : index
    %239 = vector.load %arg4[%c0_68, %c0_69] : memref<128x512xbf16, #tpu.memory_space<vmem>>, vector<128x512xbf16>
    %cst_70 = arith.constant dense<0.000000e+00> : vector<8x512xf32>
    %240 = tpu.matmul %238, %239, %cst_70 {dimension_numbers = #tpu.dot_dimension_numbers<[1], [0], [0], [1], [0, 0, 1, 1], [], []>} : vector<8x128xbf16>, vector<128x512xbf16>, vector<8x512xf32> -> vector<8x512xf32>
    %241 = arith.addf %237, %240 : vector<8x512xf32>
    %242 = vector.extract_strided_slice %241 {offsets = [0, 0], sizes = [8, 128], strides = [1, 1]} : vector<8x512xf32> to vector<8x128xf32>
    %243 = arith.negf %242 : vector<8x128xf32>
    %244 = math.exp %243 : vector<8x128xf32>
    %cst_71 = arith.constant 1.000000e+00 : f32
    %245 = vector.broadcast %cst_71 : f32 to vector<8x128xf32>
    %246 = arith.addf %245, %244 : vector<8x128xf32>
    %247 = arith.divf %245, %246 : vector<8x128xf32>
    %248 = vector.extract_strided_slice %241 {offsets = [0, 128], sizes = [8, 128], strides = [1, 1]} : vector<8x512xf32> to vector<8x128xf32>
    %249 = arith.negf %248 : vector<8x128xf32>
    %250 = math.exp %249 : vector<8x128xf32>
    %cst_72 = arith.constant 1.000000e+00 : f32
    %251 = vector.broadcast %cst_72 : f32 to vector<8x128xf32>
    %252 = arith.addf %251, %250 : vector<8x128xf32>
    %253 = arith.divf %251, %252 : vector<8x128xf32>
    %254 = vector.extract_strided_slice %241 {offsets = [0, 256], sizes = [8, 128], strides = [1, 1]} : vector<8x512xf32> to vector<8x128xf32>
    %255 = math.tanh %254 : vector<8x128xf32>
    %256 = vector.extract_strided_slice %241 {offsets = [0, 384], sizes = [8, 128], strides = [1, 1]} : vector<8x512xf32> to vector<8x128xf32>
    %257 = arith.negf %256 : vector<8x128xf32>
    %258 = math.exp %257 : vector<8x128xf32>
    %cst_73 = arith.constant 1.000000e+00 : f32
    %259 = vector.broadcast %cst_73 : f32 to vector<8x128xf32>
    %260 = arith.addf %259, %258 : vector<8x128xf32>
    %261 = arith.divf %259, %260 : vector<8x128xf32>
    %262 = arith.mulf %253, %231 : vector<8x128xf32>
    %263 = arith.mulf %247, %255 : vector<8x128xf32>
    %264 = arith.addf %262, %263 : vector<8x128xf32>
    %265 = math.tanh %264 : vector<8x128xf32>
    %266 = arith.mulf %261, %265 : vector<8x128xf32>
    %267 = arith.truncf %266 : vector<8x128xf32> to vector<8x128xbf16>
    %c56_74 = arith.constant 56 : index
    %c0_75 = arith.constant 0 : index
    %268 = vector.load %arg3[%c56_74, %c0_75] : memref<128x128xbf16, #tpu.memory_space<vmem>>, vector<8x128xbf16>
    tpu.vector_store %arg3[%c56_74, %c0_75], %267 {strides = array<i32>} : memref<128x128xbf16, #tpu.memory_space<vmem>>, vector<8x128xbf16>,
    %c64 = arith.constant 64 : index
    %c0_76 = arith.constant 0 : index
    %269 = vector.load %arg1[%c64, %c0_76] : memref<128x512xbf16, #tpu.memory_space<vmem>>, vector<8x512xbf16>
    %270 = arith.extf %269 : vector<8x512xbf16> to vector<8x512xf32>
    %271 = arith.truncf %266 : vector<8x128xf32> to vector<8x128xbf16>
    %c0_77 = arith.constant 0 : index
    %c0_78 = arith.constant 0 : index
    %272 = vector.load %arg4[%c0_77, %c0_78] : memref<128x512xbf16, #tpu.memory_space<vmem>>, vector<128x512xbf16>
    %cst_79 = arith.constant dense<0.000000e+00> : vector<8x512xf32>
    %273 = tpu.matmul %271, %272, %cst_79 {dimension_numbers = #tpu.dot_dimension_numbers<[1], [0], [0], [1], [0, 0, 1, 1], [], []>} : vector<8x128xbf16>, vector<128x512xbf16>, vector<8x512xf32> -> vector<8x512xf32>
    %274 = arith.addf %270, %273 : vector<8x512xf32>
    %275 = vector.extract_strided_slice %274 {offsets = [0, 0], sizes = [8, 128], strides = [1, 1]} : vector<8x512xf32> to vector<8x128xf32>
    %276 = arith.negf %275 : vector<8x128xf32>
    %277 = math.exp %276 : vector<8x128xf32>
    %cst_80 = arith.constant 1.000000e+00 : f32
    %278 = vector.broadcast %cst_80 : f32 to vector<8x128xf32>
    %279 = arith.addf %278, %277 : vector<8x128xf32>
    %280 = arith.divf %278, %279 : vector<8x128xf32>
    %281 = vector.extract_strided_slice %274 {offsets = [0, 128], sizes = [8, 128], strides = [1, 1]} : vector<8x512xf32> to vector<8x128xf32>
    %282 = arith.negf %281 : vector<8x128xf32>
    %283 = math.exp %282 : vector<8x128xf32>
    %cst_81 = arith.constant 1.000000e+00 : f32
    %284 = vector.broadcast %cst_81 : f32 to vector<8x128xf32>
    %285 = arith.addf %284, %283 : vector<8x128xf32>
    %286 = arith.divf %284, %285 : vector<8x128xf32>
    %287 = vector.extract_strided_slice %274 {offsets = [0, 256], sizes = [8, 128], strides = [1, 1]} : vector<8x512xf32> to vector<8x128xf32>
    %288 = math.tanh %287 : vector<8x128xf32>
    %289 = vector.extract_strided_slice %274 {offsets = [0, 384], sizes = [8, 128], strides = [1, 1]} : vector<8x512xf32> to vector<8x128xf32>
    %290 = arith.negf %289 : vector<8x128xf32>
    %291 = math.exp %290 : vector<8x128xf32>
    %cst_82 = arith.constant 1.000000e+00 : f32
    %292 = vector.broadcast %cst_82 : f32 to vector<8x128xf32>
    %293 = arith.addf %292, %291 : vector<8x128xf32>
    %294 = arith.divf %292, %293 : vector<8x128xf32>
    %295 = arith.mulf %286, %264 : vector<8x128xf32>
    %296 = arith.mulf %280, %288 : vector<8x128xf32>
    %297 = arith.addf %295, %296 : vector<8x128xf32>
    %298 = math.tanh %297 : vector<8x128xf32>
    %299 = arith.mulf %294, %298 : vector<8x128xf32>
    %300 = arith.truncf %299 : vector<8x128xf32> to vector<8x128xbf16>
    %c64_83 = arith.constant 64 : index
    %c0_84 = arith.constant 0 : index
    %301 = vector.load %arg3[%c64_83, %c0_84] : memref<128x128xbf16, #tpu.memory_space<vmem>>, vector<8x128xbf16>
    tpu.vector_store %arg3[%c64_83, %c0_84], %300 {strides = array<i32>} : memref<128x128xbf16, #tpu.memory_space<vmem>>, vector<8x128xbf16>,
    %c72 = arith.constant 72 : index
    %c0_85 = arith.constant 0 : index
    %302 = vector.load %arg1[%c72, %c0_85] : memref<128x512xbf16, #tpu.memory_space<vmem>>, vector<8x512xbf16>
    %303 = arith.extf %302 : vector<8x512xbf16> to vector<8x512xf32>
    %304 = arith.truncf %299 : vector<8x128xf32> to vector<8x128xbf16>
    %c0_86 = arith.constant 0 : index
    %c0_87 = arith.constant 0 : index
    %305 = vector.load %arg4[%c0_86, %c0_87] : memref<128x512xbf16, #tpu.memory_space<vmem>>, vector<128x512xbf16>
    %cst_88 = arith.constant dense<0.000000e+00> : vector<8x512xf32>
    %306 = tpu.matmul %304, %305, %cst_88 {dimension_numbers = #tpu.dot_dimension_numbers<[1], [0], [0], [1], [0, 0, 1, 1], [], []>} : vector<8x128xbf16>, vector<128x512xbf16>, vector<8x512xf32> -> vector<8x512xf32>
    %307 = arith.addf %303, %306 : vector<8x512xf32>
    %308 = vector.extract_strided_slice %307 {offsets = [0, 0], sizes = [8, 128], strides = [1, 1]} : vector<8x512xf32> to vector<8x128xf32>
    %309 = arith.negf %308 : vector<8x128xf32>
    %310 = math.exp %309 : vector<8x128xf32>
    %cst_89 = arith.constant 1.000000e+00 : f32
    %311 = vector.broadcast %cst_89 : f32 to vector<8x128xf32>
    %312 = arith.addf %311, %310 : vector<8x128xf32>
    %313 = arith.divf %311, %312 : vector<8x128xf32>
    %314 = vector.extract_strided_slice %307 {offsets = [0, 128], sizes = [8, 128], strides = [1, 1]} : vector<8x512xf32> to vector<8x128xf32>
    %315 = arith.negf %314 : vector<8x128xf32>
    %316 = math.exp %315 : vector<8x128xf32>
    %cst_90 = arith.constant 1.000000e+00 : f32
    %317 = vector.broadcast %cst_90 : f32 to vector<8x128xf32>
    %318 = arith.addf %317, %316 : vector<8x128xf32>
    %319 = arith.divf %317, %318 : vector<8x128xf32>
    %320 = vector.extract_strided_slice %307 {offsets = [0, 256], sizes = [8, 128], strides = [1, 1]} : vector<8x512xf32> to vector<8x128xf32>
    %321 = math.tanh %320 : vector<8x128xf32>
    %322 = vector.extract_strided_slice %307 {offsets = [0, 384], sizes = [8, 128], strides = [1, 1]} : vector<8x512xf32> to vector<8x128xf32>
    %323 = arith.negf %322 : vector<8x128xf32>
    %324 = math.exp %323 : vector<8x128xf32>
    %cst_91 = arith.constant 1.000000e+00 : f32
    %325 = vector.broadcast %cst_91 : f32 to vector<8x128xf32>
    %326 = arith.addf %325, %324 : vector<8x128xf32>
    %327 = arith.divf %325, %326 : vector<8x128xf32>
    %328 = arith.mulf %319, %297 : vector<8x128xf32>
    %329 = arith.mulf %313, %321 : vector<8x128xf32>
    %330 = arith.addf %328, %329 : vector<8x128xf32>
    %331 = math.tanh %330 : vector<8x128xf32>
    %332 = arith.mulf %327, %331 : vector<8x128xf32>
    %333 = arith.truncf %332 : vector<8x128xf32> to vector<8x128xbf16>
    %c72_92 = arith.constant 72 : index
    %c0_93 = arith.constant 0 : index
    %334 = vector.load %arg3[%c72_92, %c0_93] : memref<128x128xbf16, #tpu.memory_space<vmem>>, vector<8x128xbf16>
    tpu.vector_store %arg3[%c72_92, %c0_93], %333 {strides = array<i32>} : memref<128x128xbf16, #tpu.memory_space<vmem>>, vector<8x128xbf16>,
    %c80 = arith.constant 80 : index
    %c0_94 = arith.constant 0 : index
    %335 = vector.load %arg1[%c80, %c0_94] : memref<128x512xbf16, #tpu.memory_space<vmem>>, vector<8x512xbf16>
    %336 = arith.extf %335 : vector<8x512xbf16> to vector<8x512xf32>
    %337 = arith.truncf %332 : vector<8x128xf32> to vector<8x128xbf16>
    %c0_95 = arith.constant 0 : index
    %c0_96 = arith.constant 0 : index
    %338 = vector.load %arg4[%c0_95, %c0_96] : memref<128x512xbf16, #tpu.memory_space<vmem>>, vector<128x512xbf16>
    %cst_97 = arith.constant dense<0.000000e+00> : vector<8x512xf32>
    %339 = tpu.matmul %337, %338, %cst_97 {dimension_numbers = #tpu.dot_dimension_numbers<[1], [0], [0], [1], [0, 0, 1, 1], [], []>} : vector<8x128xbf16>, vector<128x512xbf16>, vector<8x512xf32> -> vector<8x512xf32>
    %340 = arith.addf %336, %339 : vector<8x512xf32>
    %341 = vector.extract_strided_slice %340 {offsets = [0, 0], sizes = [8, 128], strides = [1, 1]} : vector<8x512xf32> to vector<8x128xf32>
    %342 = arith.negf %341 : vector<8x128xf32>
    %343 = math.exp %342 : vector<8x128xf32>
    %cst_98 = arith.constant 1.000000e+00 : f32
    %344 = vector.broadcast %cst_98 : f32 to vector<8x128xf32>
    %345 = arith.addf %344, %343 : vector<8x128xf32>
    %346 = arith.divf %344, %345 : vector<8x128xf32>
    %347 = vector.extract_strided_slice %340 {offsets = [0, 128], sizes = [8, 128], strides = [1, 1]} : vector<8x512xf32> to vector<8x128xf32>
    %348 = arith.negf %347 : vector<8x128xf32>
    %349 = math.exp %348 : vector<8x128xf32>
    %cst_99 = arith.constant 1.000000e+00 : f32
    %350 = vector.broadcast %cst_99 : f32 to vector<8x128xf32>
    %351 = arith.addf %350, %349 : vector<8x128xf32>
    %352 = arith.divf %350, %351 : vector<8x128xf32>
    %353 = vector.extract_strided_slice %340 {offsets = [0, 256], sizes = [8, 128], strides = [1, 1]} : vector<8x512xf32> to vector<8x128xf32>
    %354 = math.tanh %353 : vector<8x128xf32>
    %355 = vector.extract_strided_slice %340 {offsets = [0, 384], sizes = [8, 128], strides = [1, 1]} : vector<8x512xf32> to vector<8x128xf32>
    %356 = arith.negf %355 : vector<8x128xf32>
    %357 = math.exp %356 : vector<8x128xf32>
    %cst_100 = arith.constant 1.000000e+00 : f32
    %358 = vector.broadcast %cst_100 : f32 to vector<8x128xf32>
    %359 = arith.addf %358, %357 : vector<8x128xf32>
    %360 = arith.divf %358, %359 : vector<8x128xf32>
    %361 = arith.mulf %352, %330 : vector<8x128xf32>
    %362 = arith.mulf %346, %354 : vector<8x128xf32>
    %363 = arith.addf %361, %362 : vector<8x128xf32>
    %364 = math.tanh %363 : vector<8x128xf32>
    %365 = arith.mulf %360, %364 : vector<8x128xf32>
    %366 = arith.truncf %365 : vector<8x128xf32> to vector<8x128xbf16>
    %c80_101 = arith.constant 80 : index
    %c0_102 = arith.constant 0 : index
    %367 = vector.load %arg3[%c80_101, %c0_102] : memref<128x128xbf16, #tpu.memory_space<vmem>>, vector<8x128xbf16>
    tpu.vector_store %arg3[%c80_101, %c0_102], %366 {strides = array<i32>} : memref<128x128xbf16, #tpu.memory_space<vmem>>, vector<8x128xbf16>,
    %c88 = arith.constant 88 : index
    %c0_103 = arith.constant 0 : index
    %368 = vector.load %arg1[%c88, %c0_103] : memref<128x512xbf16, #tpu.memory_space<vmem>>, vector<8x512xbf16>
    %369 = arith.extf %368 : vector<8x512xbf16> to vector<8x512xf32>
    %370 = arith.truncf %365 : vector<8x128xf32> to vector<8x128xbf16>
    %c0_104 = arith.constant 0 : index
    %c0_105 = arith.constant 0 : index
    %371 = vector.load %arg4[%c0_104, %c0_105] : memref<128x512xbf16, #tpu.memory_space<vmem>>, vector<128x512xbf16>
    %cst_106 = arith.constant dense<0.000000e+00> : vector<8x512xf32>
    %372 = tpu.matmul %370, %371, %cst_106 {dimension_numbers = #tpu.dot_dimension_numbers<[1], [0], [0], [1], [0, 0, 1, 1], [], []>} : vector<8x128xbf16>, vector<128x512xbf16>, vector<8x512xf32> -> vector<8x512xf32>
    %373 = arith.addf %369, %372 : vector<8x512xf32>
    %374 = vector.extract_strided_slice %373 {offsets = [0, 0], sizes = [8, 128], strides = [1, 1]} : vector<8x512xf32> to vector<8x128xf32>
    %375 = arith.negf %374 : vector<8x128xf32>
    %376 = math.exp %375 : vector<8x128xf32>
    %cst_107 = arith.constant 1.000000e+00 : f32
    %377 = vector.broadcast %cst_107 : f32 to vector<8x128xf32>
    %378 = arith.addf %377, %376 : vector<8x128xf32>
    %379 = arith.divf %377, %378 : vector<8x128xf32>
    %380 = vector.extract_strided_slice %373 {offsets = [0, 128], sizes = [8, 128], strides = [1, 1]} : vector<8x512xf32> to vector<8x128xf32>
    %381 = arith.negf %380 : vector<8x128xf32>
    %382 = math.exp %381 : vector<8x128xf32>
    %cst_108 = arith.constant 1.000000e+00 : f32
    %383 = vector.broadcast %cst_108 : f32 to vector<8x128xf32>
    %384 = arith.addf %383, %382 : vector<8x128xf32>
    %385 = arith.divf %383, %384 : vector<8x128xf32>
    %386 = vector.extract_strided_slice %373 {offsets = [0, 256], sizes = [8, 128], strides = [1, 1]} : vector<8x512xf32> to vector<8x128xf32>
    %387 = math.tanh %386 : vector<8x128xf32>
    %388 = vector.extract_strided_slice %373 {offsets = [0, 384], sizes = [8, 128], strides = [1, 1]} : vector<8x512xf32> to vector<8x128xf32>
    %389 = arith.negf %388 : vector<8x128xf32>
    %390 = math.exp %389 : vector<8x128xf32>
    %cst_109 = arith.constant 1.000000e+00 : f32
    %391 = vector.broadcast %cst_109 : f32 to vector<8x128xf32>
    %392 = arith.addf %391, %390 : vector<8x128xf32>
    %393 = arith.divf %391, %392 : vector<8x128xf32>
    %394 = arith.mulf %385, %363 : vector<8x128xf32>
    %395 = arith.mulf %379, %387 : vector<8x128xf32>
    %396 = arith.addf %394, %395 : vector<8x128xf32>
    %397 = math.tanh %396 : vector<8x128xf32>
    %398 = arith.mulf %393, %397 : vector<8x128xf32>
    %399 = arith.truncf %398 : vector<8x128xf32> to vector<8x128xbf16>
    %c88_110 = arith.constant 88 : index
    %c0_111 = arith.constant 0 : index
    %400 = vector.load %arg3[%c88_110, %c0_111] : memref<128x128xbf16, #tpu.memory_space<vmem>>, vector<8x128xbf16>
    tpu.vector_store %arg3[%c88_110, %c0_111], %399 {strides = array<i32>} : memref<128x128xbf16, #tpu.memory_space<vmem>>, vector<8x128xbf16>,
    %c96 = arith.constant 96 : index
    %c0_112 = arith.constant 0 : index
    %401 = vector.load %arg1[%c96, %c0_112] : memref<128x512xbf16, #tpu.memory_space<vmem>>, vector<8x512xbf16>
    %402 = arith.extf %401 : vector<8x512xbf16> to vector<8x512xf32>
    %403 = arith.truncf %398 : vector<8x128xf32> to vector<8x128xbf16>
    %c0_113 = arith.constant 0 : index
    %c0_114 = arith.constant 0 : index
    %404 = vector.load %arg4[%c0_113, %c0_114] : memref<128x512xbf16, #tpu.memory_space<vmem>>, vector<128x512xbf16>
    %cst_115 = arith.constant dense<0.000000e+00> : vector<8x512xf32>
    %405 = tpu.matmul %403, %404, %cst_115 {dimension_numbers = #tpu.dot_dimension_numbers<[1], [0], [0], [1], [0, 0, 1, 1], [], []>} : vector<8x128xbf16>, vector<128x512xbf16>, vector<8x512xf32> -> vector<8x512xf32>
    %406 = arith.addf %402, %405 : vector<8x512xf32>
    %407 = vector.extract_strided_slice %406 {offsets = [0, 0], sizes = [8, 128], strides = [1, 1]} : vector<8x512xf32> to vector<8x128xf32>
    %408 = arith.negf %407 : vector<8x128xf32>
    %409 = math.exp %408 : vector<8x128xf32>
    %cst_116 = arith.constant 1.000000e+00 : f32
    %410 = vector.broadcast %cst_116 : f32 to vector<8x128xf32>
    %411 = arith.addf %410, %409 : vector<8x128xf32>
    %412 = arith.divf %410, %411 : vector<8x128xf32>
    %413 = vector.extract_strided_slice %406 {offsets = [0, 128], sizes = [8, 128], strides = [1, 1]} : vector<8x512xf32> to vector<8x128xf32>
    %414 = arith.negf %413 : vector<8x128xf32>
    %415 = math.exp %414 : vector<8x128xf32>
    %cst_117 = arith.constant 1.000000e+00 : f32
    %416 = vector.broadcast %cst_117 : f32 to vector<8x128xf32>
    %417 = arith.addf %416, %415 : vector<8x128xf32>
    %418 = arith.divf %416, %417 : vector<8x128xf32>
    %419 = vector.extract_strided_slice %406 {offsets = [0, 256], sizes = [8, 128], strides = [1, 1]} : vector<8x512xf32> to vector<8x128xf32>
    %420 = math.tanh %419 : vector<8x128xf32>
    %421 = vector.extract_strided_slice %406 {offsets = [0, 384], sizes = [8, 128], strides = [1, 1]} : vector<8x512xf32> to vector<8x128xf32>
    %422 = arith.negf %421 : vector<8x128xf32>
    %423 = math.exp %422 : vector<8x128xf32>
    %cst_118 = arith.constant 1.000000e+00 : f32
    %424 = vector.broadcast %cst_118 : f32 to vector<8x128xf32>
    %425 = arith.addf %424, %423 : vector<8x128xf32>
    %426 = arith.divf %424, %425 : vector<8x128xf32>
    %427 = arith.mulf %418, %396 : vector<8x128xf32>
    %428 = arith.mulf %412, %420 : vector<8x128xf32>
    %429 = arith.addf %427, %428 : vector<8x128xf32>
    %430 = math.tanh %429 : vector<8x128xf32>
    %431 = arith.mulf %426, %430 : vector<8x128xf32>
    %432 = arith.truncf %431 : vector<8x128xf32> to vector<8x128xbf16>
    %c96_119 = arith.constant 96 : index
    %c0_120 = arith.constant 0 : index
    %433 = vector.load %arg3[%c96_119, %c0_120] : memref<128x128xbf16, #tpu.memory_space<vmem>>, vector<8x128xbf16>
    tpu.vector_store %arg3[%c96_119, %c0_120], %432 {strides = array<i32>} : memref<128x128xbf16, #tpu.memory_space<vmem>>, vector<8x128xbf16>,
    %c104 = arith.constant 104 : index
    %c0_121 = arith.constant 0 : index
    %434 = vector.load %arg1[%c104, %c0_121] : memref<128x512xbf16, #tpu.memory_space<vmem>>, vector<8x512xbf16>
    %435 = arith.extf %434 : vector<8x512xbf16> to vector<8x512xf32>
    %436 = arith.truncf %431 : vector<8x128xf32> to vector<8x128xbf16>
    %c0_122 = arith.constant 0 : index
    %c0_123 = arith.constant 0 : index
    %437 = vector.load %arg4[%c0_122, %c0_123] : memref<128x512xbf16, #tpu.memory_space<vmem>>, vector<128x512xbf16>
    %cst_124 = arith.constant dense<0.000000e+00> : vector<8x512xf32>
    %438 = tpu.matmul %436, %437, %cst_124 {dimension_numbers = #tpu.dot_dimension_numbers<[1], [0], [0], [1], [0, 0, 1, 1], [], []>} : vector<8x128xbf16>, vector<128x512xbf16>, vector<8x512xf32> -> vector<8x512xf32>
    %439 = arith.addf %435, %438 : vector<8x512xf32>
    %440 = vector.extract_strided_slice %439 {offsets = [0, 0], sizes = [8, 128], strides = [1, 1]} : vector<8x512xf32> to vector<8x128xf32>
    %441 = arith.negf %440 : vector<8x128xf32>
    %442 = math.exp %441 : vector<8x128xf32>
    %cst_125 = arith.constant 1.000000e+00 : f32
    %443 = vector.broadcast %cst_125 : f32 to vector<8x128xf32>
    %444 = arith.addf %443, %442 : vector<8x128xf32>
    %445 = arith.divf %443, %444 : vector<8x128xf32>
    %446 = vector.extract_strided_slice %439 {offsets = [0, 128], sizes = [8, 128], strides = [1, 1]} : vector<8x512xf32> to vector<8x128xf32>
    %447 = arith.negf %446 : vector<8x128xf32>
    %448 = math.exp %447 : vector<8x128xf32>
    %cst_126 = arith.constant 1.000000e+00 : f32
    %449 = vector.broadcast %cst_126 : f32 to vector<8x128xf32>
    %450 = arith.addf %449, %448 : vector<8x128xf32>
    %451 = arith.divf %449, %450 : vector<8x128xf32>
    %452 = vector.extract_strided_slice %439 {offsets = [0, 256], sizes = [8, 128], strides = [1, 1]} : vector<8x512xf32> to vector<8x128xf32>
    %453 = math.tanh %452 : vector<8x128xf32>
    %454 = vector.extract_strided_slice %439 {offsets = [0, 384], sizes = [8, 128], strides = [1, 1]} : vector<8x512xf32> to vector<8x128xf32>
    %455 = arith.negf %454 : vector<8x128xf32>
    %456 = math.exp %455 : vector<8x128xf32>
    %cst_127 = arith.constant 1.000000e+00 : f32
    %457 = vector.broadcast %cst_127 : f32 to vector<8x128xf32>
    %458 = arith.addf %457, %456 : vector<8x128xf32>
    %459 = arith.divf %457, %458 : vector<8x128xf32>
    %460 = arith.mulf %451, %429 : vector<8x128xf32>
    %461 = arith.mulf %445, %453 : vector<8x128xf32>
    %462 = arith.addf %460, %461 : vector<8x128xf32>
    %463 = math.tanh %462 : vector<8x128xf32>
    %464 = arith.mulf %459, %463 : vector<8x128xf32>
    %465 = arith.truncf %464 : vector<8x128xf32> to vector<8x128xbf16>
    %c104_128 = arith.constant 104 : index
    %c0_129 = arith.constant 0 : index
    %466 = vector.load %arg3[%c104_128, %c0_129] : memref<128x128xbf16, #tpu.memory_space<vmem>>, vector<8x128xbf16>
    tpu.vector_store %arg3[%c104_128, %c0_129], %465 {strides = array<i32>} : memref<128x128xbf16, #tpu.memory_space<vmem>>, vector<8x128xbf16>,
    %c112 = arith.constant 112 : index
    %c0_130 = arith.constant 0 : index
    %467 = vector.load %arg1[%c112, %c0_130] : memref<128x512xbf16, #tpu.memory_space<vmem>>, vector<8x512xbf16>
    %468 = arith.extf %467 : vector<8x512xbf16> to vector<8x512xf32>
    %469 = arith.truncf %464 : vector<8x128xf32> to vector<8x128xbf16>
    %c0_131 = arith.constant 0 : index
    %c0_132 = arith.constant 0 : index
    %470 = vector.load %arg4[%c0_131, %c0_132] : memref<128x512xbf16, #tpu.memory_space<vmem>>, vector<128x512xbf16>
    %cst_133 = arith.constant dense<0.000000e+00> : vector<8x512xf32>
    %471 = tpu.matmul %469, %470, %cst_133 {dimension_numbers = #tpu.dot_dimension_numbers<[1], [0], [0], [1], [0, 0, 1, 1], [], []>} : vector<8x128xbf16>, vector<128x512xbf16>, vector<8x512xf32> -> vector<8x512xf32>
    %472 = arith.addf %468, %471 : vector<8x512xf32>
    %473 = vector.extract_strided_slice %472 {offsets = [0, 0], sizes = [8, 128], strides = [1, 1]} : vector<8x512xf32> to vector<8x128xf32>
    %474 = arith.negf %473 : vector<8x128xf32>
    %475 = math.exp %474 : vector<8x128xf32>
    %cst_134 = arith.constant 1.000000e+00 : f32
    %476 = vector.broadcast %cst_134 : f32 to vector<8x128xf32>
    %477 = arith.addf %476, %475 : vector<8x128xf32>
    %478 = arith.divf %476, %477 : vector<8x128xf32>
    %479 = vector.extract_strided_slice %472 {offsets = [0, 128], sizes = [8, 128], strides = [1, 1]} : vector<8x512xf32> to vector<8x128xf32>
    %480 = arith.negf %479 : vector<8x128xf32>
    %481 = math.exp %480 : vector<8x128xf32>
    %cst_135 = arith.constant 1.000000e+00 : f32
    %482 = vector.broadcast %cst_135 : f32 to vector<8x128xf32>
    %483 = arith.addf %482, %481 : vector<8x128xf32>
    %484 = arith.divf %482, %483 : vector<8x128xf32>
    %485 = vector.extract_strided_slice %472 {offsets = [0, 256], sizes = [8, 128], strides = [1, 1]} : vector<8x512xf32> to vector<8x128xf32>
    %486 = math.tanh %485 : vector<8x128xf32>
    %487 = vector.extract_strided_slice %472 {offsets = [0, 384], sizes = [8, 128], strides = [1, 1]} : vector<8x512xf32> to vector<8x128xf32>
    %488 = arith.negf %487 : vector<8x128xf32>
    %489 = math.exp %488 : vector<8x128xf32>
    %cst_136 = arith.constant 1.000000e+00 : f32
    %490 = vector.broadcast %cst_136 : f32 to vector<8x128xf32>
    %491 = arith.addf %490, %489 : vector<8x128xf32>
    %492 = arith.divf %490, %491 : vector<8x128xf32>
    %493 = arith.mulf %484, %462 : vector<8x128xf32>
    %494 = arith.mulf %478, %486 : vector<8x128xf32>
    %495 = arith.addf %493, %494 : vector<8x128xf32>
    %496 = math.tanh %495 : vector<8x128xf32>
    %497 = arith.mulf %492, %496 : vector<8x128xf32>
    %498 = arith.truncf %497 : vector<8x128xf32> to vector<8x128xbf16>
    %c112_137 = arith.constant 112 : index
    %c0_138 = arith.constant 0 : index
    %499 = vector.load %arg3[%c112_137, %c0_138] : memref<128x128xbf16, #tpu.memory_space<vmem>>, vector<8x128xbf16>
    tpu.vector_store %arg3[%c112_137, %c0_138], %498 {strides = array<i32>} : memref<128x128xbf16, #tpu.memory_space<vmem>>, vector<8x128xbf16>,
    %c120 = arith.constant 120 : index
    %c0_139 = arith.constant 0 : index
    %500 = vector.load %arg1[%c120, %c0_139] : memref<128x512xbf16, #tpu.memory_space<vmem>>, vector<8x512xbf16>
    %501 = arith.extf %500 : vector<8x512xbf16> to vector<8x512xf32>
    %502 = arith.truncf %497 : vector<8x128xf32> to vector<8x128xbf16>
    %c0_140 = arith.constant 0 : index
    %c0_141 = arith.constant 0 : index
    %503 = vector.load %arg4[%c0_140, %c0_141] : memref<128x512xbf16, #tpu.memory_space<vmem>>, vector<128x512xbf16>
    %cst_142 = arith.constant dense<0.000000e+00> : vector<8x512xf32>
    %504 = tpu.matmul %502, %503, %cst_142 {dimension_numbers = #tpu.dot_dimension_numbers<[1], [0], [0], [1], [0, 0, 1, 1], [], []>} : vector<8x128xbf16>, vector<128x512xbf16>, vector<8x512xf32> -> vector<8x512xf32>
    %505 = arith.addf %501, %504 : vector<8x512xf32>
    %506 = vector.extract_strided_slice %505 {offsets = [0, 0], sizes = [8, 128], strides = [1, 1]} : vector<8x512xf32> to vector<8x128xf32>
    %507 = arith.negf %506 : vector<8x128xf32>
    %508 = math.exp %507 : vector<8x128xf32>
    %cst_143 = arith.constant 1.000000e+00 : f32
    %509 = vector.broadcast %cst_143 : f32 to vector<8x128xf32>
    %510 = arith.addf %509, %508 : vector<8x128xf32>
    %511 = arith.divf %509, %510 : vector<8x128xf32>
    %512 = vector.extract_strided_slice %505 {offsets = [0, 128], sizes = [8, 128], strides = [1, 1]} : vector<8x512xf32> to vector<8x128xf32>
    %513 = arith.negf %512 : vector<8x128xf32>
    %514 = math.exp %513 : vector<8x128xf32>
    %cst_144 = arith.constant 1.000000e+00 : f32
    %515 = vector.broadcast %cst_144 : f32 to vector<8x128xf32>
    %516 = arith.addf %515, %514 : vector<8x128xf32>
    %517 = arith.divf %515, %516 : vector<8x128xf32>
    %518 = vector.extract_strided_slice %505 {offsets = [0, 256], sizes = [8, 128], strides = [1, 1]} : vector<8x512xf32> to vector<8x128xf32>
    %519 = math.tanh %518 : vector<8x128xf32>
    %520 = vector.extract_strided_slice %505 {offsets = [0, 384], sizes = [8, 128], strides = [1, 1]} : vector<8x512xf32> to vector<8x128xf32>
    %521 = arith.negf %520 : vector<8x128xf32>
    %522 = math.exp %521 : vector<8x128xf32>
    %cst_145 = arith.constant 1.000000e+00 : f32
    %523 = vector.broadcast %cst_145 : f32 to vector<8x128xf32>
    %524 = arith.addf %523, %522 : vector<8x128xf32>
    %525 = arith.divf %523, %524 : vector<8x128xf32>
    %526 = arith.mulf %517, %495 : vector<8x128xf32>
    %527 = arith.mulf %511, %519 : vector<8x128xf32>
    %528 = arith.addf %526, %527 : vector<8x128xf32>
    %529 = math.tanh %528 : vector<8x128xf32>
    %530 = arith.mulf %525, %529 : vector<8x128xf32>
    %531 = arith.truncf %530 : vector<8x128xf32> to vector<8x128xbf16>
    %c120_146 = arith.constant 120 : index
    %c0_147 = arith.constant 0 : index
    %532 = vector.load %arg3[%c120_146, %c0_147] : memref<128x128xbf16, #tpu.memory_space<vmem>>, vector<8x128xbf16>
    tpu.vector_store %arg3[%c120_146, %c0_147], %531 {strides = array<i32>} : memref<128x128xbf16, #tpu.memory_space<vmem>>, vector<8x128xbf16>,
    %c0_148 = arith.constant 0 : index
    %c0_149 = arith.constant 0 : index
    %533 = vector.load %arg6[%c0_148, %c0_149] : memref<8x128xf32, #tpu.memory_space<vmem>>, vector<8x128xf32>
    tpu.vector_store %arg6[%c0_148, %c0_149], %530 {strides = array<i32>} : memref<8x128xf32, #tpu.memory_space<vmem>>, vector<8x128xf32>,
    %c0_150 = arith.constant 0 : index
    %c0_151 = arith.constant 0 : index
    %534 = vector.load %arg7[%c0_150, %c0_151] : memref<8x128xf32, #tpu.memory_space<vmem>>, vector<8x128xf32>
    tpu.vector_store %arg7[%c0_150, %c0_151], %528 {strides = array<i32>} : memref<8x128xf32, #tpu.memory_space<vmem>>, vector<8x128xf32>,
    return
  }
  func.func @transform_0(%arg0: i32) -> (i32, i32) {
    %c0_i32 = arith.constant 0 : i32
    %c0_i32_0 = arith.constant 0 : i32
    return %arg0, %c0_i32 : i32, i32
  }
  func.func @transform_2(%arg0: i32) -> (i32, i32) {
    %c0_i32 = arith.constant 0 : i32
    %c0_i32_0 = arith.constant 0 : i32
    return %arg0, %c0_i32 : i32, i32
  }
}

</mosaic_0001>

<llo_original>
// kernel: tpu_custom_call.1
$region0: #{tpu_custom_call.1}
  #allocation0 [shape = 'u32[]', space=smem, size = 0x4, offset = 0x4, fixed_abs, tag = 'smem constant byte address 0x4 - core index']
  #allocation1 [shape = 'u32[72,128]{1,0:T(1,128)}', space=vmem, size = 0x9000, scoped, tag = 'internal scratch']
  #allocation2 [shape = 'bf16[128,512]{1,0:T(8,128)(2,1)}', space=vmem, size = 0x20000, scoped, tag = 'scratch operand']
  #allocation3 [shape = 's32[1]{0}', space=sflag, size = 0x4, scoped, tag = 'scratch operand']
  #allocation4 [shape = 'f32[8,128]{1,0:T(8,128)}', space=vmem, size = 0x1000, scoped, tag = 'scratch operand']
  #allocation5 [shape = 'f32[8,128]{1,0:T(8,128)}', space=vmem, size = 0x1000, scoped, tag = 'scratch operand']
  #allocation10 [shape = 's32[]', space=sflag, size = 0x4, offset = 0, fixed_abs, tag = 'sflag constant byte address 0x0 - dummy sync flag']
  #allocation11 [shape = 's32[]', space=sflag, size = 0x4, offset = 0, fixed_abs, tag = 'sflag constant byte address 0x0 - dummy sync flag']
  #allocation12 [shape = 'u32[]', space=smem, size = 0x4, offset = 0x44, fixed_abs, tag = 'smem constant byte address 0x44 - assertion arg 0']
  #allocation13 [shape = 'u32[]', space=smem, size = 0x4, offset = 0x48, fixed_abs, tag = 'smem constant byte address 0x48 - assertion arg 1']
  %s0 = inlined_call_operand.hbm [shape: bf16[128,512], index: 0, kind: input, shape index: {}]
  %s1 = inlined_call_operand.hbm [shape: bf16[128,512], index: 1, kind: input, shape index: {}]
  %s2 = inlined_call_operand.hbm [shape: bf16[128,128], index: 2, kind: output, shape index: {}]
  %s3 = sld [smem:[#allocation0]]
  $region26: #{tpu_custom_call.1} parent=0
    _
  %s5 = ssub.s32 1, %s3
  %s6 = scalar_select 0, %s5, %s3
  $region1: #{tpu_custom_call.1} parent=0
    #allocation6 [shape = 'u8[131072]{0}', space=vmem, size = 0x20000, scoped, tag = 'input window, operand 0, single buffered']
    #allocation7 [shape = 's32[1]{0}', space=sflag, size = 0x4, scoped, tag = 'scoped memory for tpu_custom_call.1']
    #allocation8 [shape = 's32[1]{0}', space=sflag, size = 0x4, scoped, tag = 'scoped memory for tpu_custom_call.1']
    #allocation9 [shape = 'u8[32768]{0}', space=vmem, size = 0x8000, scoped, tag = 'output window, operand 0, single buffered']
    %7 = vsyncpa [#allocation7], 0
    %8 = vsyncpa [#allocation8], 0
    // Predicated region
    $region2: #{tpu_custom_call.1} parent=1 // pred_check
      _
    $region3: #{tpu_custom_call.1} parent=1 // pred_check_branch
      %10 = sbr.rel (0) target = $region5
    $region4: #{tpu_custom_call.1} parent=1 // pred_region
      %12 = vsyncadd [#allocation7], 0
      %s13 = sshll.u32 %s0, 4
      %s14 = int_to_ptr.hbm [resolvable:$true] %s13
      %s15 = sshll.u32 [#allocation6], 4
      %s16 = int_to_ptr.vmem [resolvable:$true] %s15
      %21 = dma.hbm_to_vmem [thread:$0]  %s14, 4096, %s16, [#allocation7], 256, 256, 16
    $region5: #{tpu_custom_call.1} parent=1 // pred_fallthru
      _
    // Predicated region
    $region6: #{tpu_custom_call.1} parent=1 // pred_check
      _
    $region7: #{tpu_custom_call.1} parent=1 // pred_check_branch
      %23 = sbr.rel (0) target = $region9
    $region8: #{tpu_custom_call.1} parent=1 // pred_region
      %25 = dma.done [#allocation7], 4096
    $region9: #{tpu_custom_call.1} parent=1 // pred_fallthru
      _
    %p26 = scmp.eq.s32.totalorder 0, 0
    // Predicated region
    $region10: #{tpu_custom_call.1} parent=1 // pred_check
      %p27 = pneg %p26
    $region11: #{tpu_custom_call.1} parent=1 // pred_check_branch
      %29 = sbr.rel (%p27) target = $region13
    $region12: #{tpu_custom_call.1} parent=1 // pred_region
      %30 = vst [vmem:[#allocation4] sm:$0xff] 0.0
      %31 = vst [vmem:[#allocation5] sm:$0xff] 0.0
      // Predicated region
      $region14: #{tpu_custom_call.1} parent=12 // pred_check
        _
      $region15: #{tpu_custom_call.1} parent=12 // pred_check_branch
        %33 = sbr.rel target = $region17
      $region16: #{tpu_custom_call.1} parent=12 // pred_region
        %34 = sst [smem:[#allocation12]] [#allocation11]
        %35 = sst [smem:[#allocation13]] [#allocation10]
      $region17: #{tpu_custom_call.1} parent=12 // pred_fallthru
        _
      %37 = shalt.err (0)
      %s39 = sshll.u32 %s1, 4
      %s40 = int_to_ptr.hbm [resolvable:$true] %s39
      %s41 = sshll.u32 [#allocation2], 4
      %s42 = int_to_ptr.vmem [resolvable:$true] %s41
      %44 = dma.hbm_to_vmem [thread:$0]  %s40, 4096, %s42, [#allocation3]
      %s45 = smul.u32 4, 16
      %s46 = smul.u32 %s45, 4
      %s47 = sshll.u32 %s46, 4
      %48 = dma.done [#allocation3], %s47
    $region13: #{tpu_custom_call.1} parent=1 // pred_fallthru
      _
    %v49 = vld [vmem:[#allocation4] sm:$0xff]
    %v50 = vld [vmem:[#allocation5] sm:$0xff]
    %v51 = vld [vmem:[#allocation6] sm:$0xff]
    %v52 = vld [vmem:[#allocation6 + $0x8] sm:$0xff]
    %v53 = vunpack.c.l.bf16 %v51
    %v54 = vunpack.c.h.bf16 %v51
    %v55 = vunpack.c.l.bf16 %v52
    %v56 = vunpack.c.h.bf16 %v52
    %v57 = vpack.c.bf16 %v49, %v49
    %v58 = vld [vmem:[#allocation2] sm:$0xff]
    %v59 = vld [vmem:[#allocation2 + $0x8] sm:$0xff]
    %v60 = vld [vmem:[#allocation2 + $0x10] sm:$0xff]
    %v61 = vld [vmem:[#allocation2 + $0x18] sm:$0xff]
    %v62 = vld [vmem:[#allocation2 + $0x20] sm:$0xff]
    %v63 = vld [vmem:[#allocation2 + $0x28] sm:$0xff]
    %v64 = vld [vmem:[#allocation2 + $0x30] sm:$0xff]
    %v65 = vld [vmem:[#allocation2 + $0x38] sm:$0xff]
    %v66 = vld [vmem:[#allocation2 + $0x40] sm:$0xff]
    %v67 = vld [vmem:[#allocation2 + $0x48] sm:$0xff]
    %v68 = vld [vmem:[#allocation2 + $0x50] sm:$0xff]
    %v69 = vld [vmem:[#allocation2 + $0x58] sm:$0xff]
    %v70 = vld [vmem:[#allocation2 + $0x60] sm:$0xff]
    %v71 = vld [vmem:[#allocation2 + $0x68] sm:$0xff]
    %v72 = vld [vmem:[#allocation2 + $0x70] sm:$0xff]
    %v73 = vld [vmem:[#allocation2 + $0x78] sm:$0xff]
    %v74 = vld [vmem:[#allocation2 + $0x80] sm:$0xff]
    %v75 = vld [vmem:[#allocation2 + $0x88] sm:$0xff]
    %v76 = vld [vmem:[#allocation2 + $0x90] sm:$0xff]
    %v77 = vld [vmem:[#allocation2 + $0x98] sm:$0xff]
    %v78 = vld [vmem:[#allocation2 + $0xa0] sm:$0xff]
    %v79 = vld [vmem:[#allocation2 + $0xa8] sm:$0xff]
    %v80 = vld [vmem:[#allocation2 + $0xb0] sm:$0xff]
    %v81 = vld [vmem:[#allocation2 + $0xb8] sm:$0xff]
    %v82 = vld [vmem:[#allocation2 + $0xc0] sm:$0xff]
    %v83 = vld [vmem:[#allocation2 + $0xc8] sm:$0xff]
    %v84 = vld [vmem:[#allocation2 + $0xd0] sm:$0xff]
    %v85 = vld [vmem:[#allocation2 + $0xd8] sm:$0xff]
    %v86 = vld [vmem:[#allocation2 + $0xe0] sm:$0xff]
    %v87 = vld [vmem:[#allocation2 + $0xe8] sm:$0xff]
    %v88 = vld [vmem:[#allocation2 + $0xf0] sm:$0xff]
    %v89 = vld [vmem:[#allocation2 + $0xf8] sm:$0xff]
    %v122 = vunpack.c.l.b16 %v58
    %v123 = vunpack.c.h.b16 %v58
    %v124 = vunpack.c.l.b16 %v59
    %v125 = vunpack.c.h.b16 %v59
    %v126 = vunpack.c.l.b16 %v60
    %v127 = vunpack.c.h.b16 %v60
    %v128 = vunpack.c.l.b16 %v61
    %v129 = vunpack.c.h.b16 %v61
    %v130 = vunpack.c.l.b16 %v62
    %v131 = vunpack.c.h.b16 %v62
    %v132 = vunpack.c.l.b16 %v63
    %v133 = vunpack.c.h.b16 %v63
    %v134 = vunpack.c.l.b16 %v64
    %v135 = vunpack.c.h.b16 %v64
    %v136 = vunpack.c.l.b16 %v65
    %v137 = vunpack.c.h.b16 %v65
    %v138 = vunpack.c.l.b16 %v66
    %v139 = vunpack.c.h.b16 %v66
    %v140 = vunpack.c.l.b16 %v67
    %v141 = vunpack.c.h.b16 %v67
    %v142 = vunpack.c.l.b16 %v68
    %v143 = vunpack.c.h.b16 %v68
    %v144 = vunpack.c.l.b16 %v69
    %v145 = vunpack.c.h.b16 %v69
    %v146 = vunpack.c.l.b16 %v70
    %v147 = vunpack.c.h.b16 %v70
    %v148 = vunpack.c.l.b16 %v71
    %v149 = vunpack.c.h.b16 %v71
    %v150 = vunpack.c.l.b16 %v72
    %v151 = vunpack.c.h.b16 %v72
    %v152 = vunpack.c.l.b16 %v73
    %v153 = vunpack.c.h.b16 %v73
    %v154 = vunpack.c.l.b16 %v74
    %v155 = vunpack.c.h.b16 %v74
    %v156 = vunpack.c.l.b16 %v75
    %v157 = vunpack.c.h.b16 %v75
    %v158 = vunpack.c.l.b16 %v76
    %v159 = vunpack.c.h.b16 %v76
    %v160 = vunpack.c.l.b16 %v77
    %v161 = vunpack.c.h.b16 %v77
    %v162 = vunpack.c.l.b16 %v78
    %v163 = vunpack.c.h.b16 %v78
    %v164 = vunpack.c.l.b16 %v79
    %v165 = vunpack.c.h.b16 %v79
    %v166 = vunpack.c.l.b16 %v80
    %v167 = vunpack.c.h.b16 %v80
    %v168 = vunpack.c.l.b16 %v81
    %v169 = vunpack.c.h.b16 %v81
    %v170 = vunpack.c.l.b16 %v82
    %v171 = vunpack.c.h.b16 %v82
    %v172 = vunpack.c.l.b16 %v83
    %v173 = vunpack.c.h.b16 %v83
    %v174 = vunpack.c.l.b16 %v84
    %v175 = vunpack.c.h.b16 %v84
    %v176 = vunpack.c.l.b16 %v85
    %v177 = vunpack.c.h.b16 %v85
    %v178 = vunpack.c.l.b16 %v86
    %v179 = vunpack.c.h.b16 %v86
    %v180 = vunpack.c.l.b16 %v87
    %v181 = vunpack.c.h.b16 %v87
    %v182 = vunpack.c.l.b16 %v88
    %v183 = vunpack.c.h.b16 %v88
    %v184 = vunpack.c.l.b16 %v89
    %v185 = vunpack.c.h.b16 %v89
    %v186 = vpack.c.b16 %v126, %v122
    %v187 = vpack.c.b16 %v127, %v123
    %v188 = vpack.c.b16 %v128, %v124
    %v189 = vpack.c.b16 %v129, %v125
    %v190 = vpack.c.b16 %v134, %v130
    %v191 = vpack.c.b16 %v135, %v131
    %v192 = vpack.c.b16 %v136, %v132
    %v193 = vpack.c.b16 %v137, %v133
    %v194 = vpack.c.b16 %v142, %v138
    %v195 = vpack.c.b16 %v143, %v139
    %v196 = vpack.c.b16 %v144, %v140
    %v197 = vpack.c.b16 %v145, %v141
    %v198 = vpack.c.b16 %v150, %v146
    %v199 = vpack.c.b16 %v151, %v147
    %v200 = vpack.c.b16 %v152, %v148
    %v201 = vpack.c.b16 %v153, %v149
    %v202 = vpack.c.b16 %v158, %v154
    %v203 = vpack.c.b16 %v159, %v155
    %v204 = vpack.c.b16 %v160, %v156
    %v205 = vpack.c.b16 %v161, %v157
    %v206 = vpack.c.b16 %v166, %v162
    %v207 = vpack.c.b16 %v167, %v163
    %v208 = vpack.c.b16 %v168, %v164
    %v209 = vpack.c.b16 %v169, %v165
    %v210 = vpack.c.b16 %v174, %v170
    %v211 = vpack.c.b16 %v175, %v171
    %v212 = vpack.c.b16 %v176, %v172
    %v213 = vpack.c.b16 %v177, %v173
    %v214 = vpack.c.b16 %v182, %v178
    %v215 = vpack.c.b16 %v183, %v179
    %v216 = vpack.c.b16 %v184, %v180
    %v217 = vpack.c.b16 %v185, %v181
    %250 = vmatpush.bf16.msra.mxu0 %v214
    %251 = vmatpush.bf16.msra.mxu0 %v210
    %252 = vmatpush.bf16.msra.mxu0 %v206
    %253 = vmatpush.bf16.msra.mxu0 %v202
    %254 = vmatpush.bf16.msra.mxu0 %v198
    %255 = vmatpush.bf16.msra.mxu0 %v194
    %256 = vmatpush.bf16.msra.mxu0 %v190
    %257 = vmatpush.bf16.msra.mxu0 %v186
    %258 = vmatmul.bf16.gmra.mxu0 %v57
    %v259 = vpop.f32.mrf.mxu0
    %v260 = vadd.f32 0.0, %v259
    %v261 = vpop.f32.mrf.mxu0
    %262 = vdwg.mxu0
    %263 = vmatpush.bf16.msra.mxu0 %v215
    %264 = vmatpush.bf16.msra.mxu0 %v211
    %265 = vmatpush.bf16.msra.mxu0 %v207
    %266 = vmatpush.bf16.msra.mxu0 %v203
    %267 = vmatpush.bf16.msra.mxu0 %v199
    %268 = vmatpush.bf16.msra.mxu0 %v195
    %269 = vmatpush.bf16.msra.mxu0 %v191
    %270 = vmatpush.bf16.msra.mxu0 %v187
    %271 = vmatmul.bf16.gmra.mxu0 %v57
    %v272 = vpop.f32.mrf.mxu0
    %v273 = vadd.f32 0.0, %v272
    %v274 = vpop.f32.mrf.mxu0
    %275 = vdwg.mxu0
    %276 = vmatpush.bf16.msra.mxu0 %v216
    %277 = vmatpush.bf16.msra.mxu0 %v212
    %278 = vmatpush.bf16.msra.mxu0 %v208
    %279 = vmatpush.bf16.msra.mxu0 %v204
    %280 = vmatpush.bf16.msra.mxu0 %v200
    %281 = vmatpush.bf16.msra.mxu0 %v196
    %282 = vmatpush.bf16.msra.mxu0 %v192
    %283 = vmatpush.bf16.msra.mxu0 %v188
    %284 = vmatmul.bf16.gmra.mxu0 %v57
    %v285 = vpop.f32.mrf.mxu0
    %v286 = vadd.f32 0.0, %v285
    %v287 = vpop.f32.mrf.mxu0
    %288 = vdwg.mxu0
    %289 = vmatpush.bf16.msra.mxu0 %v217
    %290 = vmatpush.bf16.msra.mxu0 %v213
    %291 = vmatpush.bf16.msra.mxu0 %v209
    %292 = vmatpush.bf16.msra.mxu0 %v205
    %293 = vmatpush.bf16.msra.mxu0 %v201
    %294 = vmatpush.bf16.msra.mxu0 %v197
    %295 = vmatpush.bf16.msra.mxu0 %v193
    %296 = vmatpush.bf16.msra.mxu0 %v189
    %297 = vmatmul.bf16.gmra.mxu0 %v57
    %v298 = vpop.f32.mrf.mxu0
    %v299 = vadd.f32 0.0, %v298
    %v300 = vpop.f32.mrf.mxu0
    %301 = vdwg.mxu0
    %v302 = vadd.f32 %v53, %v260
    %v303 = vadd.f32 %v54, %v273
    %v304 = vadd.f32 %v55, %v286
    %v305 = vadd.f32 %v56, %v299
    %v306 = vxor.u32 %v302, 2147483648
    %v307 = vmul.f32 %v306, 1.442695
    %v308 = vpow.pop %v307
    %v309 = vadd.f32 %v308, 1.0
    %v310 = vrcp.pop %v309
    %v311 = vmul.f32 %v309, %v310
    %v312 = vsub.f32 1.0, %v311
    %v313 = vmul.f32 %v310, %v312
    %v314 = vadd.f32 %v310, %v313
    %vm315 = vweird.f32 %v309
    %vm316 = vweird.f32 %v310
    %vm317 = vmor %vm315, %vm316
    %v318 = vsel %vm317, %v310, %v314
    %v319 = vand.u32 2147483647, %v309
    %vm320 = vcmp.eq.f32.partialorder %v319, 8.507059e+37
    %v321 = vand.u32 %v309, 2147483648
    %v322 = vor.u32 1.1754944e-38, %v321
    %v323 = vsel %vm320, %v322, %v318
    %v324 = vmul.f32 1.0, %v323
    %v325 = vxor.u32 %v303, 2147483648
    %v326 = vmul.f32 %v325, 1.442695
    %v327 = vpow.pop %v326
    %v328 = vadd.f32 %v327, 1.0
    %v329 = vrcp.pop %v328
    %v330 = vmul.f32 %v328, %v329
    %v331 = vsub.f32 1.0, %v330
    %v332 = vmul.f32 %v329, %v331
    %v333 = vadd.f32 %v329, %v332
    %vm334 = vweird.f32 %v328
    %vm335 = vweird.f32 %v329
    %vm336 = vmor %vm334, %vm335
    %v337 = vsel %vm336, %v329, %v333
    %v338 = vand.u32 2147483647, %v328
    %vm339 = vcmp.eq.f32.partialorder %v338, 8.507059e+37
    %v340 = vand.u32 %v328, 2147483648
    %v341 = vor.u32 1.1754944e-38, %v340
    %v342 = vsel %vm339, %v341, %v337
    %v343 = vmul.f32 1.0, %v342
    %v344 = vtanh.pop %v304
    %v345 = vxor.u32 %v305, 2147483648
    %v346 = vmul.f32 %v345, 1.442695
    %v347 = vpow.pop %v346
    %v348 = vadd.f32 %v347, 1.0
    %v349 = vrcp.pop %v348
    %v350 = vmul.f32 %v348, %v349
    %v351 = vsub.f32 1.0, %v350
    %v352 = vmul.f32 %v349, %v351
    %v353 = vadd.f32 %v349, %v352
    %vm354 = vweird.f32 %v348
    %vm355 = vweird.f32 %v349
    %vm356 = vmor %vm354, %vm355
    %v357 = vsel %vm356, %v349, %v353
    %v358 = vand.u32 2147483647, %v348
    %vm359 = vcmp.eq.f32.partialorder %v358, 8.507059e+37
    %v360 = vand.u32 %v348, 2147483648
    %v361 = vor.u32 1.1754944e-38, %v360
    %v362 = vsel %vm359, %v361, %v357
    %v363 = vmul.f32 1.0, %v362
    %v364 = vmul.f32 %v343, %v50
    %v365 = vmul.f32 %v324, %v344
    %v366 = vadd.f32 %v364, %v365
    %v367 = vtanh.pop %v366
    %v368 = vmul.f32 %v363, %v367
    %v369 = vpack.c.bf16 %v368, %v368
    %370 = vst [vmem:[#allocation9] sm:$0xf] %v369
    %v371 = vld [vmem:[#allocation6 + $0x10] sm:$0xff]
    %v372 = vld [vmem:[#allocation6 + $0x18] sm:$0xff]
    %v373 = vunpack.c.l.bf16 %v371
    %v374 = vunpack.c.h.bf16 %v371
    %v375 = vunpack.c.l.bf16 %v372
    %v376 = vunpack.c.h.bf16 %v372
    %v377 = vld [vmem:[#allocation2] sm:$0xff]
    %v378 = vld [vmem:[#allocation2 + $0x8] sm:$0xff]
    %v379 = vld [vmem:[#allocation2 + $0x10] sm:$0xff]
    %v380 = vld [vmem:[#allocation2 + $0x18] sm:$0xff]
    %v381 = vld [vmem:[#allocation2 + $0x20] sm:$0xff]
    %v382 = vld [vmem:[#allocation2 + $0x28] sm:$0xff]
    %v383 = vld [vmem:[#allocation2 + $0x30] sm:$0xff]
    %v384 = vld [vmem:[#allocation2 + $0x38] sm:$0xff]
    %v385 = vld [vmem:[#allocation2 + $0x40] sm:$0xff]
    %v386 = vld [vmem:[#allocation2 + $0x48] sm:$0xff]
    %v387 = vld [vmem:[#allocation2 + $0x50] sm:$0xff]
    %v388 = vld [vmem:[#allocation2 + $0x58] sm:$0xff]
    %v389 = vld [vmem:[#allocation2 + $0x60] sm:$0xff]
    %v390 = vld [vmem:[#allocation2 + $0x68] sm:$0xff]
    %v391 = vld [vmem:[#allocation2 + $0x70] sm:$0xff]
    %v392 = vld [vmem:[#allocation2 + $0x78] sm:$0xff]
    %v393 = vld [vmem:[#allocation2 + $0x80] sm:$0xff]
    %v394 = vld [vmem:[#allocation2 + $0x88] sm:$0xff]
    %v395 = vld [vmem:[#allocation2 + $0x90] sm:$0xff]
    %v396 = vld [vmem:[#allocation2 + $0x98] sm:$0xff]
    %v397 = vld [vmem:[#allocation2 + $0xa0] sm:$0xff]
    %v398 = vld [vmem:[#allocation2 + $0xa8] sm:$0xff]
    %v399 = vld [vmem:[#allocation2 + $0xb0] sm:$0xff]
    %v400 = vld [vmem:[#allocation2 + $0xb8] sm:$0xff]
    %v401 = vld [vmem:[#allocation2 + $0xc0] sm:$0xff]
    %v402 = vld [vmem:[#allocation2 + $0xc8] sm:$0xff]
    %v403 = vld [vmem:[#allocation2 + $0xd0] sm:$0xff]
    %v404 = vld [vmem:[#allocation2 + $0xd8] sm:$0xff]
    %v405 = vld [vmem:[#allocation2 + $0xe0] sm:$0xff]
    %v406 = vld [vmem:[#allocation2 + $0xe8] sm:$0xff]
    %v407 = vld [vmem:[#allocation2 + $0xf0] sm:$0xff]
    %v408 = vld [vmem:[#allocation2 + $0xf8] sm:$0xff]
    %v441 = vunpack.c.l.b16 %v377
    %v442 = vunpack.c.h.b16 %v377
    %v443 = vunpack.c.l.b16 %v378
    %v444 = vunpack.c.h.b16 %v378
    %v445 = vunpack.c.l.b16 %v379
    %v446 = vunpack.c.h.b16 %v379
    %v447 = vunpack.c.l.b16 %v380
    %v448 = vunpack.c.h.b16 %v380
    %v449 = vunpack.c.l.b16 %v381
    %v450 = vunpack.c.h.b16 %v381
    %v451 = vunpack.c.l.b16 %v382
    %v452 = vunpack.c.h.b16 %v382
    %v453 = vunpack.c.l.b16 %v383
    %v454 = vunpack.c.h.b16 %v383
    %v455 = vunpack.c.l.b16 %v384
    %v456 = vunpack.c.h.b16 %v384
    %v457 = vunpack.c.l.b16 %v385
    %v458 = vunpack.c.h.b16 %v385
    %v459 = vunpack.c.l.b16 %v386
    %v460 = vunpack.c.h.b16 %v386
    %v461 = vunpack.c.l.b16 %v387
    %v462 = vunpack.c.h.b16 %v387
    %v463 = vunpack.c.l.b16 %v388
    %v464 = vunpack.c.h.b16 %v388
    %v465 = vunpack.c.l.b16 %v389
    %v466 = vunpack.c.h.b16 %v389
    %v467 = vunpack.c.l.b16 %v390
    %v468 = vunpack.c.h.b16 %v390
    %v469 = vunpack.c.l.b16 %v391
    %v470 = vunpack.c.h.b16 %v391
    %v471 = vunpack.c.l.b16 %v392
    %v472 = vunpack.c.h.b16 %v392
    %v473 = vunpack.c.l.b16 %v393
    %v474 = vunpack.c.h.b16 %v393
    %v475 = vunpack.c.l.b16 %v394
    %v476 = vunpack.c.h.b16 %v394
    %v477 = vunpack.c.l.b16 %v395
    %v478 = vunpack.c.h.b16 %v395
    %v479 = vunpack.c.l.b16 %v396
    %v480 = vunpack.c.h.b16 %v396
    %v481 = vunpack.c.l.b16 %v397
    %v482 = vunpack.c.h.b16 %v397
    %v483 = vunpack.c.l.b16 %v398
    %v484 = vunpack.c.h.b16 %v398
    %v485 = vunpack.c.l.b16 %v399
    %v486 = vunpack.c.h.b16 %v399
    %v487 = vunpack.c.l.b16 %v400
    %v488 = vunpack.c.h.b16 %v400
    %v489 = vunpack.c.l.b16 %v401
    %v490 = vunpack.c.h.b16 %v401
    %v491 = vunpack.c.l.b16 %v402
    %v492 = vunpack.c.h.b16 %v402
    %v493 = vunpack.c.l.b16 %v403
    %v494 = vunpack.c.h.b16 %v403
    %v495 = vunpack.c.l.b16 %v404
    %v496 = vunpack.c.h.b16 %v404
    %v497 = vunpack.c.l.b16 %v405
    %v498 = vunpack.c.h.b16 %v405
    %v499 = vunpack.c.l.b16 %v406
    %v500 = vunpack.c.h.b16 %v406
    %v501 = vunpack.c.l.b16 %v407
    %v502 = vunpack.c.h.b16 %v407
    %v503 = vunpack.c.l.b16 %v408
    %v504 = vunpack.c.h.b16 %v408
    %v505 = vpack.c.b16 %v445, %v441
    %v506 = vpack.c.b16 %v446, %v442
    %v507 = vpack.c.b16 %v447, %v443
    %v508 = vpack.c.b16 %v448, %v444
    %v509 = vpack.c.b16 %v453, %v449
    %v510 = vpack.c.b16 %v454, %v450
    %v511 = vpack.c.b16 %v455, %v451
    %v512 = vpack.c.b16 %v456, %v452
    %v513 = vpack.c.b16 %v461, %v457
    %v514 = vpack.c.b16 %v462, %v458
    %v515 = vpack.c.b16 %v463, %v459
    %v516 = vpack.c.b16 %v464, %v460
    %v517 = vpack.c.b16 %v469, %v465
    %v518 = vpack.c.b16 %v470, %v466
    %v519 = vpack.c.b16 %v471, %v467
    %v520 = vpack.c.b16 %v472, %v468
    %v521 = vpack.c.b16 %v477, %v473
    %v522 = vpack.c.b16 %v478, %v474
    %v523 = vpack.c.b16 %v479, %v475
    %v524 = vpack.c.b16 %v480, %v476
    %v525 = vpack.c.b16 %v485, %v481
    %v526 = vpack.c.b16 %v486, %v482
    %v527 = vpack.c.b16 %v487, %v483
    %v528 = vpack.c.b16 %v488, %v484
    %v529 = vpack.c.b16 %v493, %v489
    %v530 = vpack.c.b16 %v494, %v490
    %v531 = vpack.c.b16 %v495, %v491
    %v532 = vpack.c.b16 %v496, %v492
    %v533 = vpack.c.b16 %v501, %v497
    %v534 = vpack.c.b16 %v502, %v498
    %v535 = vpack.c.b16 %v503, %v499
    %v536 = vpack.c.b16 %v504, %v500
    %569 = vmatpush.bf16.msra.mxu0 %v533
    %570 = vmatpush.bf16.msra.mxu0 %v529
    %571 = vmatpush.bf16.msra.mxu0 %v525
    %572 = vmatpush.bf16.msra.mxu0 %v521
    %573 = vmatpush.bf16.msra.mxu0 %v517
    %574 = vmatpush.bf16.msra.mxu0 %v513
    %575 = vmatpush.bf16.msra.mxu0 %v509
    %576 = vmatpush.bf16.msra.mxu0 %v505
    %577 = vmatmul.bf16.gmra.mxu0 %v369
    %v578 = vpop.f32.mrf.mxu0
    %v579 = vadd.f32 0.0, %v578
    %v580 = vpop.f32.mrf.mxu0
    %581 = vdwg.mxu0
    %582 = vmatpush.bf16.msra.mxu0 %v534
    %583 = vmatpush.bf16.msra.mxu0 %v530
    %584 = vmatpush.bf16.msra.mxu0 %v526
    %585 = vmatpush.bf16.msra.mxu0 %v522
    %586 = vmatpush.bf16.msra.mxu0 %v518
    %587 = vmatpush.bf16.msra.mxu0 %v514
    %588 = vmatpush.bf16.msra.mxu0 %v510
    %589 = vmatpush.bf16.msra.mxu0 %v506
    %590 = vmatmul.bf16.gmra.mxu0 %v369
    %v591 = vpop.f32.mrf.mxu0
    %v592 = vadd.f32 0.0, %v591
    %v593 = vpop.f32.mrf.mxu0
    %594 = vdwg.mxu0
    %595 = vmatpush.bf16.msra.mxu0 %v535
    %596 = vmatpush.bf16.msra.mxu0 %v531
    %597 = vmatpush.bf16.msra.mxu0 %v527
    %598 = vmatpush.bf16.msra.mxu0 %v523
    %599 = vmatpush.bf16.msra.mxu0 %v519
    %600 = vmatpush.bf16.msra.mxu0 %v515
    %601 = vmatpush.bf16.msra.mxu0 %v511
    %602 = vmatpush.bf16.msra.mxu0 %v507
    %603 = vmatmul.bf16.gmra.mxu0 %v369
    %v604 = vpop.f32.mrf.mxu0
    %v605 = vadd.f32 0.0, %v604
    %v606 = vpop.f32.mrf.mxu0
    %607 = vdwg.mxu0
    %608 = vmatpush.bf16.msra.mxu0 %v536
    %609 = vmatpush.bf16.msra.mxu0 %v532
    %610 = vmatpush.bf16.msra.mxu0 %v528
    %611 = vmatpush.bf16.msra.mxu0 %v524
    %612 = vmatpush.bf16.msra.mxu0 %v520
    %613 = vmatpush.bf16.msra.mxu0 %v516
    %614 = vmatpush.bf16.msra.mxu0 %v512
    %615 = vmatpush.bf16.msra.mxu0 %v508
    %616 = vmatmul.bf16.gmra.mxu0 %v369
    %v617 = vpop.f32.mrf.mxu0
    %v618 = vadd.f32 0.0, %v617
    %v619 = vpop.f32.mrf.mxu0
    %620 = vdwg.mxu0
    %v621 = vadd.f32 %v373, %v579
    %v622 = vadd.f32 %v374, %v592
    %v623 = vadd.f32 %v375, %v605
    %v624 = vadd.f32 %v376, %v618
    %v625 = vxor.u32 %v621, 2147483648
    %v626 = vmul.f32 %v625, 1.442695
    %v627 = vpow.pop %v626
    %v628 = vadd.f32 %v627, 1.0
    %v629 = vrcp.pop %v628
    %v630 = vmul.f32 %v628, %v629
    %v631 = vsub.f32 1.0, %v630
    %v632 = vmul.f32 %v629, %v631
    %v633 = vadd.f32 %v629, %v632
    %vm634 = vweird.f32 %v628
    %vm635 = vweird.f32 %v629
    %vm636 = vmor %vm634, %vm635
    %v637 = vsel %vm636, %v629, %v633
    %v638 = vand.u32 2147483647, %v628
    %vm639 = vcmp.eq.f32.partialorder %v638, 8.507059e+37
    %v640 = vand.u32 %v628, 2147483648
    %v641 = vor.u32 1.1754944e-38, %v640
    %v642 = vsel %vm639, %v641, %v637
    %v643 = vmul.f32 1.0, %v642
    %v644 = vxor.u32 %v622, 2147483648
    %v645 = vmul.f32 %v644, 1.442695
    %v646 = vpow.pop %v645
    %v647 = vadd.f32 %v646, 1.0
    %v648 = vrcp.pop %v647
    %v649 = vmul.f32 %v647, %v648
    %v650 = vsub.f32 1.0, %v649
    %v651 = vmul.f32 %v648, %v650
    %v652 = vadd.f32 %v648, %v651
    %vm653 = vweird.f32 %v647
    %vm654 = vweird.f32 %v648
    %vm655 = vmor %vm653, %vm654
    %v656 = vsel %vm655, %v648, %v652
    %v657 = vand.u32 2147483647, %v647
    %vm658 = vcmp.eq.f32.partialorder %v657, 8.507059e+37
    %v659 = vand.u32 %v647, 2147483648
    %v660 = vor.u32 1.1754944e-38, %v659
    %v661 = vsel %vm658, %v660, %v656
    %v662 = vmul.f32 1.0, %v661
    %v663 = vtanh.pop %v623
    %v664 = vxor.u32 %v624, 2147483648
    %v665 = vmul.f32 %v664, 1.442695
    %v666 = vpow.pop %v665
    %v667 = vadd.f32 %v666, 1.0
    %v668 = vrcp.pop %v667
    %v669 = vmul.f32 %v667, %v668
    %v670 = vsub.f32 1.0, %v669
    %v671 = vmul.f32 %v668, %v670
    %v672 = vadd.f32 %v668, %v671
    %vm673 = vweird.f32 %v667
    %vm674 = vweird.f32 %v668
    %vm675 = vmor %vm673, %vm674
    %v676 = vsel %vm675, %v668, %v672
    %v677 = vand.u32 2147483647, %v667
    %vm678 = vcmp.eq.f32.partialorder %v677, 8.507059e+37
    %v679 = vand.u32 %v667, 2147483648
    %v680 = vor.u32 1.1754944e-38, %v679
    %v681 = vsel %vm678, %v680, %v676
    %v682 = vmul.f32 1.0, %v681
    %v683 = vmul.f32 %v662, %v366
    %v684 = vmul.f32 %v643, %v663
    %v685 = vadd.f32 %v683, %v684
    %v686 = vtanh.pop %v685
    %v687 = vmul.f32 %v682, %v686
    %v688 = vpack.c.bf16 %v687, %v687
    %689 = vst [vmem:[#allocation9 + $0x4] sm:$0xf] %v688
    %v690 = vld [vmem:[#allocation6 + $0x20] sm:$0xff]
    %v691 = vld [vmem:[#allocation6 + $0x28] sm:$0xff]
    %v692 = vunpack.c.l.bf16 %v690
    %v693 = vunpack.c.h.bf16 %v690
    %v694 = vunpack.c.l.bf16 %v691
    %v695 = vunpack.c.h.bf16 %v691
    %v696 = vld [vmem:[#allocation2] sm:$0xff]
    %v697 = vld [vmem:[#allocation2 + $0x8] sm:$0xff]
    %v698 = vld [vmem:[#allocation2 + $0x10] sm:$0xff]
    %v699 = vld [vmem:[#allocation2 + $0x18] sm:$0xff]
    %v700 = vld [vmem:[#allocation2 + $0x20] sm:$0xff]
    %v701 = vld [vmem:[#allocation2 + $0x28] sm:$0xff]
    %v702 = vld [vmem:[#allocation2 + $0x30] sm:$0xff]
    %v703 = vld [vmem:[#allocation2 + $0x38] sm:$0xff]
    %v704 = vld [vmem:[#allocation2 + $0x40] sm:$0xff]
    %v705 = vld [vmem:[#allocation2 + $0x48] sm:$0xff]
    %v706 = vld [vmem:[#allocation2 + $0x50] sm:$0xff]
    %v707 = vld [vmem:[#allocation2 + $0x58] sm:$0xff]
    %v708 = vld [vmem:[#allocation2 + $0x60] sm:$0xff]
    %v709 = vld [vmem:[#allocation2 + $0x68] sm:$0xff]
    %v710 = vld [vmem:[#allocation2 + $0x70] sm:$0xff]
    %v711 = vld [vmem:[#allocation2 + $0x78] sm:$0xff]
    %v712 = vld [vmem:[#allocation2 + $0x80] sm:$0xff]
    %v713 = vld [vmem:[#allocation2 + $0x88] sm:$0xff]
    %v714 = vld [vmem:[#allocation2 + $0x90] sm:$0xff]
    %v715 = vld [vmem:[#allocation2 + $0x98] sm:$0xff]
    %v716 = vld [vmem:[#allocation2 + $0xa0] sm:$0xff]
    %v717 = vld [vmem:[#allocation2 + $0xa8] sm:$0xff]
    %v718 = vld [vmem:[#allocation2 + $0xb0] sm:$0xff]
    %v719 = vld [vmem:[#allocation2 + $0xb8] sm:$0xff]
    %v720 = vld [vmem:[#allocation2 + $0xc0] sm:$0xff]
    %v721 = vld [vmem:[#allocation2 + $0xc8] sm:$0xff]
    %v722 = vld [vmem:[#allocation2 + $0xd0] sm:$0xff]
    %v723 = vld [vmem:[#allocation2 + $0xd8] sm:$0xff]
    %v724 = vld [vmem:[#allocation2 + $0xe0] sm:$0xff]
    %v725 = vld [vmem:[#allocation2 + $0xe8] sm:$0xff]
    %v726 = vld [vmem:[#allocation2 + $0xf0] sm:$0xff]
    %v727 = vld [vmem:[#allocation2 + $0xf8] sm:$0xff]
    %v760 = vunpack.c.l.b16 %v696
    %v761 = vunpack.c.h.b16 %v696
    %v762 = vunpack.c.l.b16 %v697
    %v763 = vunpack.c.h.b16 %v697
    %v764 = vunpack.c.l.b16 %v698
    %v765 = vunpack.c.h.b16 %v698
    %v766 = vunpack.c.l.b16 %v699
    %v767 = vunpack.c.h.b16 %v699
    %v768 = vunpack.c.l.b16 %v700
    %v769 = vunpack.c.h.b16 %v700
    %v770 = vunpack.c.l.b16 %v701
    %v771 = vunpack.c.h.b16 %v701
    %v772 = vunpack.c.l.b16 %v702
    %v773 = vunpack.c.h.b16 %v702
    %v774 = vunpack.c.l.b16 %v703
    %v775 = vunpack.c.h.b16 %v703
    %v776 = vunpack.c.l.b16 %v704
    %v777 = vunpack.c.h.b16 %v704
    %v778 = vunpack.c.l.b16 %v705
    %v779 = vunpack.c.h.b16 %v705
    %v780 = vunpack.c.l.b16 %v706
    %v781 = vunpack.c.h.b16 %v706
    %v782 = vunpack.c.l.b16 %v707
    %v783 = vunpack.c.h.b16 %v707
    %v784 = vunpack.c.l.b16 %v708
    %v785 = vunpack.c.h.b16 %v708
    %v786 = vunpack.c.l.b16 %v709
    %v787 = vunpack.c.h.b16 %v709
    %v788 = vunpack.c.l.b16 %v710
    %v789 = vunpack.c.h.b16 %v710
    %v790 = vunpack.c.l.b16 %v711
    %v791 = vunpack.c.h.b16 %v711
    %v792 = vunpack.c.l.b16 %v712
    %v793 = vunpack.c.h.b16 %v712
    %v794 = vunpack.c.l.b16 %v713
    %v795 = vunpack.c.h.b16 %v713
    %v796 = vunpack.c.l.b16 %v714
    %v797 = vunpack.c.h.b16 %v714
    %v798 = vunpack.c.l.b16 %v715
    %v799 = vunpack.c.h.b16 %v715
    %v800 = vunpack.c.l.b16 %v716
    %v801 = vunpack.c.h.b16 %v716
    %v802 = vunpack.c.l.b16 %v717
    %v803 = vunpack.c.h.b16 %v717
    %v804 = vunpack.c.l.b16 %v718
    %v805 = vunpack.c.h.b16 %v718
    %v806 = vunpack.c.l.b16 %v719
    %v807 = vunpack.c.h.b16 %v719
    %v808 = vunpack.c.l.b16 %v720
    %v809 = vunpack.c.h.b16 %v720
    %v810 = vunpack.c.l.b16 %v721
    %v811 = vunpack.c.h.b16 %v721
    %v812 = vunpack.c.l.b16 %v722
    %v813 = vunpack.c.h.b16 %v722
    %v814 = vunpack.c.l.b16 %v723
    %v815 = vunpack.c.h.b16 %v723
    %v816 = vunpack.c.l.b16 %v724
    %v817 = vunpack.c.h.b16 %v724
    %v818 = vunpack.c.l.b16 %v725
    %v819 = vunpack.c.h.b16 %v725
    %v820 = vunpack.c.l.b16 %v726
    %v821 = vunpack.c.h.b16 %v726
    %v822 = vunpack.c.l.b16 %v727
    %v823 = vunpack.c.h.b16 %v727
    %v824 = vpack.c.b16 %v764, %v760
    %v825 = vpack.c.b16 %v765, %v761
    %v826 = vpack.c.b16 %v766, %v762
    %v827 = vpack.c.b16 %v767, %v763
    %v828 = vpack.c.b16 %v772, %v768
    %v829 = vpack.c.b16 %v773, %v769
    %v830 = vpack.c.b16 %v774, %v770
    %v831 = vpack.c.b16 %v775, %v771
    %v832 = vpack.c.b16 %v780, %v776
    %v833 = vpack.c.b16 %v781, %v777
    %v834 = vpack.c.b16 %v782, %v778
    %v835 = vpack.c.b16 %v783, %v779
    %v836 = vpack.c.b16 %v788, %v784
    %v837 = vpack.c.b16 %v789, %v785
    %v838 = vpack.c.b16 %v790, %v786
    %v839 = vpack.c.b16 %v791, %v787
    %v840 = vpack.c.b16 %v796, %v792
    %v841 = vpack.c.b16 %v797, %v793
    %v842 = vpack.c.b16 %v798, %v794
    %v843 = vpack.c.b16 %v799, %v795
    %v844 = vpack.c.b16 %v804, %v800
    %v845 = vpack.c.b16 %v805, %v801
    %v846 = vpack.c.b16 %v806, %v802
    %v847 = vpack.c.b16 %v807, %v803
    %v848 = vpack.c.b16 %v812, %v808
    %v849 = vpack.c.b16 %v813, %v809
    %v850 = vpack.c.b16 %v814, %v810
    %v851 = vpack.c.b16 %v815, %v811
    %v852 = vpack.c.b16 %v820, %v816
    %v853 = vpack.c.b16 %v821, %v817
    %v854 = vpack.c.b16 %v822, %v818
    %v855 = vpack.c.b16 %v823, %v819
    %888 = vmatpush.bf16.msra.mxu0 %v852
    %889 = vmatpush.bf16.msra.mxu0 %v848
    %890 = vmatpush.bf16.msra.mxu0 %v844
    %891 = vmatpush.bf16.msra.mxu0 %v840
    %892 = vmatpush.bf16.msra.mxu0 %v836
    %893 = vmatpush.bf16.msra.mxu0 %v832
    %894 = vmatpush.bf16.msra.mxu0 %v828
    %895 = vmatpush.bf16.msra.mxu0 %v824
    %896 = vmatmul.bf16.gmra.mxu0 %v688
    %v897 = vpop.f32.mrf.mxu0
    %v898 = vadd.f32 0.0, %v897
    %v899 = vpop.f32.mrf.mxu0
    %900 = vdwg.mxu0
    %901 = vmatpush.bf16.msra.mxu0 %v853
    %902 = vmatpush.bf16.msra.mxu0 %v849
    %903 = vmatpush.bf16.msra.mxu0 %v845
    %904 = vmatpush.bf16.msra.mxu0 %v841
    %905 = vmatpush.bf16.msra.mxu0 %v837
    %906 = vmatpush.bf16.msra.mxu0 %v833
    %907 = vmatpush.bf16.msra.mxu0 %v829
    %908 = vmatpush.bf16.msra.mxu0 %v825
    %909 = vmatmul.bf16.gmra.mxu0 %v688
    %v910 = vpop.f32.mrf.mxu0
    %v911 = vadd.f32 0.0, %v910
    %v912 = vpop.f32.mrf.mxu0
    %913 = vdwg.mxu0
    %914 = vmatpush.bf16.msra.mxu0 %v854
    %915 = vmatpush.bf16.msra.mxu0 %v850
    %916 = vmatpush.bf16.msra.mxu0 %v846
    %917 = vmatpush.bf16.msra.mxu0 %v842
    %918 = vmatpush.bf16.msra.mxu0 %v838
    %919 = vmatpush.bf16.msra.mxu0 %v834
    %920 = vmatpush.bf16.msra.mxu0 %v830
    %921 = vmatpush.bf16.msra.mxu0 %v826
    %922 = vmatmul.bf16.gmra.mxu0 %v688
    %v923 = vpop.f32.mrf.mxu0
    %v924 = vadd.f32 0.0, %v923
    %v925 = vpop.f32.mrf.mxu0
    %926 = vdwg.mxu0
    %927 = vmatpush.bf16.msra.mxu0 %v855
    %928 = vmatpush.bf16.msra.mxu0 %v851
    %929 = vmatpush.bf16.msra.mxu0 %v847
    %930 = vmatpush.bf16.msra.mxu0 %v843
    %931 = vmatpush.bf16.msra.mxu0 %v839
    %932 = vmatpush.bf16.msra.mxu0 %v835
    %933 = vmatpush.bf16.msra.mxu0 %v831
    %934 = vmatpush.bf16.msra.mxu0 %v827
    %935 = vmatmul.bf16.gmra.mxu0 %v688
    %v936 = vpop.f32.mrf.mxu0
    %v937 = vadd.f32 0.0, %v936
    %v938 = vpop.f32.mrf.mxu0
    %939 = vdwg.mxu0
    %v940 = vadd.f32 %v692, %v898
    %v941 = vadd.f32 %v693, %v911
    %v942 = vadd.f32 %v694, %v924
    %v943 = vadd.f32 %v695, %v937
    %v944 = vxor.u32 %v940, 2147483648
    %v945 = vmul.f32 %v944, 1.442695
    %v946 = vpow.pop %v945
    %v947 = vadd.f32 %v946, 1.0
    %v948 = vrcp.pop %v947
    %v949 = vmul.f32 %v947, %v948
    %v950 = vsub.f32 1.0, %v949
    %v951 = vmul.f32 %v948, %v950
    %v952 = vadd.f32 %v948, %v951
    %vm953 = vweird.f32 %v947
    %vm954 = vweird.f32 %v948
    %vm955 = vmor %vm953, %vm954
    %v956 = vsel %vm955, %v948, %v952
    %v957 = vand.u32 2147483647, %v947
    %vm958 = vcmp.eq.f32.partialorder %v957, 8.507059e+37
    %v959 = vand.u32 %v947, 2147483648
    %v960 = vor.u32 1.1754944e-38, %v959
    %v961 = vsel %vm958, %v960, %v956
    %v962 = vmul.f32 1.0, %v961
    %v963 = vxor.u32 %v941, 2147483648
    %v964 = vmul.f32 %v963, 1.442695
    %v965 = vpow.pop %v964
    %v966 = vadd.f32 %v965, 1.0
    %v967 = vrcp.pop %v966
    %v968 = vmul.f32 %v966, %v967
    %v969 = vsub.f32 1.0, %v968
    %v970 = vmul.f32 %v967, %v969
    %v971 = vadd.f32 %v967, %v970
    %vm972 = vweird.f32 %v966
    %vm973 = vweird.f32 %v967
    %vm974 = vmor %vm972, %vm973
    %v975 = vsel %vm974, %v967, %v971
    %v976 = vand.u32 2147483647, %v966
    %vm977 = vcmp.eq.f32.partialorder %v976, 8.507059e+37
    %v978 = vand.u32 %v966, 2147483648
    %v979 = vor.u32 1.1754944e-38, %v978
    %v980 = vsel %vm977, %v979, %v975
    %v981 = vmul.f32 1.0, %v980
    %v982 = vtanh.pop %v942
    %v983 = vxor.u32 %v943, 2147483648
    %v984 = vmul.f32 %v983, 1.442695
    %v985 = vpow.pop %v984
    %v986 = vadd.f32 %v985, 1.0
    %v987 = vrcp.pop %v986
    %v988 = vmul.f32 %v986, %v987
    %v989 = vsub.f32 1.0, %v988
    %v990 = vmul.f32 %v987, %v989
    %v991 = vadd.f32 %v987, %v990
    %vm992 = vweird.f32 %v986
    %vm993 = vweird.f32 %v987
    %vm994 = vmor %vm992, %vm993
    %v995 = vsel %vm994, %v987, %v991
    %v996 = vand.u32 2147483647, %v986
    %vm997 = vcmp.eq.f32.partialorder %v996, 8.507059e+37
    %v998 = vand.u32 %v986, 2147483648
    %v999 = vor.u32 1.1754944e-38, %v998
    %v1000 = vsel %vm997, %v999, %v995
    %v1001 = vmul.f32 1.0, %v1000
    %v1002 = vmul.f32 %v981, %v685
    %v1003 = vmul.f32 %v962, %v982
    %v1004 = vadd.f32 %v1002, %v1003
    %v1005 = vtanh.pop %v1004
    %v1006 = vmul.f32 %v1001, %v1005
    %v1007 = vpack.c.bf16 %v1006, %v1006
    %1008 = vst [vmem:[#allocation9 + $0x8] sm:$0xf] %v1007
    %v1009 = vld [vmem:[#allocation6 + $0x30] sm:$0xff]
    %v1010 = vld [vmem:[#allocation6 + $0x38] sm:$0xff]
    %v1011 = vunpack.c.l.bf16 %v1009
    %v1012 = vunpack.c.h.bf16 %v1009
    %v1013 = vunpack.c.l.bf16 %v1010
    %v1014 = vunpack.c.h.bf16 %v1010
    %v1015 = vld [vmem:[#allocation2] sm:$0xff]
    %v1016 = vld [vmem:[#allocation2 + $0x8] sm:$0xff]
    %v1017 = vld [vmem:[#allocation2 + $0x10] sm:$0xff]
    %v1018 = vld [vmem:[#allocation2 + $0x18] sm:$0xff]
    %v1019 = vld [vmem:[#allocation2 + $0x20] sm:$0xff]
    %v1020 = vld [vmem:[#allocation2 + $0x28] sm:$0xff]
    %v1021 = vld [vmem:[#allocation2 + $0x30] sm:$0xff]
    %v1022 = vld [vmem:[#allocation2 + $0x38] sm:$0xff]
    %v1023 = vld [vmem:[#allocation2 + $0x40] sm:$0xff]
    %v1024 = vld [vmem:[#allocation2 + $0x48] sm:$0xff]
    %v1025 = vld [vmem:[#allocation2 + $0x50] sm:$0xff]
    %v1026 = vld [vmem:[#allocation2 + $0x58] sm:$0xff]
    %v1027 = vld [vmem:[#allocation2 + $0x60] sm:$0xff]
    %v1028 = vld [vmem:[#allocation2 + $0x68] sm:$0xff]
    %v1029 = vld [vmem:[#allocation2 + $0x70] sm:$0xff]
    %v1030 = vld [vmem:[#allocation2 + $0x78] sm:$0xff]
    %v1031 = vld [vmem:[#allocation2 + $0x80] sm:$0xff]
    %v1032 = vld [vmem:[#allocation2 + $0x88] sm:$0xff]
    %v1033 = vld [vmem:[#allocation2 + $0x90] sm:$0xff]
    %v1034 = vld [vmem:[#allocation2 + $0x98] sm:$0xff]
    %v1035 = vld [vmem:[#allocation2 + $0xa0] sm:$0xff]
    %v1036 = vld [vmem:[#allocation2 + $0xa8] sm:$0xff]
    %v1037 = vld [vmem:[#allocation2 + $0xb0] sm:$0xff]
    %v1038 = vld [vmem:[#allocation2 + $0xb8] sm:$0xff]
    %v1039 = vld [vmem:[#allocation2 + $0xc0] sm:$0xff]
    %v1040 = vld [vmem:[#allocation2 + $0xc8] sm:$0xff]
    %v1041 = vld [vmem:[#allocation2 + $0xd0] sm:$0xff]
    %v1042 = vld [vmem:[#allocation2 + $0xd8] sm:$0xff]
    %v1043 = vld [vmem:[#allocation2 + $0xe0] sm:$0xff]
    %v1044 = vld [vmem:[#allocation2 + $0xe8] sm:$0xff]
    %v1045 = vld [vmem:[#allocation2 + $0xf0] sm:$0xff]
    %v1046 = vld [vmem:[#allocation2 + $0xf8] sm:$0xff]
    %v1079 = vunpack.c.l.b16 %v1015
    %v1080 = vunpack.c.h.b16 %v1015
    %v1081 = vunpack.c.l.b16 %v1016
    %v1082 = vunpack.c.h.b16 %v1016
    %v1083 = vunpack.c.l.b16 %v1017
    %v1084 = vunpack.c.h.b16 %v1017
    %v1085 = vunpack.c.l.b16 %v1018
    %v1086 = vunpack.c.h.b16 %v1018
    %v1087 = vunpack.c.l.b16 %v1019
    %v1088 = vunpack.c.h.b16 %v1019
    %v1089 = vunpack.c.l.b16 %v1020
    %v1090 = vunpack.c.h.b16 %v1020
    %v1091 = vunpack.c.l.b16 %v1021
    %v1092 = vunpack.c.h.b16 %v1021
    %v1093 = vunpack.c.l.b16 %v1022
    %v1094 = vunpack.c.h.b16 %v1022
    %v1095 = vunpack.c.l.b16 %v1023
    %v1096 = vunpack.c.h.b16 %v1023
    %v1097 = vunpack.c.l.b16 %v1024
    %v1098 = vunpack.c.h.b16 %v1024
    %v1099 = vunpack.c.l.b16 %v1025
    %v1100 = vunpack.c.h.b16 %v1025
    %v1101 = vunpack.c.l.b16 %v1026
    %v1102 = vunpack.c.h.b16 %v1026
    %v1103 = vunpack.c.l.b16 %v1027
    %v1104 = vunpack.c.h.b16 %v1027
    %v1105 = vunpack.c.l.b16 %v1028
    %v1106 = vunpack.c.h.b16 %v1028
    %v1107 = vunpack.c.l.b16 %v1029
    %v1108 = vunpack.c.h.b16 %v1029
    %v1109 = vunpack.c.l.b16 %v1030
    %v1110 = vunpack.c.h.b16 %v1030
    %v1111 = vunpack.c.l.b16 %v1031
    %v1112 = vunpack.c.h.b16 %v1031
    %v1113 = vunpack.c.l.b16 %v1032
    %v1114 = vunpack.c.h.b16 %v1032
    %v1115 = vunpack.c.l.b16 %v1033
    %v1116 = vunpack.c.h.b16 %v1033
    %v1117 = vunpack.c.l.b16 %v1034
    %v1118 = vunpack.c.h.b16 %v1034
    %v1119 = vunpack.c.l.b16 %v1035
    %v1120 = vunpack.c.h.b16 %v1035
    %v1121 = vunpack.c.l.b16 %v1036
    %v1122 = vunpack.c.h.b16 %v1036
    %v1123 = vunpack.c.l.b16 %v1037
    %v1124 = vunpack.c.h.b16 %v1037
    %v1125 = vunpack.c.l.b16 %v1038
    %v1126 = vunpack.c.h.b16 %v1038
    %v1127 = vunpack.c.l.b16 %v1039
    %v1128 = vunpack.c.h.b16 %v1039
    %v1129 = vunpack.c.l.b16 %v1040
    %v1130 = vunpack.c.h.b16 %v1040
    %v1131 = vunpack.c.l.b16 %v1041
    %v1132 = vunpack.c.h.b16 %v1041
    %v1133 = vunpack.c.l.b16 %v1042
    %v1134 = vunpack.c.h.b16 %v1042
    %v1135 = vunpack.c.l.b16 %v1043
    %v1136 = vunpack.c.h.b16 %v1043
    %v1137 = vunpack.c.l.b16 %v1044
    %v1138 = vunpack.c.h.b16 %v1044
    %v1139 = vunpack.c.l.b16 %v1045
    %v1140 = vunpack.c.h.b16 %v1045
    %v1141 = vunpack.c.l.b16 %v1046
    %v1142 = vunpack.c.h.b16 %v1046
    %v1143 = vpack.c.b16 %v1083, %v1079
    %v1144 = vpack.c.b16 %v1084, %v1080
    %v1145 = vpack.c.b16 %v1085, %v1081
    %v1146 = vpack.c.b16 %v1086, %v1082
    %v1147 = vpack.c.b16 %v1091, %v1087
    %v1148 = vpack.c.b16 %v1092, %v1088
    %v1149 = vpack.c.b16 %v1093, %v1089
    %v1150 = vpack.c.b16 %v1094, %v1090
    %v1151 = vpack.c.b16 %v1099, %v1095
    %v1152 = vpack.c.b16 %v1100, %v1096
    %v1153 = vpack.c.b16 %v1101, %v1097
    %v1154 = vpack.c.b16 %v1102, %v1098
    %v1155 = vpack.c.b16 %v1107, %v1103
    %v1156 = vpack.c.b16 %v1108, %v1104
    %v1157 = vpack.c.b16 %v1109, %v1105
    %v1158 = vpack.c.b16 %v1110, %v1106
    %v1159 = vpack.c.b16 %v1115, %v1111
    %v1160 = vpack.c.b16 %v1116, %v1112
    %v1161 = vpack.c.b16 %v1117, %v1113
    %v1162 = vpack.c.b16 %v1118, %v1114
    %v1163 = vpack.c.b16 %v1123, %v1119
    %v1164 = vpack.c.b16 %v1124, %v1120
    %v1165 = vpack.c.b16 %v1125, %v1121
    %v1166 = vpack.c.b16 %v1126, %v1122
    %v1167 = vpack.c.b16 %v1131, %v1127
    %v1168 = vpack.c.b16 %v1132, %v1128
    %v1169 = vpack.c.b16 %v1133, %v1129
    %v1170 = vpack.c.b16 %v1134, %v1130
    %v1171 = vpack.c.b16 %v1139, %v1135
    %v1172 = vpack.c.b16 %v1140, %v1136
    %v1173 = vpack.c.b16 %v1141, %v1137
    %v1174 = vpack.c.b16 %v1142, %v1138
    %1207 = vmatpush.bf16.msra.mxu0 %v1171
    %1208 = vmatpush.bf16.msra.mxu0 %v1167
    %1209 = vmatpush.bf16.msra.mxu0 %v1163
    %1210 = vmatpush.bf16.msra.mxu0 %v1159
    %1211 = vmatpush.bf16.msra.mxu0 %v1155
    %1212 = vmatpush.bf16.msra.mxu0 %v1151
    %1213 = vmatpush.bf16.msra.mxu0 %v1147
    %1214 = vmatpush.bf16.msra.mxu0 %v1143
    %1215 = vmatmul.bf16.gmra.mxu0 %v1007
    %v1216 = vpop.f32.mrf.mxu0
    %v1217 = vadd.f32 0.0, %v1216
    %v1218 = vpop.f32.mrf.mxu0
    %1219 = vdwg.mxu0
    %1220 = vmatpush.bf16.msra.mxu0 %v1172
    %1221 = vmatpush.bf16.msra.mxu0 %v1168
    %1222 = vmatpush.bf16.msra.mxu0 %v1164
    %1223 = vmatpush.bf16.msra.mxu0 %v1160
    %1224 = vmatpush.bf16.msra.mxu0 %v1156
    %1225 = vmatpush.bf16.msra.mxu0 %v1152
    %1226 = vmatpush.bf16.msra.mxu0 %v1148
    %1227 = vmatpush.bf16.msra.mxu0 %v1144
    %1228 = vmatmul.bf16.gmra.mxu0 %v1007
    %v1229 = vpop.f32.mrf.mxu0
    %v1230 = vadd.f32 0.0, %v1229
    %v1231 = vpop.f32.mrf.mxu0
    %1232 = vdwg.mxu0
    %1233 = vmatpush.bf16.msra.mxu0 %v1173
    %1234 = vmatpush.bf16.msra.mxu0 %v1169
    %1235 = vmatpush.bf16.msra.mxu0 %v1165
    %1236 = vmatpush.bf16.msra.mxu0 %v1161
    %1237 = vmatpush.bf16.msra.mxu0 %v1157
    %1238 = vmatpush.bf16.msra.mxu0 %v1153
    %1239 = vmatpush.bf16.msra.mxu0 %v1149
    %1240 = vmatpush.bf16.msra.mxu0 %v1145
    %1241 = vmatmul.bf16.gmra.mxu0 %v1007
    %v1242 = vpop.f32.mrf.mxu0
    %v1243 = vadd.f32 0.0, %v1242
    %v1244 = vpop.f32.mrf.mxu0
    %1245 = vdwg.mxu0
    %1246 = vmatpush.bf16.msra.mxu0 %v1174
    %1247 = vmatpush.bf16.msra.mxu0 %v1170
    %1248 = vmatpush.bf16.msra.mxu0 %v1166
    %1249 = vmatpush.bf16.msra.mxu0 %v1162
    %1250 = vmatpush.bf16.msra.mxu0 %v1158
    %1251 = vmatpush.bf16.msra.mxu0 %v1154
    %1252 = vmatpush.bf16.msra.mxu0 %v1150
    %1253 = vmatpush.bf16.msra.mxu0 %v1146
    %1254 = vmatmul.bf16.gmra.mxu0 %v1007
    %v1255 = vpop.f32.mrf.mxu0
    %v1256 = vadd.f32 0.0, %v1255
    %v1257 = vpop.f32.mrf.mxu0
    %1258 = vdwg.mxu0
    %v1259 = vadd.f32 %v1011, %v1217
    %v1260 = vadd.f32 %v1012, %v1230
    %v1261 = vadd.f32 %v1013, %v1243
    %v1262 = vadd.f32 %v1014, %v1256
    %v1263 = vxor.u32 %v1259, 2147483648
    %v1264 = vmul.f32 %v1263, 1.442695
    %v1265 = vpow.pop %v1264
    %v1266 = vadd.f32 %v1265, 1.0
    %v1267 = vrcp.pop %v1266
    %v1268 = vmul.f32 %v1266, %v1267
    %v1269 = vsub.f32 1.0, %v1268
    %v1270 = vmul.f32 %v1267, %v1269
    %v1271 = vadd.f32 %v1267, %v1270
    %vm1272 = vweird.f32 %v1266
    %vm1273 = vweird.f32 %v1267
    %vm1274 = vmor %vm1272, %vm1273
    %v1275 = vsel %vm1274, %v1267, %v1271
    %v1276 = vand.u32 2147483647, %v1266
    %vm1277 = vcmp.eq.f32.partialorder %v1276, 8.507059e+37
    %v1278 = vand.u32 %v1266, 2147483648
    %v1279 = vor.u32 1.1754944e-38, %v1278
    %v1280 = vsel %vm1277, %v1279, %v1275
    %v1281 = vmul.f32 1.0, %v1280
    %v1282 = vxor.u32 %v1260, 2147483648
    %v1283 = vmul.f32 %v1282, 1.442695
    %v1284 = vpow.pop %v1283
    %v1285 = vadd.f32 %v1284, 1.0
    %v1286 = vrcp.pop %v1285
    %v1287 = vmul.f32 %v1285, %v1286
    %v1288 = vsub.f32 1.0, %v1287
    %v1289 = vmul.f32 %v1286, %v1288
    %v1290 = vadd.f32 %v1286, %v1289
    %vm1291 = vweird.f32 %v1285
    %vm1292 = vweird.f32 %v1286
    %vm1293 = vmor %vm1291, %vm1292
    %v1294 = vsel %vm1293, %v1286, %v1290
    %v1295 = vand.u32 2147483647, %v1285
    %vm1296 = vcmp.eq.f32.partialorder %v1295, 8.507059e+37
    %v1297 = vand.u32 %v1285, 2147483648
    %v1298 = vor.u32 1.1754944e-38, %v1297
    %v1299 = vsel %vm1296, %v1298, %v1294
    %v1300 = vmul.f32 1.0, %v1299
    %v1301 = vtanh.pop %v1261
    %v1302 = vxor.u32 %v1262, 2147483648
    %v1303 = vmul.f32 %v1302, 1.442695
    %v1304 = vpow.pop %v1303
    %v1305 = vadd.f32 %v1304, 1.0
    %v1306 = vrcp.pop %v1305
    %v1307 = vmul.f32 %v1305, %v1306
    %v1308 = vsub.f32 1.0, %v1307
    %v1309 = vmul.f32 %v1306, %v1308
    %v1310 = vadd.f32 %v1306, %v1309
    %vm1311 = vweird.f32 %v1305
    %vm1312 = vweird.f32 %v1306
    %vm1313 = vmor %vm1311, %vm1312
    %v1314 = vsel %vm1313, %v1306, %v1310
    %v1315 = vand.u32 2147483647, %v1305
    %vm1316 = vcmp.eq.f32.partialorder %v1315, 8.507059e+37
    %v1317 = vand.u32 %v1305, 2147483648
    %v1318 = vor.u32 1.1754944e-38, %v1317
    %v1319 = vsel %vm1316, %v1318, %v1314
    %v1320 = vmul.f32 1.0, %v1319
    %v1321 = vmul.f32 %v1300, %v1004
    %v1322 = vmul.f32 %v1281, %v1301
    %v1323 = vadd.f32 %v1321, %v1322
    %v1324 = vtanh.pop %v1323
    %v1325 = vmul.f32 %v1320, %v1324
    %v1326 = vpack.c.bf16 %v1325, %v1325
    %1327 = vst [vmem:[#allocation9 + $0xc] sm:$0xf] %v1326
    %v1328 = vld [vmem:[#allocation6 + $0x40] sm:$0xff]
    %v1329 = vld [vmem:[#allocation6 + $0x48] sm:$0xff]
    %v1330 = vunpack.c.l.bf16 %v1328
    %v1331 = vunpack.c.h.bf16 %v1328
    %v1332 = vunpack.c.l.bf16 %v1329
    %v1333 = vunpack.c.h.bf16 %v1329
    %v1334 = vld [vmem:[#allocation2] sm:$0xff]
    %v1335 = vld [vmem:[#allocation2 + $0x8] sm:$0xff]
    %v1336 = vld [vmem:[#allocation2 + $0x10] sm:$0xff]
    %v1337 = vld [vmem:[#allocation2 + $0x18] sm:$0xff]
    %v1338 = vld [vmem:[#allocation2 + $0x20] sm:$0xff]
    %v1339 = vld [vmem:[#allocation2 + $0x28] sm:$0xff]
    %v1340 = vld [vmem:[#allocation2 + $0x30] sm:$0xff]
    %v1341 = vld [vmem:[#allocation2 + $0x38] sm:$0xff]
    %v1342 = vld [vmem:[#allocation2 + $0x40] sm:$0xff]
    %v1343 = vld [vmem:[#allocation2 + $0x48] sm:$0xff]
    %v1344 = vld [vmem:[#allocation2 + $0x50] sm:$0xff]
    %v1345 = vld [vmem:[#allocation2 + $0x58] sm:$0xff]
    %v1346 = vld [vmem:[#allocation2 + $0x60] sm:$0xff]
    %v1347 = vld [vmem:[#allocation2 + $0x68] sm:$0xff]
    %v1348 = vld [vmem:[#allocation2 + $0x70] sm:$0xff]
    %v1349 = vld [vmem:[#allocation2 + $0x78] sm:$0xff]
    %v1350 = vld [vmem:[#allocation2 + $0x80] sm:$0xff]
    %v1351 = vld [vmem:[#allocation2 + $0x88] sm:$0xff]
    %v1352 = vld [vmem:[#allocation2 + $0x90] sm:$0xff]
    %v1353 = vld [vmem:[#allocation2 + $0x98] sm:$0xff]
    %v1354 = vld [vmem:[#allocation2 + $0xa0] sm:$0xff]
    %v1355 = vld [vmem:[#allocation2 + $0xa8] sm:$0xff]
    %v1356 = vld [vmem:[#allocation2 + $0xb0] sm:$0xff]
    %v1357 = vld [vmem:[#allocation2 + $0xb8] sm:$0xff]
    %v1358 = vld [vmem:[#allocation2 + $0xc0] sm:$0xff]
    %v1359 = vld [vmem:[#allocation2 + $0xc8] sm:$0xff]
    %v1360 = vld [vmem:[#allocation2 + $0xd0] sm:$0xff]
    %v1361 = vld [vmem:[#allocation2 + $0xd8] sm:$0xff]
    %v1362 = vld [vmem:[#allocation2 + $0xe0] sm:$0xff]
    %v1363 = vld [vmem:[#allocation2 + $0xe8] sm:$0xff]
    %v1364 = vld [vmem:[#allocation2 + $0xf0] sm:$0xff]
    %v1365 = vld [vmem:[#allocation2 + $0xf8] sm:$0xff]
    %v1398 = vunpack.c.l.b16 %v1334
    %v1399 = vunpack.c.h.b16 %v1334
    %v1400 = vunpack.c.l.b16 %v1335
    %v1401 = vunpack.c.h.b16 %v1335
    %v1402 = vunpack.c.l.b16 %v1336
    %v1403 = vunpack.c.h.b16 %v1336
    %v1404 = vunpack.c.l.b16 %v1337
    %v1405 = vunpack.c.h.b16 %v1337
    %v1406 = vunpack.c.l.b16 %v1338
    %v1407 = vunpack.c.h.b16 %v1338
    %v1408 = vunpack.c.l.b16 %v1339
    %v1409 = vunpack.c.h.b16 %v1339
    %v1410 = vunpack.c.l.b16 %v1340
    %v1411 = vunpack.c.h.b16 %v1340
    %v1412 = vunpack.c.l.b16 %v1341
    %v1413 = vunpack.c.h.b16 %v1341
    %v1414 = vunpack.c.l.b16 %v1342
    %v1415 = vunpack.c.h.b16 %v1342
    %v1416 = vunpack.c.l.b16 %v1343
    %v1417 = vunpack.c.h.b16 %v1343
    %v1418 = vunpack.c.l.b16 %v1344
    %v1419 = vunpack.c.h.b16 %v1344
    %v1420 = vunpack.c.l.b16 %v1345
    %v1421 = vunpack.c.h.b16 %v1345
    %v1422 = vunpack.c.l.b16 %v1346
    %v1423 = vunpack.c.h.b16 %v1346
    %v1424 = vunpack.c.l.b16 %v1347
    %v1425 = vunpack.c.h.b16 %v1347
    %v1426 = vunpack.c.l.b16 %v1348
    %v1427 = vunpack.c.h.b16 %v1348
    %v1428 = vunpack.c.l.b16 %v1349
    %v1429 = vunpack.c.h.b16 %v1349
    %v1430 = vunpack.c.l.b16 %v1350
    %v1431 = vunpack.c.h.b16 %v1350
    %v1432 = vunpack.c.l.b16 %v1351
    %v1433 = vunpack.c.h.b16 %v1351
    %v1434 = vunpack.c.l.b16 %v1352
    %v1435 = vunpack.c.h.b16 %v1352
    %v1436 = vunpack.c.l.b16 %v1353
    %v1437 = vunpack.c.h.b16 %v1353
    %v1438 = vunpack.c.l.b16 %v1354
    %v1439 = vunpack.c.h.b16 %v1354
    %v1440 = vunpack.c.l.b16 %v1355
    %v1441 = vunpack.c.h.b16 %v1355
    %v1442 = vunpack.c.l.b16 %v1356
    %v1443 = vunpack.c.h.b16 %v1356
    %v1444 = vunpack.c.l.b16 %v1357
    %v1445 = vunpack.c.h.b16 %v1357
    %v1446 = vunpack.c.l.b16 %v1358
    %v1447 = vunpack.c.h.b16 %v1358
    %v1448 = vunpack.c.l.b16 %v1359
    %v1449 = vunpack.c.h.b16 %v1359
    %v1450 = vunpack.c.l.b16 %v1360
    %v1451 = vunpack.c.h.b16 %v1360
    %v1452 = vunpack.c.l.b16 %v1361
    %v1453 = vunpack.c.h.b16 %v1361
    %v1454 = vunpack.c.l.b16 %v1362
    %v1455 = vunpack.c.h.b16 %v1362
    %v1456 = vunpack.c.l.b16 %v1363
    %v1457 = vunpack.c.h.b16 %v1363
    %v1458 = vunpack.c.l.b16 %v1364
    %v1459 = vunpack.c.h.b16 %v1364
    %v1460 = vunpack.c.l.b16 %v1365
    %v1461 = vunpack.c.h.b16 %v1365
    %v1462 = vpack.c.b16 %v1402, %v1398
    %v1463 = vpack.c.b16 %v1403, %v1399
    %v1464 = vpack.c.b16 %v1404, %v1400
    %v1465 = vpack.c.b16 %v1405, %v1401
    %v1466 = vpack.c.b16 %v1410, %v1406
    %v1467 = vpack.c.b16 %v1411, %v1407
    %v1468 = vpack.c.b16 %v1412, %v1408
    %v1469 = vpack.c.b16 %v1413, %v1409
    %v1470 = vpack.c.b16 %v1418, %v1414
    %v1471 = vpack.c.b16 %v1419, %v1415
    %v1472 = vpack.c.b16 %v1420, %v1416
    %v1473 = vpack.c.b16 %v1421, %v1417
    %v1474 = vpack.c.b16 %v1426, %v1422
    %v1475 = vpack.c.b16 %v1427, %v1423
    %v1476 = vpack.c.b16 %v1428, %v1424
    %v1477 = vpack.c.b16 %v1429, %v1425
    %v1478 = vpack.c.b16 %v1434, %v1430
    %v1479 = vpack.c.b16 %v1435, %v1431
    %v1480 = vpack.c.b16 %v1436, %v1432
    %v1481 = vpack.c.b16 %v1437, %v1433
    %v1482 = vpack.c.b16 %v1442, %v1438
    %v1483 = vpack.c.b16 %v1443, %v1439
    %v1484 = vpack.c.b16 %v1444, %v1440
    %v1485 = vpack.c.b16 %v1445, %v1441
    %v1486 = vpack.c.b16 %v1450, %v1446
    %v1487 = vpack.c.b16 %v1451, %v1447
    %v1488 = vpack.c.b16 %v1452, %v1448
    %v1489 = vpack.c.b16 %v1453, %v1449
    %v1490 = vpack.c.b16 %v1458, %v1454
    %v1491 = vpack.c.b16 %v1459, %v1455
    %v1492 = vpack.c.b16 %v1460, %v1456
    %v1493 = vpack.c.b16 %v1461, %v1457
    %1526 = vmatpush.bf16.msra.mxu0 %v1490
    %1527 = vmatpush.bf16.msra.mxu0 %v1486
    %1528 = vmatpush.bf16.msra.mxu0 %v1482
    %1529 = vmatpush.bf16.msra.mxu0 %v1478
    %1530 = vmatpush.bf16.msra.mxu0 %v1474
    %1531 = vmatpush.bf16.msra.mxu0 %v1470
    %1532 = vmatpush.bf16.msra.mxu0 %v1466
    %1533 = vmatpush.bf16.msra.mxu0 %v1462
    %1534 = vmatmul.bf16.gmra.mxu0 %v1326
    %v1535 = vpop.f32.mrf.mxu0
    %v1536 = vadd.f32 0.0, %v1535
    %v1537 = vpop.f32.mrf.mxu0
    %1538 = vdwg.mxu0
    %1539 = vmatpush.bf16.msra.mxu0 %v1491
    %1540 = vmatpush.bf16.msra.mxu0 %v1487
    %1541 = vmatpush.bf16.msra.mxu0 %v1483
    %1542 = vmatpush.bf16.msra.mxu0 %v1479
    %1543 = vmatpush.bf16.msra.mxu0 %v1475
    %1544 = vmatpush.bf16.msra.mxu0 %v1471
    %1545 = vmatpush.bf16.msra.mxu0 %v1467
    %1546 = vmatpush.bf16.msra.mxu0 %v1463
    %1547 = vmatmul.bf16.gmra.mxu0 %v1326
    %v1548 = vpop.f32.mrf.mxu0
    %v1549 = vadd.f32 0.0, %v1548
    %v1550 = vpop.f32.mrf.mxu0
    %1551 = vdwg.mxu0
    %1552 = vmatpush.bf16.msra.mxu0 %v1492
    %1553 = vmatpush.bf16.msra.mxu0 %v1488
    %1554 = vmatpush.bf16.msra.mxu0 %v1484
    %1555 = vmatpush.bf16.msra.mxu0 %v1480
    %1556 = vmatpush.bf16.msra.mxu0 %v1476
    %1557 = vmatpush.bf16.msra.mxu0 %v1472
    %1558 = vmatpush.bf16.msra.mxu0 %v1468
    %1559 = vmatpush.bf16.msra.mxu0 %v1464
    %1560 = vmatmul.bf16.gmra.mxu0 %v1326
    %v1561 = vpop.f32.mrf.mxu0
    %v1562 = vadd.f32 0.0, %v1561
    %v1563 = vpop.f32.mrf.mxu0
    %1564 = vdwg.mxu0
    %1565 = vmatpush.bf16.msra.mxu0 %v1493
    %1566 = vmatpush.bf16.msra.mxu0 %v1489
    %1567 = vmatpush.bf16.msra.mxu0 %v1485
    %1568 = vmatpush.bf16.msra.mxu0 %v1481
    %1569 = vmatpush.bf16.msra.mxu0 %v1477
    %1570 = vmatpush.bf16.msra.mxu0 %v1473
    %1571 = vmatpush.bf16.msra.mxu0 %v1469
    %1572 = vmatpush.bf16.msra.mxu0 %v1465
    %1573 = vmatmul.bf16.gmra.mxu0 %v1326
    %v1574 = vpop.f32.mrf.mxu0
    %v1575 = vadd.f32 0.0, %v1574
    %v1576 = vpop.f32.mrf.mxu0
    %1577 = vdwg.mxu0
    %v1578 = vadd.f32 %v1330, %v1536
    %v1579 = vadd.f32 %v1331, %v1549
    %v1580 = vadd.f32 %v1332, %v1562
    %v1581 = vadd.f32 %v1333, %v1575
    %v1582 = vxor.u32 %v1578, 2147483648
    %v1583 = vmul.f32 %v1582, 1.442695
    %v1584 = vpow.pop %v1583
    %v1585 = vadd.f32 %v1584, 1.0
    %v1586 = vrcp.pop %v1585
    %v1587 = vmul.f32 %v1585, %v1586
    %v1588 = vsub.f32 1.0, %v1587
    %v1589 = vmul.f32 %v1586, %v1588
    %v1590 = vadd.f32 %v1586, %v1589
    %vm1591 = vweird.f32 %v1585
    %vm1592 = vweird.f32 %v1586
    %vm1593 = vmor %vm1591, %vm1592
    %v1594 = vsel %vm1593, %v1586, %v1590
    %v1595 = vand.u32 2147483647, %v1585
    %vm1596 = vcmp.eq.f32.partialorder %v1595, 8.507059e+37
    %v1597 = vand.u32 %v1585, 2147483648
    %v1598 = vor.u32 1.1754944e-38, %v1597
    %v1599 = vsel %vm1596, %v1598, %v1594
    %v1600 = vmul.f32 1.0, %v1599
    %v1601 = vxor.u32 %v1579, 2147483648
    %v1602 = vmul.f32 %v1601, 1.442695
    %v1603 = vpow.pop %v1602
    %v1604 = vadd.f32 %v1603, 1.0
    %v1605 = vrcp.pop %v1604
    %v1606 = vmul.f32 %v1604, %v1605
    %v1607 = vsub.f32 1.0, %v1606
    %v1608 = vmul.f32 %v1605, %v1607
    %v1609 = vadd.f32 %v1605, %v1608
    %vm1610 = vweird.f32 %v1604
    %vm1611 = vweird.f32 %v1605
    %vm1612 = vmor %vm1610, %vm1611
    %v1613 = vsel %vm1612, %v1605, %v1609
    %v1614 = vand.u32 2147483647, %v1604
    %vm1615 = vcmp.eq.f32.partialorder %v1614, 8.507059e+37
    %v1616 = vand.u32 %v1604, 2147483648
    %v1617 = vor.u32 1.1754944e-38, %v1616
    %v1618 = vsel %vm1615, %v1617, %v1613
    %v1619 = vmul.f32 1.0, %v1618
    %v1620 = vtanh.pop %v1580
    %v1621 = vxor.u32 %v1581, 2147483648
    %v1622 = vmul.f32 %v1621, 1.442695
    %v1623 = vpow.pop %v1622
    %v1624 = vadd.f32 %v1623, 1.0
    %v1625 = vrcp.pop %v1624
    %v1626 = vmul.f32 %v1624, %v1625
    %v1627 = vsub.f32 1.0, %v1626
    %v1628 = vmul.f32 %v1625, %v1627
    %v1629 = vadd.f32 %v1625, %v1628
    %vm1630 = vweird.f32 %v1624
    %vm1631 = vweird.f32 %v1625
    %vm1632 = vmor %vm1630, %vm1631
    %v1633 = vsel %vm1632, %v1625, %v1629
    %v1634 = vand.u32 2147483647, %v1624
    %vm1635 = vcmp.eq.f32.partialorder %v1634, 8.507059e+37
    %v1636 = vand.u32 %v1624, 2147483648
    %v1637 = vor.u32 1.1754944e-38, %v1636
    %v1638 = vsel %vm1635, %v1637, %v1633
    %v1639 = vmul.f32 1.0, %v1638
    %v1640 = vmul.f32 %v1619, %v1323
    %v1641 = vmul.f32 %v1600, %v1620
    %v1642 = vadd.f32 %v1640, %v1641
    %v1643 = vtanh.pop %v1642
    %v1644 = vmul.f32 %v1639, %v1643
    %v1645 = vpack.c.bf16 %v1644, %v1644
    %1646 = vst [vmem:[#allocation9 + $0x10] sm:$0xf] %v1645
    %v1647 = vld [vmem:[#allocation6 + $0x50] sm:$0xff]
    %v1648 = vld [vmem:[#allocation6 + $0x58] sm:$0xff]
    %v1649 = vunpack.c.l.bf16 %v1647
    %v1650 = vunpack.c.h.bf16 %v1647
    %v1651 = vunpack.c.l.bf16 %v1648
    %v1652 = vunpack.c.h.bf16 %v1648
    %v1653 = vld [vmem:[#allocation2] sm:$0xff]
    %v1654 = vld [vmem:[#allocation2 + $0x8] sm:$0xff]
    %v1655 = vld [vmem:[#allocation2 + $0x10] sm:$0xff]
    %v1656 = vld [vmem:[#allocation2 + $0x18] sm:$0xff]
    %v1657 = vld [vmem:[#allocation2 + $0x20] sm:$0xff]
    %v1658 = vld [vmem:[#allocation2 + $0x28] sm:$0xff]
    %v1659 = vld [vmem:[#allocation2 + $0x30] sm:$0xff]
    %v1660 = vld [vmem:[#allocation2 + $0x38] sm:$0xff]
    %v1661 = vld [vmem:[#allocation2 + $0x40] sm:$0xff]
    %v1662 = vld [vmem:[#allocation2 + $0x48] sm:$0xff]
    %v1663 = vld [vmem:[#allocation2 + $0x50] sm:$0xff]
    %v1664 = vld [vmem:[#allocation2 + $0x58] sm:$0xff]
    %v1665 = vld [vmem:[#allocation2 + $0x60] sm:$0xff]
    %v1666 = vld [vmem:[#allocation2 + $0x68] sm:$0xff]
    %v1667 = vld [vmem:[#allocation2 + $0x70] sm:$0xff]
    %v1668 = vld [vmem:[#allocation2 + $0x78] sm:$0xff]
    %v1669 = vld [vmem:[#allocation2 + $0x80] sm:$0xff]
    %v1670 = vld [vmem:[#allocation2 + $0x88] sm:$0xff]
    %v1671 = vld [vmem:[#allocation2 + $0x90] sm:$0xff]
    %v1672 = vld [vmem:[#allocation2 + $0x98] sm:$0xff]
    %v1673 = vld [vmem:[#allocation2 + $0xa0] sm:$0xff]
    %v1674 = vld [vmem:[#allocation2 + $0xa8] sm:$0xff]
    %v1675 = vld [vmem:[#allocation2 + $0xb0] sm:$0xff]
    %v1676 = vld [vmem:[#allocation2 + $0xb8] sm:$0xff]
    %v1677 = vld [vmem:[#allocation2 + $0xc0] sm:$0xff]
    %v1678 = vld [vmem:[#allocation2 + $0xc8] sm:$0xff]
    %v1679 = vld [vmem:[#allocation2 + $0xd0] sm:$0xff]
    %v1680 = vld [vmem:[#allocation2 + $0xd8] sm:$0xff]
    %v1681 = vld [vmem:[#allocation2 + $0xe0] sm:$0xff]
    %v1682 = vld [vmem:[#allocation2 + $0xe8] sm:$0xff]
    %v1683 = vld [vmem:[#allocation2 + $0xf0] sm:$0xff]
    %v1684 = vld [vmem:[#allocation2 + $0xf8] sm:$0xff]
    %v1717 = vunpack.c.l.b16 %v1653
    %v1718 = vunpack.c.h.b16 %v1653
    %v1719 = vunpack.c.l.b16 %v1654
    %v1720 = vunpack.c.h.b16 %v1654
    %v1721 = vunpack.c.l.b16 %v1655
    %v1722 = vunpack.c.h.b16 %v1655
    %v1723 = vunpack.c.l.b16 %v1656
    %v1724 = vunpack.c.h.b16 %v1656
    %v1725 = vunpack.c.l.b16 %v1657
    %v1726 = vunpack.c.h.b16 %v1657
    %v1727 = vunpack.c.l.b16 %v1658
    %v1728 = vunpack.c.h.b16 %v1658
    %v1729 = vunpack.c.l.b16 %v1659
    %v1730 = vunpack.c.h.b16 %v1659
    %v1731 = vunpack.c.l.b16 %v1660
    %v1732 = vunpack.c.h.b16 %v1660
    %v1733 = vunpack.c.l.b16 %v1661
    %v1734 = vunpack.c.h.b16 %v1661
    %v1735 = vunpack.c.l.b16 %v1662
    %v1736 = vunpack.c.h.b16 %v1662
    %v1737 = vunpack.c.l.b16 %v1663
    %v1738 = vunpack.c.h.b16 %v1663
    %v1739 = vunpack.c.l.b16 %v1664
    %v1740 = vunpack.c.h.b16 %v1664
    %v1741 = vunpack.c.l.b16 %v1665
    %v1742 = vunpack.c.h.b16 %v1665
    %v1743 = vunpack.c.l.b16 %v1666
    %v1744 = vunpack.c.h.b16 %v1666
    %v1745 = vunpack.c.l.b16 %v1667
    %v1746 = vunpack.c.h.b16 %v1667
    %v1747 = vunpack.c.l.b16 %v1668
    %v1748 = vunpack.c.h.b16 %v1668
    %v1749 = vunpack.c.l.b16 %v1669
    %v1750 = vunpack.c.h.b16 %v1669
    %v1751 = vunpack.c.l.b16 %v1670
    %v1752 = vunpack.c.h.b16 %v1670
    %v1753 = vunpack.c.l.b16 %v1671
    %v1754 = vunpack.c.h.b16 %v1671
    %v1755 = vunpack.c.l.b16 %v1672
    %v1756 = vunpack.c.h.b16 %v1672
    %v1757 = vunpack.c.l.b16 %v1673
    %v1758 = vunpack.c.h.b16 %v1673
    %v1759 = vunpack.c.l.b16 %v1674
    %v1760 = vunpack.c.h.b16 %v1674
    %v1761 = vunpack.c.l.b16 %v1675
    %v1762 = vunpack.c.h.b16 %v1675
    %v1763 = vunpack.c.l.b16 %v1676
    %v1764 = vunpack.c.h.b16 %v1676
    %v1765 = vunpack.c.l.b16 %v1677
    %v1766 = vunpack.c.h.b16 %v1677
    %v1767 = vunpack.c.l.b16 %v1678
    %v1768 = vunpack.c.h.b16 %v1678
    %v1769 = vunpack.c.l.b16 %v1679
    %v1770 = vunpack.c.h.b16 %v1679
    %v1771 = vunpack.c.l.b16 %v1680
    %v1772 = vunpack.c.h.b16 %v1680
    %v1773 = vunpack.c.l.b16 %v1681
    %v1774 = vunpack.c.h.b16 %v1681
    %v1775 = vunpack.c.l.b16 %v1682
    %v1776 = vunpack.c.h.b16 %v1682
    %v1777 = vunpack.c.l.b16 %v1683
    %v1778 = vunpack.c.h.b16 %v1683
    %v1779 = vunpack.c.l.b16 %v1684
    %v1780 = vunpack.c.h.b16 %v1684
    %v1781 = vpack.c.b16 %v1721, %v1717
    %v1782 = vpack.c.b16 %v1722, %v1718
    %v1783 = vpack.c.b16 %v1723, %v1719
    %v1784 = vpack.c.b16 %v1724, %v1720
    %v1785 = vpack.c.b16 %v1729, %v1725
    %v1786 = vpack.c.b16 %v1730, %v1726
    %v1787 = vpack.c.b16 %v1731, %v1727
    %v1788 = vpack.c.b16 %v1732, %v1728
    %v1789 = vpack.c.b16 %v1737, %v1733
    %v1790 = vpack.c.b16 %v1738, %v1734
    %v1791 = vpack.c.b16 %v1739, %v1735
    %v1792 = vpack.c.b16 %v1740, %v1736
    %v1793 = vpack.c.b16 %v1745, %v1741
    %v1794 = vpack.c.b16 %v1746, %v1742
    %v1795 = vpack.c.b16 %v1747, %v1743
    %v1796 = vpack.c.b16 %v1748, %v1744
    %v1797 = vpack.c.b16 %v1753, %v1749
    %v1798 = vpack.c.b16 %v1754, %v1750
    %v1799 = vpack.c.b16 %v1755, %v1751
    %v1800 = vpack.c.b16 %v1756, %v1752
    %v1801 = vpack.c.b16 %v1761, %v1757
    %v1802 = vpack.c.b16 %v1762, %v1758
    %v1803 = vpack.c.b16 %v1763, %v1759
    %v1804 = vpack.c.b16 %v1764, %v1760
    %v1805 = vpack.c.b16 %v1769, %v1765
    %v1806 = vpack.c.b16 %v1770, %v1766
    %v1807 = vpack.c.b16 %v1771, %v1767
    %v1808 = vpack.c.b16 %v1772, %v1768
    %v1809 = vpack.c.b16 %v1777, %v1773
    %v1810 = vpack.c.b16 %v1778, %v1774
    %v1811 = vpack.c.b16 %v1779, %v1775
    %v1812 = vpack.c.b16 %v1780, %v1776
    %1845 = vmatpush.bf16.msra.mxu0 %v1809
    %1846 = vmatpush.bf16.msra.mxu0 %v1805
    %1847 = vmatpush.bf16.msra.mxu0 %v1801
    %1848 = vmatpush.bf16.msra.mxu0 %v1797
    %1849 = vmatpush.bf16.msra.mxu0 %v1793
    %1850 = vmatpush.bf16.msra.mxu0 %v1789
    %1851 = vmatpush.bf16.msra.mxu0 %v1785
    %1852 = vmatpush.bf16.msra.mxu0 %v1781
    %1853 = vmatmul.bf16.gmra.mxu0 %v1645
    %v1854 = vpop.f32.mrf.mxu0
    %v1855 = vadd.f32 0.0, %v1854
    %v1856 = vpop.f32.mrf.mxu0
    %1857 = vdwg.mxu0
    %1858 = vmatpush.bf16.msra.mxu0 %v1810
    %1859 = vmatpush.bf16.msra.mxu0 %v1806
    %1860 = vmatpush.bf16.msra.mxu0 %v1802
    %1861 = vmatpush.bf16.msra.mxu0 %v1798
    %1862 = vmatpush.bf16.msra.mxu0 %v1794
    %1863 = vmatpush.bf16.msra.mxu0 %v1790
    %1864 = vmatpush.bf16.msra.mxu0 %v1786
    %1865 = vmatpush.bf16.msra.mxu0 %v1782
    %1866 = vmatmul.bf16.gmra.mxu0 %v1645
    %v1867 = vpop.f32.mrf.mxu0
    %v1868 = vadd.f32 0.0, %v1867
    %v1869 = vpop.f32.mrf.mxu0
    %1870 = vdwg.mxu0
    %1871 = vmatpush.bf16.msra.mxu0 %v1811
    %1872 = vmatpush.bf16.msra.mxu0 %v1807
    %1873 = vmatpush.bf16.msra.mxu0 %v1803
    %1874 = vmatpush.bf16.msra.mxu0 %v1799
    %1875 = vmatpush.bf16.msra.mxu0 %v1795
    %1876 = vmatpush.bf16.msra.mxu0 %v1791
    %1877 = vmatpush.bf16.msra.mxu0 %v1787
    %1878 = vmatpush.bf16.msra.mxu0 %v1783
    %1879 = vmatmul.bf16.gmra.mxu0 %v1645
    %v1880 = vpop.f32.mrf.mxu0
    %v1881 = vadd.f32 0.0, %v1880
    %v1882 = vpop.f32.mrf.mxu0
    %1883 = vdwg.mxu0
    %1884 = vmatpush.bf16.msra.mxu0 %v1812
    %1885 = vmatpush.bf16.msra.mxu0 %v1808
    %1886 = vmatpush.bf16.msra.mxu0 %v1804
    %1887 = vmatpush.bf16.msra.mxu0 %v1800
    %1888 = vmatpush.bf16.msra.mxu0 %v1796
    %1889 = vmatpush.bf16.msra.mxu0 %v1792
    %1890 = vmatpush.bf16.msra.mxu0 %v1788
    %1891 = vmatpush.bf16.msra.mxu0 %v1784
    %1892 = vmatmul.bf16.gmra.mxu0 %v1645
    %v1893 = vpop.f32.mrf.mxu0
    %v1894 = vadd.f32 0.0, %v1893
    %v1895 = vpop.f32.mrf.mxu0
    %1896 = vdwg.mxu0
    %v1897 = vadd.f32 %v1649, %v1855
    %v1898 = vadd.f32 %v1650, %v1868
    %v1899 = vadd.f32 %v1651, %v1881
    %v1900 = vadd.f32 %v1652, %v1894
    %v1901 = vxor.u32 %v1897, 2147483648
    %v1902 = vmul.f32 %v1901, 1.442695
    %v1903 = vpow.pop %v1902
    %v1904 = vadd.f32 %v1903, 1.0
    %v1905 = vrcp.pop %v1904
    %v1906 = vmul.f32 %v1904, %v1905
    %v1907 = vsub.f32 1.0, %v1906
    %v1908 = vmul.f32 %v1905, %v1907
    %v1909 = vadd.f32 %v1905, %v1908
    %vm1910 = vweird.f32 %v1904
    %vm1911 = vweird.f32 %v1905
    %vm1912 = vmor %vm1910, %vm1911
    %v1913 = vsel %vm1912, %v1905, %v1909
    %v1914 = vand.u32 2147483647, %v1904
    %vm1915 = vcmp.eq.f32.partialorder %v1914, 8.507059e+37
    %v1916 = vand.u32 %v1904, 2147483648
    %v1917 = vor.u32 1.1754944e-38, %v1916
    %v1918 = vsel %vm1915, %v1917, %v1913
    %v1919 = vmul.f32 1.0, %v1918
    %v1920 = vxor.u32 %v1898, 2147483648
    %v1921 = vmul.f32 %v1920, 1.442695
    %v1922 = vpow.pop %v1921
    %v1923 = vadd.f32 %v1922, 1.0
    %v1924 = vrcp.pop %v1923
    %v1925 = vmul.f32 %v1923, %v1924
    %v1926 = vsub.f32 1.0, %v1925
    %v1927 = vmul.f32 %v1924, %v1926
    %v1928 = vadd.f32 %v1924, %v1927
    %vm1929 = vweird.f32 %v1923
    %vm1930 = vweird.f32 %v1924
    %vm1931 = vmor %vm1929, %vm1930
    %v1932 = vsel %vm1931, %v1924, %v1928
    %v1933 = vand.u32 2147483647, %v1923
    %vm1934 = vcmp.eq.f32.partialorder %v1933, 8.507059e+37
    %v1935 = vand.u32 %v1923, 2147483648
    %v1936 = vor.u32 1.1754944e-38, %v1935
    %v1937 = vsel %vm1934, %v1936, %v1932
    %v1938 = vmul.f32 1.0, %v1937
    %v1939 = vtanh.pop %v1899
    %v1940 = vxor.u32 %v1900, 2147483648
    %v1941 = vmul.f32 %v1940, 1.442695
    %v1942 = vpow.pop %v1941
    %v1943 = vadd.f32 %v1942, 1.0
    %v1944 = vrcp.pop %v1943
    %v1945 = vmul.f32 %v1943, %v1944
    %v1946 = vsub.f32 1.0, %v1945
    %v1947 = vmul.f32 %v1944, %v1946
    %v1948 = vadd.f32 %v1944, %v1947
    %vm1949 = vweird.f32 %v1943
    %vm1950 = vweird.f32 %v1944
    %vm1951 = vmor %vm1949, %vm1950
    %v1952 = vsel %vm1951, %v1944, %v1948
    %v1953 = vand.u32 2147483647, %v1943
    %vm1954 = vcmp.eq.f32.partialorder %v1953, 8.507059e+37
    %v1955 = vand.u32 %v1943, 2147483648
    %v1956 = vor.u32 1.1754944e-38, %v1955
    %v1957 = vsel %vm1954, %v1956, %v1952
    %v1958 = vmul.f32 1.0, %v1957
    %v1959 = vmul.f32 %v1938, %v1642
    %v1960 = vmul.f32 %v1919, %v1939
    %v1961 = vadd.f32 %v1959, %v1960
    %v1962 = vtanh.pop %v1961
    %v1963 = vmul.f32 %v1958, %v1962
    %v1964 = vpack.c.bf16 %v1963, %v1963
    %1965 = vst [vmem:[#allocation9 + $0x14] sm:$0xf] %v1964
    %v1966 = vld [vmem:[#allocation6 + $0x60] sm:$0xff]
    %v1967 = vld [vmem:[#allocation6 + $0x68] sm:$0xff]
    %v1968 = vunpack.c.l.bf16 %v1966
    %v1969 = vunpack.c.h.bf16 %v1966
    %v1970 = vunpack.c.l.bf16 %v1967
    %v1971 = vunpack.c.h.bf16 %v1967
    %v1972 = vld [vmem:[#allocation2] sm:$0xff]
    %v1973 = vld [vmem:[#allocation2 + $0x8] sm:$0xff]
    %v1974 = vld [vmem:[#allocation2 + $0x10] sm:$0xff]
    %v1975 = vld [vmem:[#allocation2 + $0x18] sm:$0xff]
    %v1976 = vld [vmem:[#allocation2 + $0x20] sm:$0xff]
    %v1977 = vld [vmem:[#allocation2 + $0x28] sm:$0xff]
    %v1978 = vld [vmem:[#allocation2 + $0x30] sm:$0xff]
    %v1979 = vld [vmem:[#allocation2 + $0x38] sm:$0xff]
    %v1980 = vld [vmem:[#allocation2 + $0x40] sm:$0xff]
    %v1981 = vld [vmem:[#allocation2 + $0x48] sm:$0xff]
    %v1982 = vld [vmem:[#allocation2 + $0x50] sm:$0xff]
    %v1983 = vld [vmem:[#allocation2 + $0x58] sm:$0xff]
    %v1984 = vld [vmem:[#allocation2 + $0x60] sm:$0xff]
    %v1985 = vld [vmem:[#allocation2 + $0x68] sm:$0xff]
    %v1986 = vld [vmem:[#allocation2 + $0x70] sm:$0xff]
    %v1987 = vld [vmem:[#allocation2 + $0x78] sm:$0xff]
    %v1988 = vld [vmem:[#allocation2 + $0x80] sm:$0xff]
    %v1989 = vld [vmem:[#allocation2 + $0x88] sm:$0xff]
    %v1990 = vld [vmem:[#allocation2 + $0x90] sm:$0xff]
    %v1991 = vld [vmem:[#allocation2 + $0x98] sm:$0xff]
    %v1992 = vld [vmem:[#allocation2 + $0xa0] sm:$0xff]
    %v1993 = vld [vmem:[#allocation2 + $0xa8] sm:$0xff]
    %v1994 = vld [vmem:[#allocation2 + $0xb0] sm:$0xff]
    %v1995 = vld [vmem:[#allocation2 + $0xb8] sm:$0xff]
    %v1996 = vld [vmem:[#allocation2 + $0xc0] sm:$0xff]
    %v1997 = vld [vmem:[#allocation2 + $0xc8] sm:$0xff]
    %v1998 = vld [vmem:[#allocation2 + $0xd0] sm:$0xff]
    %v1999 = vld [vmem:[#allocation2 + $0xd8] sm:$0xff]
    %v2000 = vld [vmem:[#allocation2 + $0xe0] sm:$0xff]
    %v2001 = vld [vmem:[#allocation2 + $0xe8] sm:$0xff]
    %v2002 = vld [vmem:[#allocation2 + $0xf0] sm:$0xff]
    %v2003 = vld [vmem:[#allocation2 + $0xf8] sm:$0xff]
    %v2036 = vunpack.c.l.b16 %v1972
    %v2037 = vunpack.c.h.b16 %v1972
    %v2038 = vunpack.c.l.b16 %v1973
    %v2039 = vunpack.c.h.b16 %v1973
    %v2040 = vunpack.c.l.b16 %v1974
    %v2041 = vunpack.c.h.b16 %v1974
    %v2042 = vunpack.c.l.b16 %v1975
    %v2043 = vunpack.c.h.b16 %v1975
    %v2044 = vunpack.c.l.b16 %v1976
    %v2045 = vunpack.c.h.b16 %v1976
    %v2046 = vunpack.c.l.b16 %v1977
    %v2047 = vunpack.c.h.b16 %v1977
    %v2048 = vunpack.c.l.b16 %v1978
    %v2049 = vunpack.c.h.b16 %v1978
    %v2050 = vunpack.c.l.b16 %v1979
    %v2051 = vunpack.c.h.b16 %v1979
    %v2052 = vunpack.c.l.b16 %v1980
    %v2053 = vunpack.c.h.b16 %v1980
    %v2054 = vunpack.c.l.b16 %v1981
    %v2055 = vunpack.c.h.b16 %v1981
    %v2056 = vunpack.c.l.b16 %v1982
    %v2057 = vunpack.c.h.b16 %v1982
    %v2058 = vunpack.c.l.b16 %v1983
    %v2059 = vunpack.c.h.b16 %v1983
    %v2060 = vunpack.c.l.b16 %v1984
    %v2061 = vunpack.c.h.b16 %v1984
    %v2062 = vunpack.c.l.b16 %v1985
    %v2063 = vunpack.c.h.b16 %v1985
    %v2064 = vunpack.c.l.b16 %v1986
    %v2065 = vunpack.c.h.b16 %v1986
    %v2066 = vunpack.c.l.b16 %v1987
    %v2067 = vunpack.c.h.b16 %v1987
    %v2068 = vunpack.c.l.b16 %v1988
    %v2069 = vunpack.c.h.b16 %v1988
    %v2070 = vunpack.c.l.b16 %v1989
    %v2071 = vunpack.c.h.b16 %v1989
    %v2072 = vunpack.c.l.b16 %v1990
    %v2073 = vunpack.c.h.b16 %v1990
    %v2074 = vunpack.c.l.b16 %v1991
    %v2075 = vunpack.c.h.b16 %v1991
    %v2076 = vunpack.c.l.b16 %v1992
    %v2077 = vunpack.c.h.b16 %v1992
    %v2078 = vunpack.c.l.b16 %v1993
    %v2079 = vunpack.c.h.b16 %v1993
    %v2080 = vunpack.c.l.b16 %v1994
    %v2081 = vunpack.c.h.b16 %v1994
    %v2082 = vunpack.c.l.b16 %v1995
    %v2083 = vunpack.c.h.b16 %v1995
    %v2084 = vunpack.c.l.b16 %v1996
    %v2085 = vunpack.c.h.b16 %v1996
    %v2086 = vunpack.c.l.b16 %v1997
    %v2087 = vunpack.c.h.b16 %v1997
    %v2088 = vunpack.c.l.b16 %v1998
    %v2089 = vunpack.c.h.b16 %v1998
    %v2090 = vunpack.c.l.b16 %v1999
    %v2091 = vunpack.c.h.b16 %v1999
    %v2092 = vunpack.c.l.b16 %v2000
    %v2093 = vunpack.c.h.b16 %v2000
    %v2094 = vunpack.c.l.b16 %v2001
    %v2095 = vunpack.c.h.b16 %v2001
    %v2096 = vunpack.c.l.b16 %v2002
    %v2097 = vunpack.c.h.b16 %v2002
    %v2098 = vunpack.c.l.b16 %v2003
    %v2099 = vunpack.c.h.b16 %v2003
    %v2100 = vpack.c.b16 %v2040, %v2036
    %v2101 = vpack.c.b16 %v2041, %v2037
    %v2102 = vpack.c.b16 %v2042, %v2038
    %v2103 = vpack.c.b16 %v2043, %v2039
    %v2104 = vpack.c.b16 %v2048, %v2044
    %v2105 = vpack.c.b16 %v2049, %v2045
    %v2106 = vpack.c.b16 %v2050, %v2046
    %v2107 = vpack.c.b16 %v2051, %v2047
    %v2108 = vpack.c.b16 %v2056, %v2052
    %v2109 = vpack.c.b16 %v2057, %v2053
    %v2110 = vpack.c.b16 %v2058, %v2054
    %v2111 = vpack.c.b16 %v2059, %v2055
    %v2112 = vpack.c.b16 %v2064, %v2060
    %v2113 = vpack.c.b16 %v2065, %v2061
    %v2114 = vpack.c.b16 %v2066, %v2062
    %v2115 = vpack.c.b16 %v2067, %v2063
    %v2116 = vpack.c.b16 %v2072, %v2068
    %v2117 = vpack.c.b16 %v2073, %v2069
    %v2118 = vpack.c.b16 %v2074, %v2070
    %v2119 = vpack.c.b16 %v2075, %v2071
    %v2120 = vpack.c.b16 %v2080, %v2076
    %v2121 = vpack.c.b16 %v2081, %v2077
    %v2122 = vpack.c.b16 %v2082, %v2078
    %v2123 = vpack.c.b16 %v2083, %v2079
    %v2124 = vpack.c.b16 %v2088, %v2084
    %v2125 = vpack.c.b16 %v2089, %v2085
    %v2126 = vpack.c.b16 %v2090, %v2086
    %v2127 = vpack.c.b16 %v2091, %v2087
    %v2128 = vpack.c.b16 %v2096, %v2092
    %v2129 = vpack.c.b16 %v2097, %v2093
    %v2130 = vpack.c.b16 %v2098, %v2094
    %v2131 = vpack.c.b16 %v2099, %v2095
    %2164 = vmatpush.bf16.msra.mxu0 %v2128
    %2165 = vmatpush.bf16.msra.mxu0 %v2124
    %2166 = vmatpush.bf16.msra.mxu0 %v2120
    %2167 = vmatpush.bf16.msra.mxu0 %v2116
    %2168 = vmatpush.bf16.msra.mxu0 %v2112
    %2169 = vmatpush.bf16.msra.mxu0 %v2108
    %2170 = vmatpush.bf16.msra.mxu0 %v2104
    %2171 = vmatpush.bf16.msra.mxu0 %v2100
    %2172 = vmatmul.bf16.gmra.mxu0 %v1964
    %v2173 = vpop.f32.mrf.mxu0
    %v2174 = vadd.f32 0.0, %v2173
    %v2175 = vpop.f32.mrf.mxu0
    %2176 = vdwg.mxu0
    %2177 = vmatpush.bf16.msra.mxu0 %v2129
    %2178 = vmatpush.bf16.msra.mxu0 %v2125
    %2179 = vmatpush.bf16.msra.mxu0 %v2121
    %2180 = vmatpush.bf16.msra.mxu0 %v2117
    %2181 = vmatpush.bf16.msra.mxu0 %v2113
    %2182 = vmatpush.bf16.msra.mxu0 %v2109
    %2183 = vmatpush.bf16.msra.mxu0 %v2105
    %2184 = vmatpush.bf16.msra.mxu0 %v2101
    %2185 = vmatmul.bf16.gmra.mxu0 %v1964
    %v2186 = vpop.f32.mrf.mxu0
    %v2187 = vadd.f32 0.0, %v2186
    %v2188 = vpop.f32.mrf.mxu0
    %2189 = vdwg.mxu0
    %2190 = vmatpush.bf16.msra.mxu0 %v2130
    %2191 = vmatpush.bf16.msra.mxu0 %v2126
    %2192 = vmatpush.bf16.msra.mxu0 %v2122
    %2193 = vmatpush.bf16.msra.mxu0 %v2118
    %2194 = vmatpush.bf16.msra.mxu0 %v2114
    %2195 = vmatpush.bf16.msra.mxu0 %v2110
    %2196 = vmatpush.bf16.msra.mxu0 %v2106
    %2197 = vmatpush.bf16.msra.mxu0 %v2102
    %2198 = vmatmul.bf16.gmra.mxu0 %v1964
    %v2199 = vpop.f32.mrf.mxu0
    %v2200 = vadd.f32 0.0, %v2199
    %v2201 = vpop.f32.mrf.mxu0
    %2202 = vdwg.mxu0
    %2203 = vmatpush.bf16.msra.mxu0 %v2131
    %2204 = vmatpush.bf16.msra.mxu0 %v2127
    %2205 = vmatpush.bf16.msra.mxu0 %v2123
    %2206 = vmatpush.bf16.msra.mxu0 %v2119
    %2207 = vmatpush.bf16.msra.mxu0 %v2115
    %2208 = vmatpush.bf16.msra.mxu0 %v2111
    %2209 = vmatpush.bf16.msra.mxu0 %v2107
    %2210 = vmatpush.bf16.msra.mxu0 %v2103
    %2211 = vmatmul.bf16.gmra.mxu0 %v1964
    %v2212 = vpop.f32.mrf.mxu0
    %v2213 = vadd.f32 0.0, %v2212
    %v2214 = vpop.f32.mrf.mxu0
    %2215 = vdwg.mxu0
    %v2216 = vadd.f32 %v1968, %v2174
    %v2217 = vadd.f32 %v1969, %v2187
    %v2218 = vadd.f32 %v1970, %v2200
    %v2219 = vadd.f32 %v1971, %v2213
    %v2220 = vxor.u32 %v2216, 2147483648
    %v2221 = vmul.f32 %v2220, 1.442695
    %v2222 = vpow.pop %v2221
    %v2223 = vadd.f32 %v2222, 1.0
    %v2224 = vrcp.pop %v2223
    %v2225 = vmul.f32 %v2223, %v2224
    %v2226 = vsub.f32 1.0, %v2225
    %v2227 = vmul.f32 %v2224, %v2226
    %v2228 = vadd.f32 %v2224, %v2227
    %vm2229 = vweird.f32 %v2223
    %vm2230 = vweird.f32 %v2224
    %vm2231 = vmor %vm2229, %vm2230
    %v2232 = vsel %vm2231, %v2224, %v2228
    %v2233 = vand.u32 2147483647, %v2223
    %vm2234 = vcmp.eq.f32.partialorder %v2233, 8.507059e+37
    %v2235 = vand.u32 %v2223, 2147483648
    %v2236 = vor.u32 1.1754944e-38, %v2235
    %v2237 = vsel %vm2234, %v2236, %v2232
    %v2238 = vmul.f32 1.0, %v2237
    %v2239 = vxor.u32 %v2217, 2147483648
    %v2240 = vmul.f32 %v2239, 1.442695
    %v2241 = vpow.pop %v2240
    %v2242 = vadd.f32 %v2241, 1.0
    %v2243 = vrcp.pop %v2242
    %v2244 = vmul.f32 %v2242, %v2243
    %v2245 = vsub.f32 1.0, %v2244
    %v2246 = vmul.f32 %v2243, %v2245
    %v2247 = vadd.f32 %v2243, %v2246
    %vm2248 = vweird.f32 %v2242
    %vm2249 = vweird.f32 %v2243
    %vm2250 = vmor %vm2248, %vm2249
    %v2251 = vsel %vm2250, %v2243, %v2247
    %v2252 = vand.u32 2147483647, %v2242
    %vm2253 = vcmp.eq.f32.partialorder %v2252, 8.507059e+37
    %v2254 = vand.u32 %v2242, 2147483648
    %v2255 = vor.u32 1.1754944e-38, %v2254
    %v2256 = vsel %vm2253, %v2255, %v2251
    %v2257 = vmul.f32 1.0, %v2256
    %v2258 = vtanh.pop %v2218
    %v2259 = vxor.u32 %v2219, 2147483648
    %v2260 = vmul.f32 %v2259, 1.442695
    %v2261 = vpow.pop %v2260
    %v2262 = vadd.f32 %v2261, 1.0
    %v2263 = vrcp.pop %v2262
    %v2264 = vmul.f32 %v2262, %v2263
    %v2265 = vsub.f32 1.0, %v2264
    %v2266 = vmul.f32 %v2263, %v2265
    %v2267 = vadd.f32 %v2263, %v2266
    %vm2268 = vweird.f32 %v2262
    %vm2269 = vweird.f32 %v2263
    %vm2270 = vmor %vm2268, %vm2269
    %v2271 = vsel %vm2270, %v2263, %v2267
    %v2272 = vand.u32 2147483647, %v2262
    %vm2273 = vcmp.eq.f32.partialorder %v2272, 8.507059e+37
    %v2274 = vand.u32 %v2262, 2147483648
    %v2275 = vor.u32 1.1754944e-38, %v2274
    %v2276 = vsel %vm2273, %v2275, %v2271
    %v2277 = vmul.f32 1.0, %v2276
    %v2278 = vmul.f32 %v2257, %v1961
    %v2279 = vmul.f32 %v2238, %v2258
    %v2280 = vadd.f32 %v2278, %v2279
    %v2281 = vtanh.pop %v2280
    %v2282 = vmul.f32 %v2277, %v2281
    %v2283 = vpack.c.bf16 %v2282, %v2282
    %2284 = vst [vmem:[#allocation9 + $0x18] sm:$0xf] %v2283
    %v2285 = vld [vmem:[#allocation6 + $0x70] sm:$0xff]
    %v2286 = vld [vmem:[#allocation6 + $0x78] sm:$0xff]
    %v2287 = vunpack.c.l.bf16 %v2285
    %v2288 = vunpack.c.h.bf16 %v2285
    %v2289 = vunpack.c.l.bf16 %v2286
    %v2290 = vunpack.c.h.bf16 %v2286
    %v2291 = vld [vmem:[#allocation2] sm:$0xff]
    %v2292 = vld [vmem:[#allocation2 + $0x8] sm:$0xff]
    %v2293 = vld [vmem:[#allocation2 + $0x10] sm:$0xff]
    %v2294 = vld [vmem:[#allocation2 + $0x18] sm:$0xff]
    %v2295 = vld [vmem:[#allocation2 + $0x20] sm:$0xff]
    %v2296 = vld [vmem:[#allocation2 + $0x28] sm:$0xff]
    %v2297 = vld [vmem:[#allocation2 + $0x30] sm:$0xff]
    %v2298 = vld [vmem:[#allocation2 + $0x38] sm:$0xff]
    %v2299 = vld [vmem:[#allocation2 + $0x40] sm:$0xff]
    %v2300 = vld [vmem:[#allocation2 + $0x48] sm:$0xff]
    %v2301 = vld [vmem:[#allocation2 + $0x50] sm:$0xff]
    %v2302 = vld [vmem:[#allocation2 + $0x58] sm:$0xff]
    %v2303 = vld [vmem:[#allocation2 + $0x60] sm:$0xff]
    %v2304 = vld [vmem:[#allocation2 + $0x68] sm:$0xff]
    %v2305 = vld [vmem:[#allocation2 + $0x70] sm:$0xff]
    %v2306 = vld [vmem:[#allocation2 + $0x78] sm:$0xff]
    %v2307 = vld [vmem:[#allocation2 + $0x80] sm:$0xff]
    %v2308 = vld [vmem:[#allocation2 + $0x88] sm:$0xff]
    %v2309 = vld [vmem:[#allocation2 + $0x90] sm:$0xff]
    %v2310 = vld [vmem:[#allocation2 + $0x98] sm:$0xff]
    %v2311 = vld [vmem:[#allocation2 + $0xa0] sm:$0xff]
    %v2312 = vld [vmem:[#allocation2 + $0xa8] sm:$0xff]
    %v2313 = vld [vmem:[#allocation2 + $0xb0] sm:$0xff]
    %v2314 = vld [vmem:[#allocation2 + $0xb8] sm:$0xff]
    %v2315 = vld [vmem:[#allocation2 + $0xc0] sm:$0xff]
    %v2316 = vld [vmem:[#allocation2 + $0xc8] sm:$0xff]
    %v2317 = vld [vmem:[#allocation2 + $0xd0] sm:$0xff]
    %v2318 = vld [vmem:[#allocation2 + $0xd8] sm:$0xff]
    %v2319 = vld [vmem:[#allocation2 + $0xe0] sm:$0xff]
    %v2320 = vld [vmem:[#allocation2 + $0xe8] sm:$0xff]
    %v2321 = vld [vmem:[#allocation2 + $0xf0] sm:$0xff]
    %v2322 = vld [vmem:[#allocation2 + $0xf8] sm:$0xff]
    %v2355 = vunpack.c.l.b16 %v2291
    %v2356 = vunpack.c.h.b16 %v2291
    %v2357 = vunpack.c.l.b16 %v2292
    %v2358 = vunpack.c.h.b16 %v2292
    %v2359 = vunpack.c.l.b16 %v2293
    %v2360 = vunpack.c.h.b16 %v2293
    %v2361 = vunpack.c.l.b16 %v2294
    %v2362 = vunpack.c.h.b16 %v2294
    %v2363 = vunpack.c.l.b16 %v2295
    %v2364 = vunpack.c.h.b16 %v2295
    %v2365 = vunpack.c.l.b16 %v2296
    %v2366 = vunpack.c.h.b16 %v2296
    %v2367 = vunpack.c.l.b16 %v2297
    %v2368 = vunpack.c.h.b16 %v2297
    %v2369 = vunpack.c.l.b16 %v2298
    %v2370 = vunpack.c.h.b16 %v2298
    %v2371 = vunpack.c.l.b16 %v2299
    %v2372 = vunpack.c.h.b16 %v2299
    %v2373 = vunpack.c.l.b16 %v2300
    %v2374 = vunpack.c.h.b16 %v2300
    %v2375 = vunpack.c.l.b16 %v2301
    %v2376 = vunpack.c.h.b16 %v2301
    %v2377 = vunpack.c.l.b16 %v2302
    %v2378 = vunpack.c.h.b16 %v2302
    %v2379 = vunpack.c.l.b16 %v2303
    %v2380 = vunpack.c.h.b16 %v2303
    %v2381 = vunpack.c.l.b16 %v2304
    %v2382 = vunpack.c.h.b16 %v2304
    %v2383 = vunpack.c.l.b16 %v2305
    %v2384 = vunpack.c.h.b16 %v2305
    %v2385 = vunpack.c.l.b16 %v2306
    %v2386 = vunpack.c.h.b16 %v2306
    %v2387 = vunpack.c.l.b16 %v2307
    %v2388 = vunpack.c.h.b16 %v2307
    %v2389 = vunpack.c.l.b16 %v2308
    %v2390 = vunpack.c.h.b16 %v2308
    %v2391 = vunpack.c.l.b16 %v2309
    %v2392 = vunpack.c.h.b16 %v2309
    %v2393 = vunpack.c.l.b16 %v2310
    %v2394 = vunpack.c.h.b16 %v2310
    %v2395 = vunpack.c.l.b16 %v2311
    %v2396 = vunpack.c.h.b16 %v2311
    %v2397 = vunpack.c.l.b16 %v2312
    %v2398 = vunpack.c.h.b16 %v2312
    %v2399 = vunpack.c.l.b16 %v2313
    %v2400 = vunpack.c.h.b16 %v2313
    %v2401 = vunpack.c.l.b16 %v2314
    %v2402 = vunpack.c.h.b16 %v2314
    %v2403 = vunpack.c.l.b16 %v2315
    %v2404 = vunpack.c.h.b16 %v2315
    %v2405 = vunpack.c.l.b16 %v2316
    %v2406 = vunpack.c.h.b16 %v2316
    %v2407 = vunpack.c.l.b16 %v2317
    %v2408 = vunpack.c.h.b16 %v2317
    %v2409 = vunpack.c.l.b16 %v2318
    %v2410 = vunpack.c.h.b16 %v2318
    %v2411 = vunpack.c.l.b16 %v2319
    %v2412 = vunpack.c.h.b16 %v2319
    %v2413 = vunpack.c.l.b16 %v2320
    %v2414 = vunpack.c.h.b16 %v2320
    %v2415 = vunpack.c.l.b16 %v2321
    %v2416 = vunpack.c.h.b16 %v2321
    %v2417 = vunpack.c.l.b16 %v2322
    %v2418 = vunpack.c.h.b16 %v2322
    %v2419 = vpack.c.b16 %v2359, %v2355
    %v2420 = vpack.c.b16 %v2360, %v2356
    %v2421 = vpack.c.b16 %v2361, %v2357
    %v2422 = vpack.c.b16 %v2362, %v2358
    %v2423 = vpack.c.b16 %v2367, %v2363
    %v2424 = vpack.c.b16 %v2368, %v2364
    %v2425 = vpack.c.b16 %v2369, %v2365
    %v2426 = vpack.c.b16 %v2370, %v2366
    %v2427 = vpack.c.b16 %v2375, %v2371
    %v2428 = vpack.c.b16 %v2376, %v2372
    %v2429 = vpack.c.b16 %v2377, %v2373
    %v2430 = vpack.c.b16 %v2378, %v2374
    %v2431 = vpack.c.b16 %v2383, %v2379
    %v2432 = vpack.c.b16 %v2384, %v2380
    %v2433 = vpack.c.b16 %v2385, %v2381
    %v2434 = vpack.c.b16 %v2386, %v2382
    %v2435 = vpack.c.b16 %v2391, %v2387
    %v2436 = vpack.c.b16 %v2392, %v2388
    %v2437 = vpack.c.b16 %v2393, %v2389
    %v2438 = vpack.c.b16 %v2394, %v2390
    %v2439 = vpack.c.b16 %v2399, %v2395
    %v2440 = vpack.c.b16 %v2400, %v2396
    %v2441 = vpack.c.b16 %v2401, %v2397
    %v2442 = vpack.c.b16 %v2402, %v2398
    %v2443 = vpack.c.b16 %v2407, %v2403
    %v2444 = vpack.c.b16 %v2408, %v2404
    %v2445 = vpack.c.b16 %v2409, %v2405
    %v2446 = vpack.c.b16 %v2410, %v2406
    %v2447 = vpack.c.b16 %v2415, %v2411
    %v2448 = vpack.c.b16 %v2416, %v2412
    %v2449 = vpack.c.b16 %v2417, %v2413
    %v2450 = vpack.c.b16 %v2418, %v2414
    %2483 = vmatpush.bf16.msra.mxu0 %v2447
    %2484 = vmatpush.bf16.msra.mxu0 %v2443
    %2485 = vmatpush.bf16.msra.mxu0 %v2439
    %2486 = vmatpush.bf16.msra.mxu0 %v2435
    %2487 = vmatpush.bf16.msra.mxu0 %v2431
    %2488 = vmatpush.bf16.msra.mxu0 %v2427
    %2489 = vmatpush.bf16.msra.mxu0 %v2423
    %2490 = vmatpush.bf16.msra.mxu0 %v2419
    %2491 = vmatmul.bf16.gmra.mxu0 %v2283
    %v2492 = vpop.f32.mrf.mxu0
    %v2493 = vadd.f32 0.0, %v2492
    %v2494 = vpop.f32.mrf.mxu0
    %2495 = vdwg.mxu0
    %2496 = vmatpush.bf16.msra.mxu0 %v2448
    %2497 = vmatpush.bf16.msra.mxu0 %v2444
    %2498 = vmatpush.bf16.msra.mxu0 %v2440
    %2499 = vmatpush.bf16.msra.mxu0 %v2436
    %2500 = vmatpush.bf16.msra.mxu0 %v2432
    %2501 = vmatpush.bf16.msra.mxu0 %v2428
    %2502 = vmatpush.bf16.msra.mxu0 %v2424
    %2503 = vmatpush.bf16.msra.mxu0 %v2420
    %2504 = vmatmul.bf16.gmra.mxu0 %v2283
    %v2505 = vpop.f32.mrf.mxu0
    %v2506 = vadd.f32 0.0, %v2505
    %v2507 = vpop.f32.mrf.mxu0
    %2508 = vdwg.mxu0
    %2509 = vmatpush.bf16.msra.mxu0 %v2449
    %2510 = vmatpush.bf16.msra.mxu0 %v2445
    %2511 = vmatpush.bf16.msra.mxu0 %v2441
    %2512 = vmatpush.bf16.msra.mxu0 %v2437
    %2513 = vmatpush.bf16.msra.mxu0 %v2433
    %2514 = vmatpush.bf16.msra.mxu0 %v2429
    %2515 = vmatpush.bf16.msra.mxu0 %v2425
    %2516 = vmatpush.bf16.msra.mxu0 %v2421
    %2517 = vmatmul.bf16.gmra.mxu0 %v2283
    %v2518 = vpop.f32.mrf.mxu0
    %v2519 = vadd.f32 0.0, %v2518
    %v2520 = vpop.f32.mrf.mxu0
    %2521 = vdwg.mxu0
    %2522 = vmatpush.bf16.msra.mxu0 %v2450
    %2523 = vmatpush.bf16.msra.mxu0 %v2446
    %2524 = vmatpush.bf16.msra.mxu0 %v2442
    %2525 = vmatpush.bf16.msra.mxu0 %v2438
    %2526 = vmatpush.bf16.msra.mxu0 %v2434
    %2527 = vmatpush.bf16.msra.mxu0 %v2430
    %2528 = vmatpush.bf16.msra.mxu0 %v2426
    %2529 = vmatpush.bf16.msra.mxu0 %v2422
    %2530 = vmatmul.bf16.gmra.mxu0 %v2283
    %v2531 = vpop.f32.mrf.mxu0
    %v2532 = vadd.f32 0.0, %v2531
    %v2533 = vpop.f32.mrf.mxu0
    %2534 = vdwg.mxu0
    %v2535 = vadd.f32 %v2287, %v2493
    %v2536 = vadd.f32 %v2288, %v2506
    %v2537 = vadd.f32 %v2289, %v2519
    %v2538 = vadd.f32 %v2290, %v2532
    %v2539 = vxor.u32 %v2535, 2147483648
    %v2540 = vmul.f32 %v2539, 1.442695
    %v2541 = vpow.pop %v2540
    %v2542 = vadd.f32 %v2541, 1.0
    %v2543 = vrcp.pop %v2542
    %v2544 = vmul.f32 %v2542, %v2543
    %v2545 = vsub.f32 1.0, %v2544
    %v2546 = vmul.f32 %v2543, %v2545
    %v2547 = vadd.f32 %v2543, %v2546
    %vm2548 = vweird.f32 %v2542
    %vm2549 = vweird.f32 %v2543
    %vm2550 = vmor %vm2548, %vm2549
    %v2551 = vsel %vm2550, %v2543, %v2547
    %v2552 = vand.u32 2147483647, %v2542
    %vm2553 = vcmp.eq.f32.partialorder %v2552, 8.507059e+37
    %v2554 = vand.u32 %v2542, 2147483648
    %v2555 = vor.u32 1.1754944e-38, %v2554
    %v2556 = vsel %vm2553, %v2555, %v2551
    %v2557 = vmul.f32 1.0, %v2556
    %v2558 = vxor.u32 %v2536, 2147483648
    %v2559 = vmul.f32 %v2558, 1.442695
    %v2560 = vpow.pop %v2559
    %v2561 = vadd.f32 %v2560, 1.0
    %v2562 = vrcp.pop %v2561
    %v2563 = vmul.f32 %v2561, %v2562
    %v2564 = vsub.f32 1.0, %v2563
    %v2565 = vmul.f32 %v2562, %v2564
    %v2566 = vadd.f32 %v2562, %v2565
    %vm2567 = vweird.f32 %v2561
    %vm2568 = vweird.f32 %v2562
    %vm2569 = vmor %vm2567, %vm2568
    %v2570 = vsel %vm2569, %v2562, %v2566
    %v2571 = vand.u32 2147483647, %v2561
    %vm2572 = vcmp.eq.f32.partialorder %v2571, 8.507059e+37
    %v2573 = vand.u32 %v2561, 2147483648
    %v2574 = vor.u32 1.1754944e-38, %v2573
    %v2575 = vsel %vm2572, %v2574, %v2570
    %v2576 = vmul.f32 1.0, %v2575
    %v2577 = vtanh.pop %v2537
    %v2578 = vxor.u32 %v2538, 2147483648
    %v2579 = vmul.f32 %v2578, 1.442695
    %v2580 = vpow.pop %v2579
    %v2581 = vadd.f32 %v2580, 1.0
    %v2582 = vrcp.pop %v2581
    %v2583 = vmul.f32 %v2581, %v2582
    %v2584 = vsub.f32 1.0, %v2583
    %v2585 = vmul.f32 %v2582, %v2584
    %v2586 = vadd.f32 %v2582, %v2585
    %vm2587 = vweird.f32 %v2581
    %vm2588 = vweird.f32 %v2582
    %vm2589 = vmor %vm2587, %vm2588
    %v2590 = vsel %vm2589, %v2582, %v2586
    %v2591 = vand.u32 2147483647, %v2581
    %vm2592 = vcmp.eq.f32.partialorder %v2591, 8.507059e+37
    %v2593 = vand.u32 %v2581, 2147483648
    %v2594 = vor.u32 1.1754944e-38, %v2593
    %v2595 = vsel %vm2592, %v2594, %v2590
    %v2596 = vmul.f32 1.0, %v2595
    %v2597 = vmul.f32 %v2576, %v2280
    %v2598 = vmul.f32 %v2557, %v2577
    %v2599 = vadd.f32 %v2597, %v2598
    %v2600 = vtanh.pop %v2599
    %v2601 = vmul.f32 %v2596, %v2600
    %v2602 = vpack.c.bf16 %v2601, %v2601
    %2603 = vst [vmem:[#allocation9 + $0x1c] sm:$0xf] %v2602
    %v2604 = vld [vmem:[#allocation6 + $0x80] sm:$0xff]
    %v2605 = vld [vmem:[#allocation6 + $0x88] sm:$0xff]
    %v2606 = vunpack.c.l.bf16 %v2604
    %v2607 = vunpack.c.h.bf16 %v2604
    %v2608 = vunpack.c.l.bf16 %v2605
    %v2609 = vunpack.c.h.bf16 %v2605
    %v2610 = vld [vmem:[#allocation2] sm:$0xff]
    %v2611 = vld [vmem:[#allocation2 + $0x8] sm:$0xff]
    %v2612 = vld [vmem:[#allocation2 + $0x10] sm:$0xff]
    %v2613 = vld [vmem:[#allocation2 + $0x18] sm:$0xff]
    %v2614 = vld [vmem:[#allocation2 + $0x20] sm:$0xff]
    %v2615 = vld [vmem:[#allocation2 + $0x28] sm:$0xff]
    %v2616 = vld [vmem:[#allocation2 + $0x30] sm:$0xff]
    %v2617 = vld [vmem:[#allocation2 + $0x38] sm:$0xff]
    %v2618 = vld [vmem:[#allocation2 + $0x40] sm:$0xff]
    %v2619 = vld [vmem:[#allocation2 + $0x48] sm:$0xff]
    %v2620 = vld [vmem:[#allocation2 + $0x50] sm:$0xff]
    %v2621 = vld [vmem:[#allocation2 + $0x58] sm:$0xff]
    %v2622 = vld [vmem:[#allocation2 + $0x60] sm:$0xff]
    %v2623 = vld [vmem:[#allocation2 + $0x68] sm:$0xff]
    %v2624 = vld [vmem:[#allocation2 + $0x70] sm:$0xff]
    %v2625 = vld [vmem:[#allocation2 + $0x78] sm:$0xff]
    %v2626 = vld [vmem:[#allocation2 + $0x80] sm:$0xff]
    %v2627 = vld [vmem:[#allocation2 + $0x88] sm:$0xff]
    %v2628 = vld [vmem:[#allocation2 + $0x90] sm:$0xff]
    %v2629 = vld [vmem:[#allocation2 + $0x98] sm:$0xff]
    %v2630 = vld [vmem:[#allocation2 + $0xa0] sm:$0xff]
    %v2631 = vld [vmem:[#allocation2 + $0xa8] sm:$0xff]
    %v2632 = vld [vmem:[#allocation2 + $0xb0] sm:$0xff]
    %v2633 = vld [vmem:[#allocation2 + $0xb8] sm:$0xff]
    %v2634 = vld [vmem:[#allocation2 + $0xc0] sm:$0xff]
    %v2635 = vld [vmem:[#allocation2 + $0xc8] sm:$0xff]
    %v2636 = vld [vmem:[#allocation2 + $0xd0] sm:$0xff]
    %v2637 = vld [vmem:[#allocation2 + $0xd8] sm:$0xff]
    %v2638 = vld [vmem:[#allocation2 + $0xe0] sm:$0xff]
    %v2639 = vld [vmem:[#allocation2 + $0xe8] sm:$0xff]
    %v2640 = vld [vmem:[#allocation2 + $0xf0] sm:$0xff]
    %v2641 = vld [vmem:[#allocation2 + $0xf8] sm:$0xff]
    %v2674 = vunpack.c.l.b16 %v2610
    %v2675 = vunpack.c.h.b16 %v2610
    %v2676 = vunpack.c.l.b16 %v2611
    %v2677 = vunpack.c.h.b16 %v2611
    %v2678 = vunpack.c.l.b16 %v2612
    %v2679 = vunpack.c.h.b16 %v2612
    %v2680 = vunpack.c.l.b16 %v2613
    %v2681 = vunpack.c.h.b16 %v2613
    %v2682 = vunpack.c.l.b16 %v2614
    %v2683 = vunpack.c.h.b16 %v2614
    %v2684 = vunpack.c.l.b16 %v2615
    %v2685 = vunpack.c.h.b16 %v2615
    %v2686 = vunpack.c.l.b16 %v2616
    %v2687 = vunpack.c.h.b16 %v2616
    %v2688 = vunpack.c.l.b16 %v2617
    %v2689 = vunpack.c.h.b16 %v2617
    %v2690 = vunpack.c.l.b16 %v2618
    %v2691 = vunpack.c.h.b16 %v2618
    %v2692 = vunpack.c.l.b16 %v2619
    %v2693 = vunpack.c.h.b16 %v2619
    %v2694 = vunpack.c.l.b16 %v2620
    %v2695 = vunpack.c.h.b16 %v2620
    %v2696 = vunpack.c.l.b16 %v2621
    %v2697 = vunpack.c.h.b16 %v2621
    %v2698 = vunpack.c.l.b16 %v2622
    %v2699 = vunpack.c.h.b16 %v2622
    %v2700 = vunpack.c.l.b16 %v2623
    %v2701 = vunpack.c.h.b16 %v2623
    %v2702 = vunpack.c.l.b16 %v2624
    %v2703 = vunpack.c.h.b16 %v2624
    %v2704 = vunpack.c.l.b16 %v2625
    %v2705 = vunpack.c.h.b16 %v2625
    %v2706 = vunpack.c.l.b16 %v2626
    %v2707 = vunpack.c.h.b16 %v2626
    %v2708 = vunpack.c.l.b16 %v2627
    %v2709 = vunpack.c.h.b16 %v2627
    %v2710 = vunpack.c.l.b16 %v2628
    %v2711 = vunpack.c.h.b16 %v2628
    %v2712 = vunpack.c.l.b16 %v2629
    %v2713 = vunpack.c.h.b16 %v2629
    %v2714 = vunpack.c.l.b16 %v2630
    %v2715 = vunpack.c.h.b16 %v2630
    %v2716 = vunpack.c.l.b16 %v2631
    %v2717 = vunpack.c.h.b16 %v2631
    %v2718 = vunpack.c.l.b16 %v2632
    %v2719 = vunpack.c.h.b16 %v2632
    %v2720 = vunpack.c.l.b16 %v2633
    %v2721 = vunpack.c.h.b16 %v2633
    %v2722 = vunpack.c.l.b16 %v2634
    %v2723 = vunpack.c.h.b16 %v2634
    %v2724 = vunpack.c.l.b16 %v2635
    %v2725 = vunpack.c.h.b16 %v2635
    %v2726 = vunpack.c.l.b16 %v2636
    %v2727 = vunpack.c.h.b16 %v2636
    %v2728 = vunpack.c.l.b16 %v2637
    %v2729 = vunpack.c.h.b16 %v2637
    %v2730 = vunpack.c.l.b16 %v2638
    %v2731 = vunpack.c.h.b16 %v2638
    %v2732 = vunpack.c.l.b16 %v2639
    %v2733 = vunpack.c.h.b16 %v2639
    %v2734 = vunpack.c.l.b16 %v2640
    %v2735 = vunpack.c.h.b16 %v2640
    %v2736 = vunpack.c.l.b16 %v2641
    %v2737 = vunpack.c.h.b16 %v2641
    %v2738 = vpack.c.b16 %v2678, %v2674
    %v2739 = vpack.c.b16 %v2679, %v2675
    %v2740 = vpack.c.b16 %v2680, %v2676
    %v2741 = vpack.c.b16 %v2681, %v2677
    %v2742 = vpack.c.b16 %v2686, %v2682
    %v2743 = vpack.c.b16 %v2687, %v2683
    %v2744 = vpack.c.b16 %v2688, %v2684
    %v2745 = vpack.c.b16 %v2689, %v2685
    %v2746 = vpack.c.b16 %v2694, %v2690
    %v2747 = vpack.c.b16 %v2695, %v2691
    %v2748 = vpack.c.b16 %v2696, %v2692
    %v2749 = vpack.c.b16 %v2697, %v2693
    %v2750 = vpack.c.b16 %v2702, %v2698
    %v2751 = vpack.c.b16 %v2703, %v2699
    %v2752 = vpack.c.b16 %v2704, %v2700
    %v2753 = vpack.c.b16 %v2705, %v2701
    %v2754 = vpack.c.b16 %v2710, %v2706
    %v2755 = vpack.c.b16 %v2711, %v2707
    %v2756 = vpack.c.b16 %v2712, %v2708
    %v2757 = vpack.c.b16 %v2713, %v2709
    %v2758 = vpack.c.b16 %v2718, %v2714
    %v2759 = vpack.c.b16 %v2719, %v2715
    %v2760 = vpack.c.b16 %v2720, %v2716
    %v2761 = vpack.c.b16 %v2721, %v2717
    %v2762 = vpack.c.b16 %v2726, %v2722
    %v2763 = vpack.c.b16 %v2727, %v2723
    %v2764 = vpack.c.b16 %v2728, %v2724
    %v2765 = vpack.c.b16 %v2729, %v2725
    %v2766 = vpack.c.b16 %v2734, %v2730
    %v2767 = vpack.c.b16 %v2735, %v2731
    %v2768 = vpack.c.b16 %v2736, %v2732
    %v2769 = vpack.c.b16 %v2737, %v2733
    %2802 = vmatpush.bf16.msra.mxu0 %v2766
    %2803 = vmatpush.bf16.msra.mxu0 %v2762
    %2804 = vmatpush.bf16.msra.mxu0 %v2758
    %2805 = vmatpush.bf16.msra.mxu0 %v2754
    %2806 = vmatpush.bf16.msra.mxu0 %v2750
    %2807 = vmatpush.bf16.msra.mxu0 %v2746
    %2808 = vmatpush.bf16.msra.mxu0 %v2742
    %2809 = vmatpush.bf16.msra.mxu0 %v2738
    %2810 = vmatmul.bf16.gmra.mxu0 %v2602
    %v2811 = vpop.f32.mrf.mxu0
    %v2812 = vadd.f32 0.0, %v2811
    %v2813 = vpop.f32.mrf.mxu0
    %2814 = vdwg.mxu0
    %2815 = vmatpush.bf16.msra.mxu0 %v2767
    %2816 = vmatpush.bf16.msra.mxu0 %v2763
    %2817 = vmatpush.bf16.msra.mxu0 %v2759
    %2818 = vmatpush.bf16.msra.mxu0 %v2755
    %2819 = vmatpush.bf16.msra.mxu0 %v2751
    %2820 = vmatpush.bf16.msra.mxu0 %v2747
    %2821 = vmatpush.bf16.msra.mxu0 %v2743
    %2822 = vmatpush.bf16.msra.mxu0 %v2739
    %2823 = vmatmul.bf16.gmra.mxu0 %v2602
    %v2824 = vpop.f32.mrf.mxu0
    %v2825 = vadd.f32 0.0, %v2824
    %v2826 = vpop.f32.mrf.mxu0
    %2827 = vdwg.mxu0
    %2828 = vmatpush.bf16.msra.mxu0 %v2768
    %2829 = vmatpush.bf16.msra.mxu0 %v2764
    %2830 = vmatpush.bf16.msra.mxu0 %v2760
    %2831 = vmatpush.bf16.msra.mxu0 %v2756
    %2832 = vmatpush.bf16.msra.mxu0 %v2752
    %2833 = vmatpush.bf16.msra.mxu0 %v2748
    %2834 = vmatpush.bf16.msra.mxu0 %v2744
    %2835 = vmatpush.bf16.msra.mxu0 %v2740
    %2836 = vmatmul.bf16.gmra.mxu0 %v2602
    %v2837 = vpop.f32.mrf.mxu0
    %v2838 = vadd.f32 0.0, %v2837
    %v2839 = vpop.f32.mrf.mxu0
    %2840 = vdwg.mxu0
    %2841 = vmatpush.bf16.msra.mxu0 %v2769
    %2842 = vmatpush.bf16.msra.mxu0 %v2765
    %2843 = vmatpush.bf16.msra.mxu0 %v2761
    %2844 = vmatpush.bf16.msra.mxu0 %v2757
    %2845 = vmatpush.bf16.msra.mxu0 %v2753
    %2846 = vmatpush.bf16.msra.mxu0 %v2749
    %2847 = vmatpush.bf16.msra.mxu0 %v2745
    %2848 = vmatpush.bf16.msra.mxu0 %v2741
    %2849 = vmatmul.bf16.gmra.mxu0 %v2602
    %v2850 = vpop.f32.mrf.mxu0
    %v2851 = vadd.f32 0.0, %v2850
    %v2852 = vpop.f32.mrf.mxu0
    %2853 = vdwg.mxu0
    %v2854 = vadd.f32 %v2606, %v2812
    %v2855 = vadd.f32 %v2607, %v2825
    %v2856 = vadd.f32 %v2608, %v2838
    %v2857 = vadd.f32 %v2609, %v2851
    %v2858 = vxor.u32 %v2854, 2147483648
    %v2859 = vmul.f32 %v2858, 1.442695
    %v2860 = vpow.pop %v2859
    %v2861 = vadd.f32 %v2860, 1.0
    %v2862 = vrcp.pop %v2861
    %v2863 = vmul.f32 %v2861, %v2862
    %v2864 = vsub.f32 1.0, %v2863
    %v2865 = vmul.f32 %v2862, %v2864
    %v2866 = vadd.f32 %v2862, %v2865
    %vm2867 = vweird.f32 %v2861
    %vm2868 = vweird.f32 %v2862
    %vm2869 = vmor %vm2867, %vm2868
    %v2870 = vsel %vm2869, %v2862, %v2866
    %v2871 = vand.u32 2147483647, %v2861
    %vm2872 = vcmp.eq.f32.partialorder %v2871, 8.507059e+37
    %v2873 = vand.u32 %v2861, 2147483648
    %v2874 = vor.u32 1.1754944e-38, %v2873
    %v2875 = vsel %vm2872, %v2874, %v2870
    %v2876 = vmul.f32 1.0, %v2875
    %v2877 = vxor.u32 %v2855, 2147483648
    %v2878 = vmul.f32 %v2877, 1.442695
    %v2879 = vpow.pop %v2878
    %v2880 = vadd.f32 %v2879, 1.0
    %v2881 = vrcp.pop %v2880
    %v2882 = vmul.f32 %v2880, %v2881
    %v2883 = vsub.f32 1.0, %v2882
    %v2884 = vmul.f32 %v2881, %v2883
    %v2885 = vadd.f32 %v2881, %v2884
    %vm2886 = vweird.f32 %v2880
    %vm2887 = vweird.f32 %v2881
    %vm2888 = vmor %vm2886, %vm2887
    %v2889 = vsel %vm2888, %v2881, %v2885
    %v2890 = vand.u32 2147483647, %v2880
    %vm2891 = vcmp.eq.f32.partialorder %v2890, 8.507059e+37
    %v2892 = vand.u32 %v2880, 2147483648
    %v2893 = vor.u32 1.1754944e-38, %v2892
    %v2894 = vsel %vm2891, %v2893, %v2889
    %v2895 = vmul.f32 1.0, %v2894
    %v2896 = vtanh.pop %v2856
    %v2897 = vxor.u32 %v2857, 2147483648
    %v2898 = vmul.f32 %v2897, 1.442695
    %v2899 = vpow.pop %v2898
    %v2900 = vadd.f32 %v2899, 1.0
    %v2901 = vrcp.pop %v2900
    %v2902 = vmul.f32 %v2900, %v2901
    %v2903 = vsub.f32 1.0, %v2902
    %v2904 = vmul.f32 %v2901, %v2903
    %v2905 = vadd.f32 %v2901, %v2904
    %vm2906 = vweird.f32 %v2900
    %vm2907 = vweird.f32 %v2901
    %vm2908 = vmor %vm2906, %vm2907
    %v2909 = vsel %vm2908, %v2901, %v2905
    %v2910 = vand.u32 2147483647, %v2900
    %vm2911 = vcmp.eq.f32.partialorder %v2910, 8.507059e+37
    %v2912 = vand.u32 %v2900, 2147483648
    %v2913 = vor.u32 1.1754944e-38, %v2912
    %v2914 = vsel %vm2911, %v2913, %v2909
    %v2915 = vmul.f32 1.0, %v2914
    %v2916 = vmul.f32 %v2895, %v2599
    %v2917 = vmul.f32 %v2876, %v2896
    %v2918 = vadd.f32 %v2916, %v2917
    %v2919 = vtanh.pop %v2918
    %v2920 = vmul.f32 %v2915, %v2919
    %v2921 = vpack.c.bf16 %v2920, %v2920
    %2922 = vst [vmem:[#allocation9 + $0x20] sm:$0xf] %v2921
    %v2923 = vld [vmem:[#allocation6 + $0x90] sm:$0xff]
    %v2924 = vld [vmem:[#allocation6 + $0x98] sm:$0xff]
    %v2925 = vunpack.c.l.bf16 %v2923
    %v2926 = vunpack.c.h.bf16 %v2923
    %v2927 = vunpack.c.l.bf16 %v2924
    %v2928 = vunpack.c.h.bf16 %v2924
    %v2929 = vld [vmem:[#allocation2] sm:$0xff]
    %v2930 = vld [vmem:[#allocation2 + $0x8] sm:$0xff]
    %v2931 = vld [vmem:[#allocation2 + $0x10] sm:$0xff]
    %v2932 = vld [vmem:[#allocation2 + $0x18] sm:$0xff]
    %v2933 = vld [vmem:[#allocation2 + $0x20] sm:$0xff]
    %v2934 = vld [vmem:[#allocation2 + $0x28] sm:$0xff]
    %v2935 = vld [vmem:[#allocation2 + $0x30] sm:$0xff]
    %v2936 = vld [vmem:[#allocation2 + $0x38] sm:$0xff]
    %v2937 = vld [vmem:[#allocation2 + $0x40] sm:$0xff]
    %v2938 = vld [vmem:[#allocation2 + $0x48] sm:$0xff]
    %v2939 = vld [vmem:[#allocation2 + $0x50] sm:$0xff]
    %v2940 = vld [vmem:[#allocation2 + $0x58] sm:$0xff]
    %v2941 = vld [vmem:[#allocation2 + $0x60] sm:$0xff]
    %v2942 = vld [vmem:[#allocation2 + $0x68] sm:$0xff]
    %v2943 = vld [vmem:[#allocation2 + $0x70] sm:$0xff]
    %v2944 = vld [vmem:[#allocation2 + $0x78] sm:$0xff]
    %v2945 = vld [vmem:[#allocation2 + $0x80] sm:$0xff]
    %v2946 = vld [vmem:[#allocation2 + $0x88] sm:$0xff]
    %v2947 = vld [vmem:[#allocation2 + $0x90] sm:$0xff]
    %v2948 = vld [vmem:[#allocation2 + $0x98] sm:$0xff]
    %v2949 = vld [vmem:[#allocation2 + $0xa0] sm:$0xff]
    %v2950 = vld [vmem:[#allocation2 + $0xa8] sm:$0xff]
    %v2951 = vld [vmem:[#allocation2 + $0xb0] sm:$0xff]
    %v2952 = vld [vmem:[#allocation2 + $0xb8] sm:$0xff]
    %v2953 = vld [vmem:[#allocation2 + $0xc0] sm:$0xff]
    %v2954 = vld [vmem:[#allocation2 + $0xc8] sm:$0xff]
    %v2955 = vld [vmem:[#allocation2 + $0xd0] sm:$0xff]
    %v2956 = vld [vmem:[#allocation2 + $0xd8] sm:$0xff]
    %v2957 = vld [vmem:[#allocation2 + $0xe0] sm:$0xff]
    %v2958 = vld [vmem:[#allocation2 + $0xe8] sm:$0xff]
    %v2959 = vld [vmem:[#allocation2 + $0xf0] sm:$0xff]
    %v2960 = vld [vmem:[#allocation2 + $0xf8] sm:$0xff]
    %v2993 = vunpack.c.l.b16 %v2929
    %v2994 = vunpack.c.h.b16 %v2929
    %v2995 = vunpack.c.l.b16 %v2930
    %v2996 = vunpack.c.h.b16 %v2930
    %v2997 = vunpack.c.l.b16 %v2931
    %v2998 = vunpack.c.h.b16 %v2931
    %v2999 = vunpack.c.l.b16 %v2932
    %v3000 = vunpack.c.h.b16 %v2932
    %v3001 = vunpack.c.l.b16 %v2933
    %v3002 = vunpack.c.h.b16 %v2933
    %v3003 = vunpack.c.l.b16 %v2934
    %v3004 = vunpack.c.h.b16 %v2934
    %v3005 = vunpack.c.l.b16 %v2935
    %v3006 = vunpack.c.h.b16 %v2935
    %v3007 = vunpack.c.l.b16 %v2936
    %v3008 = vunpack.c.h.b16 %v2936
    %v3009 = vunpack.c.l.b16 %v2937
    %v3010 = vunpack.c.h.b16 %v2937
    %v3011 = vunpack.c.l.b16 %v2938
    %v3012 = vunpack.c.h.b16 %v2938
    %v3013 = vunpack.c.l.b16 %v2939
    %v3014 = vunpack.c.h.b16 %v2939
    %v3015 = vunpack.c.l.b16 %v2940
    %v3016 = vunpack.c.h.b16 %v2940
    %v3017 = vunpack.c.l.b16 %v2941
    %v3018 = vunpack.c.h.b16 %v2941
    %v3019 = vunpack.c.l.b16 %v2942
    %v3020 = vunpack.c.h.b16 %v2942
    %v3021 = vunpack.c.l.b16 %v2943
    %v3022 = vunpack.c.h.b16 %v2943
    %v3023 = vunpack.c.l.b16 %v2944
    %v3024 = vunpack.c.h.b16 %v2944
    %v3025 = vunpack.c.l.b16 %v2945
    %v3026 = vunpack.c.h.b16 %v2945
    %v3027 = vunpack.c.l.b16 %v2946
    %v3028 = vunpack.c.h.b16 %v2946
    %v3029 = vunpack.c.l.b16 %v2947
    %v3030 = vunpack.c.h.b16 %v2947
    %v3031 = vunpack.c.l.b16 %v2948
    %v3032 = vunpack.c.h.b16 %v2948
    %v3033 = vunpack.c.l.b16 %v2949
    %v3034 = vunpack.c.h.b16 %v2949
    %v3035 = vunpack.c.l.b16 %v2950
    %v3036 = vunpack.c.h.b16 %v2950
    %v3037 = vunpack.c.l.b16 %v2951
    %v3038 = vunpack.c.h.b16 %v2951
    %v3039 = vunpack.c.l.b16 %v2952
    %v3040 = vunpack.c.h.b16 %v2952
    %v3041 = vunpack.c.l.b16 %v2953
    %v3042 = vunpack.c.h.b16 %v2953
    %v3043 = vunpack.c.l.b16 %v2954
    %v3044 = vunpack.c.h.b16 %v2954
    %v3045 = vunpack.c.l.b16 %v2955
    %v3046 = vunpack.c.h.b16 %v2955
    %v3047 = vunpack.c.l.b16 %v2956
    %v3048 = vunpack.c.h.b16 %v2956
    %v3049 = vunpack.c.l.b16 %v2957
    %v3050 = vunpack.c.h.b16 %v2957
    %v3051 = vunpack.c.l.b16 %v2958
    %v3052 = vunpack.c.h.b16 %v2958
    %v3053 = vunpack.c.l.b16 %v2959
    %v3054 = vunpack.c.h.b16 %v2959
    %v3055 = vunpack.c.l.b16 %v2960
    %v3056 = vunpack.c.h.b16 %v2960
    %v3057 = vpack.c.b16 %v2997, %v2993
    %v3058 = vpack.c.b16 %v2998, %v2994
    %v3059 = vpack.c.b16 %v2999, %v2995
    %v3060 = vpack.c.b16 %v3000, %v2996
    %v3061 = vpack.c.b16 %v3005, %v3001
    %v3062 = vpack.c.b16 %v3006, %v3002
    %v3063 = vpack.c.b16 %v3007, %v3003
    %v3064 = vpack.c.b16 %v3008, %v3004
    %v3065 = vpack.c.b16 %v3013, %v3009
    %v3066 = vpack.c.b16 %v3014, %v3010
    %v3067 = vpack.c.b16 %v3015, %v3011
    %v3068 = vpack.c.b16 %v3016, %v3012
    %v3069 = vpack.c.b16 %v3021, %v3017
    %v3070 = vpack.c.b16 %v3022, %v3018
    %v3071 = vpack.c.b16 %v3023, %v3019
    %v3072 = vpack.c.b16 %v3024, %v3020
    %v3073 = vpack.c.b16 %v3029, %v3025
    %v3074 = vpack.c.b16 %v3030, %v3026
    %v3075 = vpack.c.b16 %v3031, %v3027
    %v3076 = vpack.c.b16 %v3032, %v3028
    %v3077 = vpack.c.b16 %v3037, %v3033
    %v3078 = vpack.c.b16 %v3038, %v3034
    %v3079 = vpack.c.b16 %v3039, %v3035
    %v3080 = vpack.c.b16 %v3040, %v3036
    %v3081 = vpack.c.b16 %v3045, %v3041
    %v3082 = vpack.c.b16 %v3046, %v3042
    %v3083 = vpack.c.b16 %v3047, %v3043
    %v3084 = vpack.c.b16 %v3048, %v3044
    %v3085 = vpack.c.b16 %v3053, %v3049
    %v3086 = vpack.c.b16 %v3054, %v3050
    %v3087 = vpack.c.b16 %v3055, %v3051
    %v3088 = vpack.c.b16 %v3056, %v3052
    %3121 = vmatpush.bf16.msra.mxu0 %v3085
    %3122 = vmatpush.bf16.msra.mxu0 %v3081
    %3123 = vmatpush.bf16.msra.mxu0 %v3077
    %3124 = vmatpush.bf16.msra.mxu0 %v3073
    %3125 = vmatpush.bf16.msra.mxu0 %v3069
    %3126 = vmatpush.bf16.msra.mxu0 %v3065
    %3127 = vmatpush.bf16.msra.mxu0 %v3061
    %3128 = vmatpush.bf16.msra.mxu0 %v3057
    %3129 = vmatmul.bf16.gmra.mxu0 %v2921
    %v3130 = vpop.f32.mrf.mxu0
    %v3131 = vadd.f32 0.0, %v3130
    %v3132 = vpop.f32.mrf.mxu0
    %3133 = vdwg.mxu0
    %3134 = vmatpush.bf16.msra.mxu0 %v3086
    %3135 = vmatpush.bf16.msra.mxu0 %v3082
    %3136 = vmatpush.bf16.msra.mxu0 %v3078
    %3137 = vmatpush.bf16.msra.mxu0 %v3074
    %3138 = vmatpush.bf16.msra.mxu0 %v3070
    %3139 = vmatpush.bf16.msra.mxu0 %v3066
    %3140 = vmatpush.bf16.msra.mxu0 %v3062
    %3141 = vmatpush.bf16.msra.mxu0 %v3058
    %3142 = vmatmul.bf16.gmra.mxu0 %v2921
    %v3143 = vpop.f32.mrf.mxu0
    %v3144 = vadd.f32 0.0, %v3143
    %v3145 = vpop.f32.mrf.mxu0
    %3146 = vdwg.mxu0
    %3147 = vmatpush.bf16.msra.mxu0 %v3087
    %3148 = vmatpush.bf16.msra.mxu0 %v3083
    %3149 = vmatpush.bf16.msra.mxu0 %v3079
    %3150 = vmatpush.bf16.msra.mxu0 %v3075
    %3151 = vmatpush.bf16.msra.mxu0 %v3071
    %3152 = vmatpush.bf16.msra.mxu0 %v3067
    %3153 = vmatpush.bf16.msra.mxu0 %v3063
    %3154 = vmatpush.bf16.msra.mxu0 %v3059
    %3155 = vmatmul.bf16.gmra.mxu0 %v2921
    %v3156 = vpop.f32.mrf.mxu0
    %v3157 = vadd.f32 0.0, %v3156
    %v3158 = vpop.f32.mrf.mxu0
    %3159 = vdwg.mxu0
    %3160 = vmatpush.bf16.msra.mxu0 %v3088
    %3161 = vmatpush.bf16.msra.mxu0 %v3084
    %3162 = vmatpush.bf16.msra.mxu0 %v3080
    %3163 = vmatpush.bf16.msra.mxu0 %v3076
    %3164 = vmatpush.bf16.msra.mxu0 %v3072
    %3165 = vmatpush.bf16.msra.mxu0 %v3068
    %3166 = vmatpush.bf16.msra.mxu0 %v3064
    %3167 = vmatpush.bf16.msra.mxu0 %v3060
    %3168 = vmatmul.bf16.gmra.mxu0 %v2921
    %v3169 = vpop.f32.mrf.mxu0
    %v3170 = vadd.f32 0.0, %v3169
    %v3171 = vpop.f32.mrf.mxu0
    %3172 = vdwg.mxu0
    %v3173 = vadd.f32 %v2925, %v3131
    %v3174 = vadd.f32 %v2926, %v3144
    %v3175 = vadd.f32 %v2927, %v3157
    %v3176 = vadd.f32 %v2928, %v3170
    %v3177 = vxor.u32 %v3173, 2147483648
    %v3178 = vmul.f32 %v3177, 1.442695
    %v3179 = vpow.pop %v3178
    %v3180 = vadd.f32 %v3179, 1.0
    %v3181 = vrcp.pop %v3180
    %v3182 = vmul.f32 %v3180, %v3181
    %v3183 = vsub.f32 1.0, %v3182
    %v3184 = vmul.f32 %v3181, %v3183
    %v3185 = vadd.f32 %v3181, %v3184
    %vm3186 = vweird.f32 %v3180
    %vm3187 = vweird.f32 %v3181
    %vm3188 = vmor %vm3186, %vm3187
    %v3189 = vsel %vm3188, %v3181, %v3185
    %v3190 = vand.u32 2147483647, %v3180
    %vm3191 = vcmp.eq.f32.partialorder %v3190, 8.507059e+37
    %v3192 = vand.u32 %v3180, 2147483648
    %v3193 = vor.u32 1.1754944e-38, %v3192
    %v3194 = vsel %vm3191, %v3193, %v3189
    %v3195 = vmul.f32 1.0, %v3194
    %v3196 = vxor.u32 %v3174, 2147483648
    %v3197 = vmul.f32 %v3196, 1.442695
    %v3198 = vpow.pop %v3197
    %v3199 = vadd.f32 %v3198, 1.0
    %v3200 = vrcp.pop %v3199
    %v3201 = vmul.f32 %v3199, %v3200
    %v3202 = vsub.f32 1.0, %v3201
    %v3203 = vmul.f32 %v3200, %v3202
    %v3204 = vadd.f32 %v3200, %v3203
    %vm3205 = vweird.f32 %v3199
    %vm3206 = vweird.f32 %v3200
    %vm3207 = vmor %vm3205, %vm3206
    %v3208 = vsel %vm3207, %v3200, %v3204
    %v3209 = vand.u32 2147483647, %v3199
    %vm3210 = vcmp.eq.f32.partialorder %v3209, 8.507059e+37
    %v3211 = vand.u32 %v3199, 2147483648
    %v3212 = vor.u32 1.1754944e-38, %v3211
    %v3213 = vsel %vm3210, %v3212, %v3208
    %v3214 = vmul.f32 1.0, %v3213
    %v3215 = vtanh.pop %v3175
    %v3216 = vxor.u32 %v3176, 2147483648
    %v3217 = vmul.f32 %v3216, 1.442695
    %v3218 = vpow.pop %v3217
    %v3219 = vadd.f32 %v3218, 1.0
    %v3220 = vrcp.pop %v3219
    %v3221 = vmul.f32 %v3219, %v3220
    %v3222 = vsub.f32 1.0, %v3221
    %v3223 = vmul.f32 %v3220, %v3222
    %v3224 = vadd.f32 %v3220, %v3223
    %vm3225 = vweird.f32 %v3219
    %vm3226 = vweird.f32 %v3220
    %vm3227 = vmor %vm3225, %vm3226
    %v3228 = vsel %vm3227, %v3220, %v3224
    %v3229 = vand.u32 2147483647, %v3219
    %vm3230 = vcmp.eq.f32.partialorder %v3229, 8.507059e+37
    %v3231 = vand.u32 %v3219, 2147483648
    %v3232 = vor.u32 1.1754944e-38, %v3231
    %v3233 = vsel %vm3230, %v3232, %v3228
    %v3234 = vmul.f32 1.0, %v3233
    %v3235 = vmul.f32 %v3214, %v2918
    %v3236 = vmul.f32 %v3195, %v3215
    %v3237 = vadd.f32 %v3235, %v3236
    %v3238 = vtanh.pop %v3237
    %v3239 = vmul.f32 %v3234, %v3238
    %v3240 = vpack.c.bf16 %v3239, %v3239
    %3241 = vst [vmem:[#allocation9 + $0x24] sm:$0xf] %v3240
    %v3242 = vld [vmem:[#allocation6 + $0xa0] sm:$0xff]
    %v3243 = vld [vmem:[#allocation6 + $0xa8] sm:$0xff]
    %v3244 = vunpack.c.l.bf16 %v3242
    %v3245 = vunpack.c.h.bf16 %v3242
    %v3246 = vunpack.c.l.bf16 %v3243
    %v3247 = vunpack.c.h.bf16 %v3243
    %v3248 = vld [vmem:[#allocation2] sm:$0xff]
    %v3249 = vld [vmem:[#allocation2 + $0x8] sm:$0xff]
    %v3250 = vld [vmem:[#allocation2 + $0x10] sm:$0xff]
    %v3251 = vld [vmem:[#allocation2 + $0x18] sm:$0xff]
    %v3252 = vld [vmem:[#allocation2 + $0x20] sm:$0xff]
    %v3253 = vld [vmem:[#allocation2 + $0x28] sm:$0xff]
    %v3254 = vld [vmem:[#allocation2 + $0x30] sm:$0xff]
    %v3255 = vld [vmem:[#allocation2 + $0x38] sm:$0xff]
    %v3256 = vld [vmem:[#allocation2 + $0x40] sm:$0xff]
    %v3257 = vld [vmem:[#allocation2 + $0x48] sm:$0xff]
    %v3258 = vld [vmem:[#allocation2 + $0x50] sm:$0xff]
    %v3259 = vld [vmem:[#allocation2 + $0x58] sm:$0xff]
    %v3260 = vld [vmem:[#allocation2 + $0x60] sm:$0xff]
    %v3261 = vld [vmem:[#allocation2 + $0x68] sm:$0xff]
    %v3262 = vld [vmem:[#allocation2 + $0x70] sm:$0xff]
    %v3263 = vld [vmem:[#allocation2 + $0x78] sm:$0xff]
    %v3264 = vld [vmem:[#allocation2 + $0x80] sm:$0xff]
    %v3265 = vld [vmem:[#allocation2 + $0x88] sm:$0xff]
    %v3266 = vld [vmem:[#allocation2 + $0x90] sm:$0xff]
    %v3267 = vld [vmem:[#allocation2 + $0x98] sm:$0xff]
    %v3268 = vld [vmem:[#allocation2 + $0xa0] sm:$0xff]
    %v3269 = vld [vmem:[#allocation2 + $0xa8] sm:$0xff]
    %v3270 = vld [vmem:[#allocation2 + $0xb0] sm:$0xff]
    %v3271 = vld [vmem:[#allocation2 + $0xb8] sm:$0xff]
    %v3272 = vld [vmem:[#allocation2 + $0xc0] sm:$0xff]
    %v3273 = vld [vmem:[#allocation2 + $0xc8] sm:$0xff]
    %v3274 = vld [vmem:[#allocation2 + $0xd0] sm:$0xff]
    %v3275 = vld [vmem:[#allocation2 + $0xd8] sm:$0xff]
    %v3276 = vld [vmem:[#allocation2 + $0xe0] sm:$0xff]
    %v3277 = vld [vmem:[#allocation2 + $0xe8] sm:$0xff]
    %v3278 = vld [vmem:[#allocation2 + $0xf0] sm:$0xff]
    %v3279 = vld [vmem:[#allocation2 + $0xf8] sm:$0xff]
    %v3312 = vunpack.c.l.b16 %v3248
    %v3313 = vunpack.c.h.b16 %v3248
    %v3314 = vunpack.c.l.b16 %v3249
    %v3315 = vunpack.c.h.b16 %v3249
    %v3316 = vunpack.c.l.b16 %v3250
    %v3317 = vunpack.c.h.b16 %v3250
    %v3318 = vunpack.c.l.b16 %v3251
    %v3319 = vunpack.c.h.b16 %v3251
    %v3320 = vunpack.c.l.b16 %v3252
    %v3321 = vunpack.c.h.b16 %v3252
    %v3322 = vunpack.c.l.b16 %v3253
    %v3323 = vunpack.c.h.b16 %v3253
    %v3324 = vunpack.c.l.b16 %v3254
    %v3325 = vunpack.c.h.b16 %v3254
    %v3326 = vunpack.c.l.b16 %v3255
    %v3327 = vunpack.c.h.b16 %v3255
    %v3328 = vunpack.c.l.b16 %v3256
    %v3329 = vunpack.c.h.b16 %v3256
    %v3330 = vunpack.c.l.b16 %v3257
    %v3331 = vunpack.c.h.b16 %v3257
    %v3332 = vunpack.c.l.b16 %v3258
    %v3333 = vunpack.c.h.b16 %v3258
    %v3334 = vunpack.c.l.b16 %v3259
    %v3335 = vunpack.c.h.b16 %v3259
    %v3336 = vunpack.c.l.b16 %v3260
    %v3337 = vunpack.c.h.b16 %v3260
    %v3338 = vunpack.c.l.b16 %v3261
    %v3339 = vunpack.c.h.b16 %v3261
    %v3340 = vunpack.c.l.b16 %v3262
    %v3341 = vunpack.c.h.b16 %v3262
    %v3342 = vunpack.c.l.b16 %v3263
    %v3343 = vunpack.c.h.b16 %v3263
    %v3344 = vunpack.c.l.b16 %v3264
    %v3345 = vunpack.c.h.b16 %v3264
    %v3346 = vunpack.c.l.b16 %v3265
    %v3347 = vunpack.c.h.b16 %v3265
    %v3348 = vunpack.c.l.b16 %v3266
    %v3349 = vunpack.c.h.b16 %v3266
    %v3350 = vunpack.c.l.b16 %v3267
    %v3351 = vunpack.c.h.b16 %v3267
    %v3352 = vunpack.c.l.b16 %v3268
    %v3353 = vunpack.c.h.b16 %v3268
    %v3354 = vunpack.c.l.b16 %v3269
    %v3355 = vunpack.c.h.b16 %v3269
    %v3356 = vunpack.c.l.b16 %v3270
    %v3357 = vunpack.c.h.b16 %v3270
    %v3358 = vunpack.c.l.b16 %v3271
    %v3359 = vunpack.c.h.b16 %v3271
    %v3360 = vunpack.c.l.b16 %v3272
    %v3361 = vunpack.c.h.b16 %v3272
    %v3362 = vunpack.c.l.b16 %v3273
    %v3363 = vunpack.c.h.b16 %v3273
    %v3364 = vunpack.c.l.b16 %v3274
    %v3365 = vunpack.c.h.b16 %v3274
    %v3366 = vunpack.c.l.b16 %v3275
    %v3367 = vunpack.c.h.b16 %v3275
    %v3368 = vunpack.c.l.b16 %v3276
    %v3369 = vunpack.c.h.b16 %v3276
    %v3370 = vunpack.c.l.b16 %v3277
    %v3371 = vunpack.c.h.b16 %v3277
    %v3372 = vunpack.c.l.b16 %v3278
    %v3373 = vunpack.c.h.b16 %v3278
    %v3374 = vunpack.c.l.b16 %v3279
    %v3375 = vunpack.c.h.b16 %v3279
    %v3376 = vpack.c.b16 %v3316, %v3312
    %v3377 = vpack.c.b16 %v3317, %v3313
    %v3378 = vpack.c.b16 %v3318, %v3314
    %v3379 = vpack.c.b16 %v3319, %v3315
    %v3380 = vpack.c.b16 %v3324, %v3320
    %v3381 = vpack.c.b16 %v3325, %v3321
    %v3382 = vpack.c.b16 %v3326, %v3322
    %v3383 = vpack.c.b16 %v3327, %v3323
    %v3384 = vpack.c.b16 %v3332, %v3328
    %v3385 = vpack.c.b16 %v3333, %v3329
    %v3386 = vpack.c.b16 %v3334, %v3330
    %v3387 = vpack.c.b16 %v3335, %v3331
    %v3388 = vpack.c.b16 %v3340, %v3336
    %v3389 = vpack.c.b16 %v3341, %v3337
    %v3390 = vpack.c.b16 %v3342, %v3338
    %v3391 = vpack.c.b16 %v3343, %v3339
    %v3392 = vpack.c.b16 %v3348, %v3344
    %v3393 = vpack.c.b16 %v3349, %v3345
    %v3394 = vpack.c.b16 %v3350, %v3346
    %v3395 = vpack.c.b16 %v3351, %v3347
    %v3396 = vpack.c.b16 %v3356, %v3352
    %v3397 = vpack.c.b16 %v3357, %v3353
    %v3398 = vpack.c.b16 %v3358, %v3354
    %v3399 = vpack.c.b16 %v3359, %v3355
    %v3400 = vpack.c.b16 %v3364, %v3360
    %v3401 = vpack.c.b16 %v3365, %v3361
    %v3402 = vpack.c.b16 %v3366, %v3362
    %v3403 = vpack.c.b16 %v3367, %v3363
    %v3404 = vpack.c.b16 %v3372, %v3368
    %v3405 = vpack.c.b16 %v3373, %v3369
    %v3406 = vpack.c.b16 %v3374, %v3370
    %v3407 = vpack.c.b16 %v3375, %v3371
    %3440 = vmatpush.bf16.msra.mxu0 %v3404
    %3441 = vmatpush.bf16.msra.mxu0 %v3400
    %3442 = vmatpush.bf16.msra.mxu0 %v3396
    %3443 = vmatpush.bf16.msra.mxu0 %v3392
    %3444 = vmatpush.bf16.msra.mxu0 %v3388
    %3445 = vmatpush.bf16.msra.mxu0 %v3384
    %3446 = vmatpush.bf16.msra.mxu0 %v3380
    %3447 = vmatpush.bf16.msra.mxu0 %v3376
    %3448 = vmatmul.bf16.gmra.mxu0 %v3240
    %v3449 = vpop.f32.mrf.mxu0
    %v3450 = vadd.f32 0.0, %v3449
    %v3451 = vpop.f32.mrf.mxu0
    %3452 = vdwg.mxu0
    %3453 = vmatpush.bf16.msra.mxu0 %v3405
    %3454 = vmatpush.bf16.msra.mxu0 %v3401
    %3455 = vmatpush.bf16.msra.mxu0 %v3397
    %3456 = vmatpush.bf16.msra.mxu0 %v3393
    %3457 = vmatpush.bf16.msra.mxu0 %v3389
    %3458 = vmatpush.bf16.msra.mxu0 %v3385
    %3459 = vmatpush.bf16.msra.mxu0 %v3381
    %3460 = vmatpush.bf16.msra.mxu0 %v3377
    %3461 = vmatmul.bf16.gmra.mxu0 %v3240
    %v3462 = vpop.f32.mrf.mxu0
    %v3463 = vadd.f32 0.0, %v3462
    %v3464 = vpop.f32.mrf.mxu0
    %3465 = vdwg.mxu0
    %3466 = vmatpush.bf16.msra.mxu0 %v3406
    %3467 = vmatpush.bf16.msra.mxu0 %v3402
    %3468 = vmatpush.bf16.msra.mxu0 %v3398
    %3469 = vmatpush.bf16.msra.mxu0 %v3394
    %3470 = vmatpush.bf16.msra.mxu0 %v3390
    %3471 = vmatpush.bf16.msra.mxu0 %v3386
    %3472 = vmatpush.bf16.msra.mxu0 %v3382
    %3473 = vmatpush.bf16.msra.mxu0 %v3378
    %3474 = vmatmul.bf16.gmra.mxu0 %v3240
    %v3475 = vpop.f32.mrf.mxu0
    %v3476 = vadd.f32 0.0, %v3475
    %v3477 = vpop.f32.mrf.mxu0
    %3478 = vdwg.mxu0
    %3479 = vmatpush.bf16.msra.mxu0 %v3407
    %3480 = vmatpush.bf16.msra.mxu0 %v3403
    %3481 = vmatpush.bf16.msra.mxu0 %v3399
    %3482 = vmatpush.bf16.msra.mxu0 %v3395
    %3483 = vmatpush.bf16.msra.mxu0 %v3391
    %3484 = vmatpush.bf16.msra.mxu0 %v3387
    %3485 = vmatpush.bf16.msra.mxu0 %v3383
    %3486 = vmatpush.bf16.msra.mxu0 %v3379
    %3487 = vmatmul.bf16.gmra.mxu0 %v3240
    %v3488 = vpop.f32.mrf.mxu0
    %v3489 = vadd.f32 0.0, %v3488
    %v3490 = vpop.f32.mrf.mxu0
    %3491 = vdwg.mxu0
    %v3492 = vadd.f32 %v3244, %v3450
    %v3493 = vadd.f32 %v3245, %v3463
    %v3494 = vadd.f32 %v3246, %v3476
    %v3495 = vadd.f32 %v3247, %v3489
    %v3496 = vxor.u32 %v3492, 2147483648
    %v3497 = vmul.f32 %v3496, 1.442695
    %v3498 = vpow.pop %v3497
    %v3499 = vadd.f32 %v3498, 1.0
    %v3500 = vrcp.pop %v3499
    %v3501 = vmul.f32 %v3499, %v3500
    %v3502 = vsub.f32 1.0, %v3501
    %v3503 = vmul.f32 %v3500, %v3502
    %v3504 = vadd.f32 %v3500, %v3503
    %vm3505 = vweird.f32 %v3499
    %vm3506 = vweird.f32 %v3500
    %vm3507 = vmor %vm3505, %vm3506
    %v3508 = vsel %vm3507, %v3500, %v3504
    %v3509 = vand.u32 2147483647, %v3499
    %vm3510 = vcmp.eq.f32.partialorder %v3509, 8.507059e+37
    %v3511 = vand.u32 %v3499, 2147483648
    %v3512 = vor.u32 1.1754944e-38, %v3511
    %v3513 = vsel %vm3510, %v3512, %v3508
    %v3514 = vmul.f32 1.0, %v3513
    %v3515 = vxor.u32 %v3493, 2147483648
    %v3516 = vmul.f32 %v3515, 1.442695
    %v3517 = vpow.pop %v3516
    %v3518 = vadd.f32 %v3517, 1.0
    %v3519 = vrcp.pop %v3518
    %v3520 = vmul.f32 %v3518, %v3519
    %v3521 = vsub.f32 1.0, %v3520
    %v3522 = vmul.f32 %v3519, %v3521
    %v3523 = vadd.f32 %v3519, %v3522
    %vm3524 = vweird.f32 %v3518
    %vm3525 = vweird.f32 %v3519
    %vm3526 = vmor %vm3524, %vm3525
    %v3527 = vsel %vm3526, %v3519, %v3523
    %v3528 = vand.u32 2147483647, %v3518
    %vm3529 = vcmp.eq.f32.partialorder %v3528, 8.507059e+37
    %v3530 = vand.u32 %v3518, 2147483648
    %v3531 = vor.u32 1.1754944e-38, %v3530
    %v3532 = vsel %vm3529, %v3531, %v3527
    %v3533 = vmul.f32 1.0, %v3532
    %v3534 = vtanh.pop %v3494
    %v3535 = vxor.u32 %v3495, 2147483648
    %v3536 = vmul.f32 %v3535, 1.442695
    %v3537 = vpow.pop %v3536
    %v3538 = vadd.f32 %v3537, 1.0
    %v3539 = vrcp.pop %v3538
    %v3540 = vmul.f32 %v3538, %v3539
    %v3541 = vsub.f32 1.0, %v3540
    %v3542 = vmul.f32 %v3539, %v3541
    %v3543 = vadd.f32 %v3539, %v3542
    %vm3544 = vweird.f32 %v3538
    %vm3545 = vweird.f32 %v3539
    %vm3546 = vmor %vm3544, %vm3545
    %v3547 = vsel %vm3546, %v3539, %v3543
    %v3548 = vand.u32 2147483647, %v3538
    %vm3549 = vcmp.eq.f32.partialorder %v3548, 8.507059e+37
    %v3550 = vand.u32 %v3538, 2147483648
    %v3551 = vor.u32 1.1754944e-38, %v3550
    %v3552 = vsel %vm3549, %v3551, %v3547
    %v3553 = vmul.f32 1.0, %v3552
    %v3554 = vmul.f32 %v3533, %v3237
    %v3555 = vmul.f32 %v3514, %v3534
    %v3556 = vadd.f32 %v3554, %v3555
    %v3557 = vtanh.pop %v3556
    %v3558 = vmul.f32 %v3553, %v3557
    %v3559 = vpack.c.bf16 %v3558, %v3558
    %3560 = vst [vmem:[#allocation9 + $0x28] sm:$0xf] %v3559
    %v3561 = vld [vmem:[#allocation6 + $0xb0] sm:$0xff]
    %v3562 = vld [vmem:[#allocation6 + $0xb8] sm:$0xff]
    %v3563 = vunpack.c.l.bf16 %v3561
    %v3564 = vunpack.c.h.bf16 %v3561
    %v3565 = vunpack.c.l.bf16 %v3562
    %v3566 = vunpack.c.h.bf16 %v3562
    %v3567 = vld [vmem:[#allocation2] sm:$0xff]
    %v3568 = vld [vmem:[#allocation2 + $0x8] sm:$0xff]
    %v3569 = vld [vmem:[#allocation2 + $0x10] sm:$0xff]
    %v3570 = vld [vmem:[#allocation2 + $0x18] sm:$0xff]
    %v3571 = vld [vmem:[#allocation2 + $0x20] sm:$0xff]
    %v3572 = vld [vmem:[#allocation2 + $0x28] sm:$0xff]
    %v3573 = vld [vmem:[#allocation2 + $0x30] sm:$0xff]
    %v3574 = vld [vmem:[#allocation2 + $0x38] sm:$0xff]
    %v3575 = vld [vmem:[#allocation2 + $0x40] sm:$0xff]
    %v3576 = vld [vmem:[#allocation2 + $0x48] sm:$0xff]
    %v3577 = vld [vmem:[#allocation2 + $0x50] sm:$0xff]
    %v3578 = vld [vmem:[#allocation2 + $0x58] sm:$0xff]
    %v3579 = vld [vmem:[#allocation2 + $0x60] sm:$0xff]
    %v3580 = vld [vmem:[#allocation2 + $0x68] sm:$0xff]
    %v3581 = vld [vmem:[#allocation2 + $0x70] sm:$0xff]
    %v3582 = vld [vmem:[#allocation2 + $0x78] sm:$0xff]
    %v3583 = vld [vmem:[#allocation2 + $0x80] sm:$0xff]
    %v3584 = vld [vmem:[#allocation2 + $0x88] sm:$0xff]
    %v3585 = vld [vmem:[#allocation2 + $0x90] sm:$0xff]
    %v3586 = vld [vmem:[#allocation2 + $0x98] sm:$0xff]
    %v3587 = vld [vmem:[#allocation2 + $0xa0] sm:$0xff]
    %v3588 = vld [vmem:[#allocation2 + $0xa8] sm:$0xff]
    %v3589 = vld [vmem:[#allocation2 + $0xb0] sm:$0xff]
    %v3590 = vld [vmem:[#allocation2 + $0xb8] sm:$0xff]
    %v3591 = vld [vmem:[#allocation2 + $0xc0] sm:$0xff]
    %v3592 = vld [vmem:[#allocation2 + $0xc8] sm:$0xff]
    %v3593 = vld [vmem:[#allocation2 + $0xd0] sm:$0xff]
    %v3594 = vld [vmem:[#allocation2 + $0xd8] sm:$0xff]
    %v3595 = vld [vmem:[#allocation2 + $0xe0] sm:$0xff]
    %v3596 = vld [vmem:[#allocation2 + $0xe8] sm:$0xff]
    %v3597 = vld [vmem:[#allocation2 + $0xf0] sm:$0xff]
    %v3598 = vld [vmem:[#allocation2 + $0xf8] sm:$0xff]
    %v3631 = vunpack.c.l.b16 %v3567
    %v3632 = vunpack.c.h.b16 %v3567
    %v3633 = vunpack.c.l.b16 %v3568
    %v3634 = vunpack.c.h.b16 %v3568
    %v3635 = vunpack.c.l.b16 %v3569
    %v3636 = vunpack.c.h.b16 %v3569
    %v3637 = vunpack.c.l.b16 %v3570
    %v3638 = vunpack.c.h.b16 %v3570
    %v3639 = vunpack.c.l.b16 %v3571
    %v3640 = vunpack.c.h.b16 %v3571
    %v3641 = vunpack.c.l.b16 %v3572
    %v3642 = vunpack.c.h.b16 %v3572
    %v3643 = vunpack.c.l.b16 %v3573
    %v3644 = vunpack.c.h.b16 %v3573
    %v3645 = vunpack.c.l.b16 %v3574
    %v3646 = vunpack.c.h.b16 %v3574
    %v3647 = vunpack.c.l.b16 %v3575
    %v3648 = vunpack.c.h.b16 %v3575
    %v3649 = vunpack.c.l.b16 %v3576
    %v3650 = vunpack.c.h.b16 %v3576
    %v3651 = vunpack.c.l.b16 %v3577
    %v3652 = vunpack.c.h.b16 %v3577
    %v3653 = vunpack.c.l.b16 %v3578
    %v3654 = vunpack.c.h.b16 %v3578
    %v3655 = vunpack.c.l.b16 %v3579
    %v3656 = vunpack.c.h.b16 %v3579
    %v3657 = vunpack.c.l.b16 %v3580
    %v3658 = vunpack.c.h.b16 %v3580
    %v3659 = vunpack.c.l.b16 %v3581
    %v3660 = vunpack.c.h.b16 %v3581
    %v3661 = vunpack.c.l.b16 %v3582
    %v3662 = vunpack.c.h.b16 %v3582
    %v3663 = vunpack.c.l.b16 %v3583
    %v3664 = vunpack.c.h.b16 %v3583
    %v3665 = vunpack.c.l.b16 %v3584
    %v3666 = vunpack.c.h.b16 %v3584
    %v3667 = vunpack.c.l.b16 %v3585
    %v3668 = vunpack.c.h.b16 %v3585
    %v3669 = vunpack.c.l.b16 %v3586
    %v3670 = vunpack.c.h.b16 %v3586
    %v3671 = vunpack.c.l.b16 %v3587
    %v3672 = vunpack.c.h.b16 %v3587
    %v3673 = vunpack.c.l.b16 %v3588
    %v3674 = vunpack.c.h.b16 %v3588
    %v3675 = vunpack.c.l.b16 %v3589
    %v3676 = vunpack.c.h.b16 %v3589
    %v3677 = vunpack.c.l.b16 %v3590
    %v3678 = vunpack.c.h.b16 %v3590
    %v3679 = vunpack.c.l.b16 %v3591
    %v3680 = vunpack.c.h.b16 %v3591
    %v3681 = vunpack.c.l.b16 %v3592
    %v3682 = vunpack.c.h.b16 %v3592
    %v3683 = vunpack.c.l.b16 %v3593
    %v3684 = vunpack.c.h.b16 %v3593
    %v3685 = vunpack.c.l.b16 %v3594
    %v3686 = vunpack.c.h.b16 %v3594
    %v3687 = vunpack.c.l.b16 %v3595
    %v3688 = vunpack.c.h.b16 %v3595
    %v3689 = vunpack.c.l.b16 %v3596
    %v3690 = vunpack.c.h.b16 %v3596
    %v3691 = vunpack.c.l.b16 %v3597
    %v3692 = vunpack.c.h.b16 %v3597
    %v3693 = vunpack.c.l.b16 %v3598
    %v3694 = vunpack.c.h.b16 %v3598
    %v3695 = vpack.c.b16 %v3635, %v3631
    %v3696 = vpack.c.b16 %v3636, %v3632
    %v3697 = vpack.c.b16 %v3637, %v3633
    %v3698 = vpack.c.b16 %v3638, %v3634
    %v3699 = vpack.c.b16 %v3643, %v3639
    %v3700 = vpack.c.b16 %v3644, %v3640
    %v3701 = vpack.c.b16 %v3645, %v3641
    %v3702 = vpack.c.b16 %v3646, %v3642
    %v3703 = vpack.c.b16 %v3651, %v3647
    %v3704 = vpack.c.b16 %v3652, %v3648
    %v3705 = vpack.c.b16 %v3653, %v3649
    %v3706 = vpack.c.b16 %v3654, %v3650
    %v3707 = vpack.c.b16 %v3659, %v3655
    %v3708 = vpack.c.b16 %v3660, %v3656
    %v3709 = vpack.c.b16 %v3661, %v3657
    %v3710 = vpack.c.b16 %v3662, %v3658
    %v3711 = vpack.c.b16 %v3667, %v3663
    %v3712 = vpack.c.b16 %v3668, %v3664
    %v3713 = vpack.c.b16 %v3669, %v3665
    %v3714 = vpack.c.b16 %v3670, %v3666
    %v3715 = vpack.c.b16 %v3675, %v3671
    %v3716 = vpack.c.b16 %v3676, %v3672
    %v3717 = vpack.c.b16 %v3677, %v3673
    %v3718 = vpack.c.b16 %v3678, %v3674
    %v3719 = vpack.c.b16 %v3683, %v3679
    %v3720 = vpack.c.b16 %v3684, %v3680
    %v3721 = vpack.c.b16 %v3685, %v3681
    %v3722 = vpack.c.b16 %v3686, %v3682
    %v3723 = vpack.c.b16 %v3691, %v3687
    %v3724 = vpack.c.b16 %v3692, %v3688
    %v3725 = vpack.c.b16 %v3693, %v3689
    %v3726 = vpack.c.b16 %v3694, %v3690
    %3759 = vmatpush.bf16.msra.mxu0 %v3723
    %3760 = vmatpush.bf16.msra.mxu0 %v3719
    %3761 = vmatpush.bf16.msra.mxu0 %v3715
    %3762 = vmatpush.bf16.msra.mxu0 %v3711
    %3763 = vmatpush.bf16.msra.mxu0 %v3707
    %3764 = vmatpush.bf16.msra.mxu0 %v3703
    %3765 = vmatpush.bf16.msra.mxu0 %v3699
    %3766 = vmatpush.bf16.msra.mxu0 %v3695
    %3767 = vmatmul.bf16.gmra.mxu0 %v3559
    %v3768 = vpop.f32.mrf.mxu0
    %v3769 = vadd.f32 0.0, %v3768
    %v3770 = vpop.f32.mrf.mxu0
    %3771 = vdwg.mxu0
    %3772 = vmatpush.bf16.msra.mxu0 %v3724
    %3773 = vmatpush.bf16.msra.mxu0 %v3720
    %3774 = vmatpush.bf16.msra.mxu0 %v3716
    %3775 = vmatpush.bf16.msra.mxu0 %v3712
    %3776 = vmatpush.bf16.msra.mxu0 %v3708
    %3777 = vmatpush.bf16.msra.mxu0 %v3704
    %3778 = vmatpush.bf16.msra.mxu0 %v3700
    %3779 = vmatpush.bf16.msra.mxu0 %v3696
    %3780 = vmatmul.bf16.gmra.mxu0 %v3559
    %v3781 = vpop.f32.mrf.mxu0
    %v3782 = vadd.f32 0.0, %v3781
    %v3783 = vpop.f32.mrf.mxu0
    %3784 = vdwg.mxu0
    %3785 = vmatpush.bf16.msra.mxu0 %v3725
    %3786 = vmatpush.bf16.msra.mxu0 %v3721
    %3787 = vmatpush.bf16.msra.mxu0 %v3717
    %3788 = vmatpush.bf16.msra.mxu0 %v3713
    %3789 = vmatpush.bf16.msra.mxu0 %v3709
    %3790 = vmatpush.bf16.msra.mxu0 %v3705
    %3791 = vmatpush.bf16.msra.mxu0 %v3701
    %3792 = vmatpush.bf16.msra.mxu0 %v3697
    %3793 = vmatmul.bf16.gmra.mxu0 %v3559
    %v3794 = vpop.f32.mrf.mxu0
    %v3795 = vadd.f32 0.0, %v3794
    %v3796 = vpop.f32.mrf.mxu0
    %3797 = vdwg.mxu0
    %3798 = vmatpush.bf16.msra.mxu0 %v3726
    %3799 = vmatpush.bf16.msra.mxu0 %v3722
    %3800 = vmatpush.bf16.msra.mxu0 %v3718
    %3801 = vmatpush.bf16.msra.mxu0 %v3714
    %3802 = vmatpush.bf16.msra.mxu0 %v3710
    %3803 = vmatpush.bf16.msra.mxu0 %v3706
    %3804 = vmatpush.bf16.msra.mxu0 %v3702
    %3805 = vmatpush.bf16.msra.mxu0 %v3698
    %3806 = vmatmul.bf16.gmra.mxu0 %v3559
    %v3807 = vpop.f32.mrf.mxu0
    %v3808 = vadd.f32 0.0, %v3807
    %v3809 = vpop.f32.mrf.mxu0
    %3810 = vdwg.mxu0
    %v3811 = vadd.f32 %v3563, %v3769
    %v3812 = vadd.f32 %v3564, %v3782
    %v3813 = vadd.f32 %v3565, %v3795
    %v3814 = vadd.f32 %v3566, %v3808
    %v3815 = vxor.u32 %v3811, 2147483648
    %v3816 = vmul.f32 %v3815, 1.442695
    %v3817 = vpow.pop %v3816
    %v3818 = vadd.f32 %v3817, 1.0
    %v3819 = vrcp.pop %v3818
    %v3820 = vmul.f32 %v3818, %v3819
    %v3821 = vsub.f32 1.0, %v3820
    %v3822 = vmul.f32 %v3819, %v3821
    %v3823 = vadd.f32 %v3819, %v3822
    %vm3824 = vweird.f32 %v3818
    %vm3825 = vweird.f32 %v3819
    %vm3826 = vmor %vm3824, %vm3825
    %v3827 = vsel %vm3826, %v3819, %v3823
    %v3828 = vand.u32 2147483647, %v3818
    %vm3829 = vcmp.eq.f32.partialorder %v3828, 8.507059e+37
    %v3830 = vand.u32 %v3818, 2147483648
    %v3831 = vor.u32 1.1754944e-38, %v3830
    %v3832 = vsel %vm3829, %v3831, %v3827
    %v3833 = vmul.f32 1.0, %v3832
    %v3834 = vxor.u32 %v3812, 2147483648
    %v3835 = vmul.f32 %v3834, 1.442695
    %v3836 = vpow.pop %v3835
    %v3837 = vadd.f32 %v3836, 1.0
    %v3838 = vrcp.pop %v3837
    %v3839 = vmul.f32 %v3837, %v3838
    %v3840 = vsub.f32 1.0, %v3839
    %v3841 = vmul.f32 %v3838, %v3840
    %v3842 = vadd.f32 %v3838, %v3841
    %vm3843 = vweird.f32 %v3837
    %vm3844 = vweird.f32 %v3838
    %vm3845 = vmor %vm3843, %vm3844
    %v3846 = vsel %vm3845, %v3838, %v3842
    %v3847 = vand.u32 2147483647, %v3837
    %vm3848 = vcmp.eq.f32.partialorder %v3847, 8.507059e+37
    %v3849 = vand.u32 %v3837, 2147483648
    %v3850 = vor.u32 1.1754944e-38, %v3849
    %v3851 = vsel %vm3848, %v3850, %v3846
    %v3852 = vmul.f32 1.0, %v3851
    %v3853 = vtanh.pop %v3813
    %v3854 = vxor.u32 %v3814, 2147483648
    %v3855 = vmul.f32 %v3854, 1.442695
    %v3856 = vpow.pop %v3855
    %v3857 = vadd.f32 %v3856, 1.0
    %v3858 = vrcp.pop %v3857
    %v3859 = vmul.f32 %v3857, %v3858
    %v3860 = vsub.f32 1.0, %v3859
    %v3861 = vmul.f32 %v3858, %v3860
    %v3862 = vadd.f32 %v3858, %v3861
    %vm3863 = vweird.f32 %v3857
    %vm3864 = vweird.f32 %v3858
    %vm3865 = vmor %vm3863, %vm3864
    %v3866 = vsel %vm3865, %v3858, %v3862
    %v3867 = vand.u32 2147483647, %v3857
    %vm3868 = vcmp.eq.f32.partialorder %v3867, 8.507059e+37
    %v3869 = vand.u32 %v3857, 2147483648
    %v3870 = vor.u32 1.1754944e-38, %v3869
    %v3871 = vsel %vm3868, %v3870, %v3866
    %v3872 = vmul.f32 1.0, %v3871
    %v3873 = vmul.f32 %v3852, %v3556
    %v3874 = vmul.f32 %v3833, %v3853
    %v3875 = vadd.f32 %v3873, %v3874
    %v3876 = vtanh.pop %v3875
    %v3877 = vmul.f32 %v3872, %v3876
    %v3878 = vpack.c.bf16 %v3877, %v3877
    %3879 = vst [vmem:[#allocation9 + $0x2c] sm:$0xf] %v3878
    %v3880 = vld [vmem:[#allocation6 + $0xc0] sm:$0xff]
    %v3881 = vld [vmem:[#allocation6 + $0xc8] sm:$0xff]
    %v3882 = vunpack.c.l.bf16 %v3880
    %v3883 = vunpack.c.h.bf16 %v3880
    %v3884 = vunpack.c.l.bf16 %v3881
    %v3885 = vunpack.c.h.bf16 %v3881
    %v3886 = vld [vmem:[#allocation2] sm:$0xff]
    %v3887 = vld [vmem:[#allocation2 + $0x8] sm:$0xff]
    %v3888 = vld [vmem:[#allocation2 + $0x10] sm:$0xff]
    %v3889 = vld [vmem:[#allocation2 + $0x18] sm:$0xff]
    %v3890 = vld [vmem:[#allocation2 + $0x20] sm:$0xff]
    %v3891 = vld [vmem:[#allocation2 + $0x28] sm:$0xff]
    %v3892 = vld [vmem:[#allocation2 + $0x30] sm:$0xff]
    %v3893 = vld [vmem:[#allocation2 + $0x38] sm:$0xff]
    %v3894 = vld [vmem:[#allocation2 + $0x40] sm:$0xff]
    %v3895 = vld [vmem:[#allocation2 + $0x48] sm:$0xff]
    %v3896 = vld [vmem:[#allocation2 + $0x50] sm:$0xff]
    %v3897 = vld [vmem:[#allocation2 + $0x58] sm:$0xff]
    %v3898 = vld [vmem:[#allocation2 + $0x60] sm:$0xff]
    %v3899 = vld [vmem:[#allocation2 + $0x68] sm:$0xff]
    %v3900 = vld [vmem:[#allocation2 + $0x70] sm:$0xff]
    %v3901 = vld [vmem:[#allocation2 + $0x78] sm:$0xff]
    %v3902 = vld [vmem:[#allocation2 + $0x80] sm:$0xff]
    %v3903 = vld [vmem:[#allocation2 + $0x88] sm:$0xff]
    %v3904 = vld [vmem:[#allocation2 + $0x90] sm:$0xff]
    %v3905 = vld [vmem:[#allocation2 + $0x98] sm:$0xff]
    %v3906 = vld [vmem:[#allocation2 + $0xa0] sm:$0xff]
    %v3907 = vld [vmem:[#allocation2 + $0xa8] sm:$0xff]
    %v3908 = vld [vmem:[#allocation2 + $0xb0] sm:$0xff]
    %v3909 = vld [vmem:[#allocation2 + $0xb8] sm:$0xff]
    %v3910 = vld [vmem:[#allocation2 + $0xc0] sm:$0xff]
    %v3911 = vld [vmem:[#allocation2 + $0xc8] sm:$0xff]
    %v3912 = vld [vmem:[#allocation2 + $0xd0] sm:$0xff]
    %v3913 = vld [vmem:[#allocation2 + $0xd8] sm:$0xff]
    %v3914 = vld [vmem:[#allocation2 + $0xe0] sm:$0xff]
    %v3915 = vld [vmem:[#allocation2 + $0xe8] sm:$0xff]
    %v3916 = vld [vmem:[#allocation2 + $0xf0] sm:$0xff]
    %v3917 = vld [vmem:[#allocation2 + $0xf8] sm:$0xff]
    %v3950 = vunpack.c.l.b16 %v3886
    %v3951 = vunpack.c.h.b16 %v3886
    %v3952 = vunpack.c.l.b16 %v3887
    %v3953 = vunpack.c.h.b16 %v3887
    %v3954 = vunpack.c.l.b16 %v3888
    %v3955 = vunpack.c.h.b16 %v3888
    %v3956 = vunpack.c.l.b16 %v3889
    %v3957 = vunpack.c.h.b16 %v3889
    %v3958 = vunpack.c.l.b16 %v3890
    %v3959 = vunpack.c.h.b16 %v3890
    %v3960 = vunpack.c.l.b16 %v3891
    %v3961 = vunpack.c.h.b16 %v3891
    %v3962 = vunpack.c.l.b16 %v3892
    %v3963 = vunpack.c.h.b16 %v3892
    %v3964 = vunpack.c.l.b16 %v3893
    %v3965 = vunpack.c.h.b16 %v3893
    %v3966 = vunpack.c.l.b16 %v3894
    %v3967 = vunpack.c.h.b16 %v3894
    %v3968 = vunpack.c.l.b16 %v3895
    %v3969 = vunpack.c.h.b16 %v3895
    %v3970 = vunpack.c.l.b16 %v3896
    %v3971 = vunpack.c.h.b16 %v3896
    %v3972 = vunpack.c.l.b16 %v3897
    %v3973 = vunpack.c.h.b16 %v3897
    %v3974 = vunpack.c.l.b16 %v3898
    %v3975 = vunpack.c.h.b16 %v3898
    %v3976 = vunpack.c.l.b16 %v3899
    %v3977 = vunpack.c.h.b16 %v3899
    %v3978 = vunpack.c.l.b16 %v3900
    %v3979 = vunpack.c.h.b16 %v3900
    %v3980 = vunpack.c.l.b16 %v3901
    %v3981 = vunpack.c.h.b16 %v3901
    %v3982 = vunpack.c.l.b16 %v3902
    %v3983 = vunpack.c.h.b16 %v3902
    %v3984 = vunpack.c.l.b16 %v3903
    %v3985 = vunpack.c.h.b16 %v3903
    %v3986 = vunpack.c.l.b16 %v3904
    %v3987 = vunpack.c.h.b16 %v3904
    %v3988 = vunpack.c.l.b16 %v3905
    %v3989 = vunpack.c.h.b16 %v3905
    %v3990 = vunpack.c.l.b16 %v3906
    %v3991 = vunpack.c.h.b16 %v3906
    %v3992 = vunpack.c.l.b16 %v3907
    %v3993 = vunpack.c.h.b16 %v3907
    %v3994 = vunpack.c.l.b16 %v3908
    %v3995 = vunpack.c.h.b16 %v3908
    %v3996 = vunpack.c.l.b16 %v3909
    %v3997 = vunpack.c.h.b16 %v3909
    %v3998 = vunpack.c.l.b16 %v3910
    %v3999 = vunpack.c.h.b16 %v3910
    %v4000 = vunpack.c.l.b16 %v3911
    %v4001 = vunpack.c.h.b16 %v3911
    %v4002 = vunpack.c.l.b16 %v3912
    %v4003 = vunpack.c.h.b16 %v3912
    %v4004 = vunpack.c.l.b16 %v3913
    %v4005 = vunpack.c.h.b16 %v3913
    %v4006 = vunpack.c.l.b16 %v3914
    %v4007 = vunpack.c.h.b16 %v3914
    %v4008 = vunpack.c.l.b16 %v3915
    %v4009 = vunpack.c.h.b16 %v3915
    %v4010 = vunpack.c.l.b16 %v3916
    %v4011 = vunpack.c.h.b16 %v3916
    %v4012 = vunpack.c.l.b16 %v3917
    %v4013 = vunpack.c.h.b16 %v3917
    %v4014 = vpack.c.b16 %v3954, %v3950
    %v4015 = vpack.c.b16 %v3955, %v3951
    %v4016 = vpack.c.b16 %v3956, %v3952
    %v4017 = vpack.c.b16 %v3957, %v3953
    %v4018 = vpack.c.b16 %v3962, %v3958
    %v4019 = vpack.c.b16 %v3963, %v3959
    %v4020 = vpack.c.b16 %v3964, %v3960
    %v4021 = vpack.c.b16 %v3965, %v3961
    %v4022 = vpack.c.b16 %v3970, %v3966
    %v4023 = vpack.c.b16 %v3971, %v3967
    %v4024 = vpack.c.b16 %v3972, %v3968
    %v4025 = vpack.c.b16 %v3973, %v3969
    %v4026 = vpack.c.b16 %v3978, %v3974
    %v4027 = vpack.c.b16 %v3979, %v3975
    %v4028 = vpack.c.b16 %v3980, %v3976
    %v4029 = vpack.c.b16 %v3981, %v3977
    %v4030 = vpack.c.b16 %v3986, %v3982
    %v4031 = vpack.c.b16 %v3987, %v3983
    %v4032 = vpack.c.b16 %v3988, %v3984
    %v4033 = vpack.c.b16 %v3989, %v3985
    %v4034 = vpack.c.b16 %v3994, %v3990
    %v4035 = vpack.c.b16 %v3995, %v3991
    %v4036 = vpack.c.b16 %v3996, %v3992
    %v4037 = vpack.c.b16 %v3997, %v3993
    %v4038 = vpack.c.b16 %v4002, %v3998
    %v4039 = vpack.c.b16 %v4003, %v3999
    %v4040 = vpack.c.b16 %v4004, %v4000
    %v4041 = vpack.c.b16 %v4005, %v4001
    %v4042 = vpack.c.b16 %v4010, %v4006
    %v4043 = vpack.c.b16 %v4011, %v4007
    %v4044 = vpack.c.b16 %v4012, %v4008
    %v4045 = vpack.c.b16 %v4013, %v4009
    %4078 = vmatpush.bf16.msra.mxu0 %v4042
    %4079 = vmatpush.bf16.msra.mxu0 %v4038
    %4080 = vmatpush.bf16.msra.mxu0 %v4034
    %4081 = vmatpush.bf16.msra.mxu0 %v4030
    %4082 = vmatpush.bf16.msra.mxu0 %v4026
    %4083 = vmatpush.bf16.msra.mxu0 %v4022
    %4084 = vmatpush.bf16.msra.mxu0 %v4018
    %4085 = vmatpush.bf16.msra.mxu0 %v4014
    %4086 = vmatmul.bf16.gmra.mxu0 %v3878
    %v4087 = vpop.f32.mrf.mxu0
    %v4088 = vadd.f32 0.0, %v4087
    %v4089 = vpop.f32.mrf.mxu0
    %4090 = vdwg.mxu0
    %4091 = vmatpush.bf16.msra.mxu0 %v4043
    %4092 = vmatpush.bf16.msra.mxu0 %v4039
    %4093 = vmatpush.bf16.msra.mxu0 %v4035
    %4094 = vmatpush.bf16.msra.mxu0 %v4031
    %4095 = vmatpush.bf16.msra.mxu0 %v4027
    %4096 = vmatpush.bf16.msra.mxu0 %v4023
    %4097 = vmatpush.bf16.msra.mxu0 %v4019
    %4098 = vmatpush.bf16.msra.mxu0 %v4015
    %4099 = vmatmul.bf16.gmra.mxu0 %v3878
    %v4100 = vpop.f32.mrf.mxu0
    %v4101 = vadd.f32 0.0, %v4100
    %v4102 = vpop.f32.mrf.mxu0
    %4103 = vdwg.mxu0
    %4104 = vmatpush.bf16.msra.mxu0 %v4044
    %4105 = vmatpush.bf16.msra.mxu0 %v4040
    %4106 = vmatpush.bf16.msra.mxu0 %v4036
    %4107 = vmatpush.bf16.msra.mxu0 %v4032
    %4108 = vmatpush.bf16.msra.mxu0 %v4028
    %4109 = vmatpush.bf16.msra.mxu0 %v4024
    %4110 = vmatpush.bf16.msra.mxu0 %v4020
    %4111 = vmatpush.bf16.msra.mxu0 %v4016
    %4112 = vmatmul.bf16.gmra.mxu0 %v3878
    %v4113 = vpop.f32.mrf.mxu0
    %v4114 = vadd.f32 0.0, %v4113
    %v4115 = vpop.f32.mrf.mxu0
    %4116 = vdwg.mxu0
    %4117 = vmatpush.bf16.msra.mxu0 %v4045
    %4118 = vmatpush.bf16.msra.mxu0 %v4041
    %4119 = vmatpush.bf16.msra.mxu0 %v4037
    %4120 = vmatpush.bf16.msra.mxu0 %v4033
    %4121 = vmatpush.bf16.msra.mxu0 %v4029
    %4122 = vmatpush.bf16.msra.mxu0 %v4025
    %4123 = vmatpush.bf16.msra.mxu0 %v4021
    %4124 = vmatpush.bf16.msra.mxu0 %v4017
    %4125 = vmatmul.bf16.gmra.mxu0 %v3878
    %v4126 = vpop.f32.mrf.mxu0
    %v4127 = vadd.f32 0.0, %v4126
    %v4128 = vpop.f32.mrf.mxu0
    %4129 = vdwg.mxu0
    %v4130 = vadd.f32 %v3882, %v4088
    %v4131 = vadd.f32 %v3883, %v4101
    %v4132 = vadd.f32 %v3884, %v4114
    %v4133 = vadd.f32 %v3885, %v4127
    %v4134 = vxor.u32 %v4130, 2147483648
    %v4135 = vmul.f32 %v4134, 1.442695
    %v4136 = vpow.pop %v4135
    %v4137 = vadd.f32 %v4136, 1.0
    %v4138 = vrcp.pop %v4137
    %v4139 = vmul.f32 %v4137, %v4138
    %v4140 = vsub.f32 1.0, %v4139
    %v4141 = vmul.f32 %v4138, %v4140
    %v4142 = vadd.f32 %v4138, %v4141
    %vm4143 = vweird.f32 %v4137
    %vm4144 = vweird.f32 %v4138
    %vm4145 = vmor %vm4143, %vm4144
    %v4146 = vsel %vm4145, %v4138, %v4142
    %v4147 = vand.u32 2147483647, %v4137
    %vm4148 = vcmp.eq.f32.partialorder %v4147, 8.507059e+37
    %v4149 = vand.u32 %v4137, 2147483648
    %v4150 = vor.u32 1.1754944e-38, %v4149
    %v4151 = vsel %vm4148, %v4150, %v4146
    %v4152 = vmul.f32 1.0, %v4151
    %v4153 = vxor.u32 %v4131, 2147483648
    %v4154 = vmul.f32 %v4153, 1.442695
    %v4155 = vpow.pop %v4154
    %v4156 = vadd.f32 %v4155, 1.0
    %v4157 = vrcp.pop %v4156
    %v4158 = vmul.f32 %v4156, %v4157
    %v4159 = vsub.f32 1.0, %v4158
    %v4160 = vmul.f32 %v4157, %v4159
    %v4161 = vadd.f32 %v4157, %v4160
    %vm4162 = vweird.f32 %v4156
    %vm4163 = vweird.f32 %v4157
    %vm4164 = vmor %vm4162, %vm4163
    %v4165 = vsel %vm4164, %v4157, %v4161
    %v4166 = vand.u32 2147483647, %v4156
    %vm4167 = vcmp.eq.f32.partialorder %v4166, 8.507059e+37
    %v4168 = vand.u32 %v4156, 2147483648
    %v4169 = vor.u32 1.1754944e-38, %v4168
    %v4170 = vsel %vm4167, %v4169, %v4165
    %v4171 = vmul.f32 1.0, %v4170
    %v4172 = vtanh.pop %v4132
    %v4173 = vxor.u32 %v4133, 2147483648
    %v4174 = vmul.f32 %v4173, 1.442695
    %v4175 = vpow.pop %v4174
    %v4176 = vadd.f32 %v4175, 1.0
    %v4177 = vrcp.pop %v4176
    %v4178 = vmul.f32 %v4176, %v4177
    %v4179 = vsub.f32 1.0, %v4178
    %v4180 = vmul.f32 %v4177, %v4179
    %v4181 = vadd.f32 %v4177, %v4180
    %vm4182 = vweird.f32 %v4176
    %vm4183 = vweird.f32 %v4177
    %vm4184 = vmor %vm4182, %vm4183
    %v4185 = vsel %vm4184, %v4177, %v4181
    %v4186 = vand.u32 2147483647, %v4176
    %vm4187 = vcmp.eq.f32.partialorder %v4186, 8.507059e+37
    %v4188 = vand.u32 %v4176, 2147483648
    %v4189 = vor.u32 1.1754944e-38, %v4188
    %v4190 = vsel %vm4187, %v4189, %v4185
    %v4191 = vmul.f32 1.0, %v4190
    %v4192 = vmul.f32 %v4171, %v3875
    %v4193 = vmul.f32 %v4152, %v4172
    %v4194 = vadd.f32 %v4192, %v4193
    %v4195 = vtanh.pop %v4194
    %v4196 = vmul.f32 %v4191, %v4195
    %v4197 = vpack.c.bf16 %v4196, %v4196
    %4198 = vst [vmem:[#allocation9 + $0x30] sm:$0xf] %v4197
    %v4199 = vld [vmem:[#allocation6 + $0xd0] sm:$0xff]
    %v4200 = vld [vmem:[#allocation6 + $0xd8] sm:$0xff]
    %v4201 = vunpack.c.l.bf16 %v4199
    %v4202 = vunpack.c.h.bf16 %v4199
    %v4203 = vunpack.c.l.bf16 %v4200
    %v4204 = vunpack.c.h.bf16 %v4200
    %v4205 = vld [vmem:[#allocation2] sm:$0xff]
    %v4206 = vld [vmem:[#allocation2 + $0x8] sm:$0xff]
    %v4207 = vld [vmem:[#allocation2 + $0x10] sm:$0xff]
    %v4208 = vld [vmem:[#allocation2 + $0x18] sm:$0xff]
    %v4209 = vld [vmem:[#allocation2 + $0x20] sm:$0xff]
    %v4210 = vld [vmem:[#allocation2 + $0x28] sm:$0xff]
    %v4211 = vld [vmem:[#allocation2 + $0x30] sm:$0xff]
    %v4212 = vld [vmem:[#allocation2 + $0x38] sm:$0xff]
    %v4213 = vld [vmem:[#allocation2 + $0x40] sm:$0xff]
    %v4214 = vld [vmem:[#allocation2 + $0x48] sm:$0xff]
    %v4215 = vld [vmem:[#allocation2 + $0x50] sm:$0xff]
    %v4216 = vld [vmem:[#allocation2 + $0x58] sm:$0xff]
    %v4217 = vld [vmem:[#allocation2 + $0x60] sm:$0xff]
    %v4218 = vld [vmem:[#allocation2 + $0x68] sm:$0xff]
    %v4219 = vld [vmem:[#allocation2 + $0x70] sm:$0xff]
    %v4220 = vld [vmem:[#allocation2 + $0x78] sm:$0xff]
    %v4221 = vld [vmem:[#allocation2 + $0x80] sm:$0xff]
    %v4222 = vld [vmem:[#allocation2 + $0x88] sm:$0xff]
    %v4223 = vld [vmem:[#allocation2 + $0x90] sm:$0xff]
    %v4224 = vld [vmem:[#allocation2 + $0x98] sm:$0xff]
    %v4225 = vld [vmem:[#allocation2 + $0xa0] sm:$0xff]
    %v4226 = vld [vmem:[#allocation2 + $0xa8] sm:$0xff]
    %v4227 = vld [vmem:[#allocation2 + $0xb0] sm:$0xff]
    %v4228 = vld [vmem:[#allocation2 + $0xb8] sm:$0xff]
    %v4229 = vld [vmem:[#allocation2 + $0xc0] sm:$0xff]
    %v4230 = vld [vmem:[#allocation2 + $0xc8] sm:$0xff]
    %v4231 = vld [vmem:[#allocation2 + $0xd0] sm:$0xff]
    %v4232 = vld [vmem:[#allocation2 + $0xd8] sm:$0xff]
    %v4233 = vld [vmem:[#allocation2 + $0xe0] sm:$0xff]
    %v4234 = vld [vmem:[#allocation2 + $0xe8] sm:$0xff]
    %v4235 = vld [vmem:[#allocation2 + $0xf0] sm:$0xff]
    %v4236 = vld [vmem:[#allocation2 + $0xf8] sm:$0xff]
    %v4269 = vunpack.c.l.b16 %v4205
    %v4270 = vunpack.c.h.b16 %v4205
    %v4271 = vunpack.c.l.b16 %v4206
    %v4272 = vunpack.c.h.b16 %v4206
    %v4273 = vunpack.c.l.b16 %v4207
    %v4274 = vunpack.c.h.b16 %v4207
    %v4275 = vunpack.c.l.b16 %v4208
    %v4276 = vunpack.c.h.b16 %v4208
    %v4277 = vunpack.c.l.b16 %v4209
    %v4278 = vunpack.c.h.b16 %v4209
    %v4279 = vunpack.c.l.b16 %v4210
    %v4280 = vunpack.c.h.b16 %v4210
    %v4281 = vunpack.c.l.b16 %v4211
    %v4282 = vunpack.c.h.b16 %v4211
    %v4283 = vunpack.c.l.b16 %v4212
    %v4284 = vunpack.c.h.b16 %v4212
    %v4285 = vunpack.c.l.b16 %v4213
    %v4286 = vunpack.c.h.b16 %v4213
    %v4287 = vunpack.c.l.b16 %v4214
    %v4288 = vunpack.c.h.b16 %v4214
    %v4289 = vunpack.c.l.b16 %v4215
    %v4290 = vunpack.c.h.b16 %v4215
    %v4291 = vunpack.c.l.b16 %v4216
    %v4292 = vunpack.c.h.b16 %v4216
    %v4293 = vunpack.c.l.b16 %v4217
    %v4294 = vunpack.c.h.b16 %v4217
    %v4295 = vunpack.c.l.b16 %v4218
    %v4296 = vunpack.c.h.b16 %v4218
    %v4297 = vunpack.c.l.b16 %v4219
    %v4298 = vunpack.c.h.b16 %v4219
    %v4299 = vunpack.c.l.b16 %v4220
    %v4300 = vunpack.c.h.b16 %v4220
    %v4301 = vunpack.c.l.b16 %v4221
    %v4302 = vunpack.c.h.b16 %v4221
    %v4303 = vunpack.c.l.b16 %v4222
    %v4304 = vunpack.c.h.b16 %v4222
    %v4305 = vunpack.c.l.b16 %v4223
    %v4306 = vunpack.c.h.b16 %v4223
    %v4307 = vunpack.c.l.b16 %v4224
    %v4308 = vunpack.c.h.b16 %v4224
    %v4309 = vunpack.c.l.b16 %v4225
    %v4310 = vunpack.c.h.b16 %v4225
    %v4311 = vunpack.c.l.b16 %v4226
    %v4312 = vunpack.c.h.b16 %v4226
    %v4313 = vunpack.c.l.b16 %v4227
    %v4314 = vunpack.c.h.b16 %v4227
    %v4315 = vunpack.c.l.b16 %v4228
    %v4316 = vunpack.c.h.b16 %v4228
    %v4317 = vunpack.c.l.b16 %v4229
    %v4318 = vunpack.c.h.b16 %v4229
    %v4319 = vunpack.c.l.b16 %v4230
    %v4320 = vunpack.c.h.b16 %v4230
    %v4321 = vunpack.c.l.b16 %v4231
    %v4322 = vunpack.c.h.b16 %v4231
    %v4323 = vunpack.c.l.b16 %v4232
    %v4324 = vunpack.c.h.b16 %v4232
    %v4325 = vunpack.c.l.b16 %v4233
    %v4326 = vunpack.c.h.b16 %v4233
    %v4327 = vunpack.c.l.b16 %v4234
    %v4328 = vunpack.c.h.b16 %v4234
    %v4329 = vunpack.c.l.b16 %v4235
    %v4330 = vunpack.c.h.b16 %v4235
    %v4331 = vunpack.c.l.b16 %v4236
    %v4332 = vunpack.c.h.b16 %v4236
    %v4333 = vpack.c.b16 %v4273, %v4269
    %v4334 = vpack.c.b16 %v4274, %v4270
    %v4335 = vpack.c.b16 %v4275, %v4271
    %v4336 = vpack.c.b16 %v4276, %v4272
    %v4337 = vpack.c.b16 %v4281, %v4277
    %v4338 = vpack.c.b16 %v4282, %v4278
    %v4339 = vpack.c.b16 %v4283, %v4279
    %v4340 = vpack.c.b16 %v4284, %v4280
    %v4341 = vpack.c.b16 %v4289, %v4285
    %v4342 = vpack.c.b16 %v4290, %v4286
    %v4343 = vpack.c.b16 %v4291, %v4287
    %v4344 = vpack.c.b16 %v4292, %v4288
    %v4345 = vpack.c.b16 %v4297, %v4293
    %v4346 = vpack.c.b16 %v4298, %v4294
    %v4347 = vpack.c.b16 %v4299, %v4295
    %v4348 = vpack.c.b16 %v4300, %v4296
    %v4349 = vpack.c.b16 %v4305, %v4301
    %v4350 = vpack.c.b16 %v4306, %v4302
    %v4351 = vpack.c.b16 %v4307, %v4303
    %v4352 = vpack.c.b16 %v4308, %v4304
    %v4353 = vpack.c.b16 %v4313, %v4309
    %v4354 = vpack.c.b16 %v4314, %v4310
    %v4355 = vpack.c.b16 %v4315, %v4311
    %v4356 = vpack.c.b16 %v4316, %v4312
    %v4357 = vpack.c.b16 %v4321, %v4317
    %v4358 = vpack.c.b16 %v4322, %v4318
    %v4359 = vpack.c.b16 %v4323, %v4319
    %v4360 = vpack.c.b16 %v4324, %v4320
    %v4361 = vpack.c.b16 %v4329, %v4325
    %v4362 = vpack.c.b16 %v4330, %v4326
    %v4363 = vpack.c.b16 %v4331, %v4327
    %v4364 = vpack.c.b16 %v4332, %v4328
    %4397 = vmatpush.bf16.msra.mxu0 %v4361
    %4398 = vmatpush.bf16.msra.mxu0 %v4357
    %4399 = vmatpush.bf16.msra.mxu0 %v4353
    %4400 = vmatpush.bf16.msra.mxu0 %v4349
    %4401 = vmatpush.bf16.msra.mxu0 %v4345
    %4402 = vmatpush.bf16.msra.mxu0 %v4341
    %4403 = vmatpush.bf16.msra.mxu0 %v4337
    %4404 = vmatpush.bf16.msra.mxu0 %v4333
    %4405 = vmatmul.bf16.gmra.mxu0 %v4197
    %v4406 = vpop.f32.mrf.mxu0
    %v4407 = vadd.f32 0.0, %v4406
    %v4408 = vpop.f32.mrf.mxu0
    %4409 = vdwg.mxu0
    %4410 = vmatpush.bf16.msra.mxu0 %v4362
    %4411 = vmatpush.bf16.msra.mxu0 %v4358
    %4412 = vmatpush.bf16.msra.mxu0 %v4354
    %4413 = vmatpush.bf16.msra.mxu0 %v4350
    %4414 = vmatpush.bf16.msra.mxu0 %v4346
    %4415 = vmatpush.bf16.msra.mxu0 %v4342
    %4416 = vmatpush.bf16.msra.mxu0 %v4338
    %4417 = vmatpush.bf16.msra.mxu0 %v4334
    %4418 = vmatmul.bf16.gmra.mxu0 %v4197
    %v4419 = vpop.f32.mrf.mxu0
    %v4420 = vadd.f32 0.0, %v4419
    %v4421 = vpop.f32.mrf.mxu0
    %4422 = vdwg.mxu0
    %4423 = vmatpush.bf16.msra.mxu0 %v4363
    %4424 = vmatpush.bf16.msra.mxu0 %v4359
    %4425 = vmatpush.bf16.msra.mxu0 %v4355
    %4426 = vmatpush.bf16.msra.mxu0 %v4351
    %4427 = vmatpush.bf16.msra.mxu0 %v4347
    %4428 = vmatpush.bf16.msra.mxu0 %v4343
    %4429 = vmatpush.bf16.msra.mxu0 %v4339
    %4430 = vmatpush.bf16.msra.mxu0 %v4335
    %4431 = vmatmul.bf16.gmra.mxu0 %v4197
    %v4432 = vpop.f32.mrf.mxu0
    %v4433 = vadd.f32 0.0, %v4432
    %v4434 = vpop.f32.mrf.mxu0
    %4435 = vdwg.mxu0
    %4436 = vmatpush.bf16.msra.mxu0 %v4364
    %4437 = vmatpush.bf16.msra.mxu0 %v4360
    %4438 = vmatpush.bf16.msra.mxu0 %v4356
    %4439 = vmatpush.bf16.msra.mxu0 %v4352
    %4440 = vmatpush.bf16.msra.mxu0 %v4348
    %4441 = vmatpush.bf16.msra.mxu0 %v4344
    %4442 = vmatpush.bf16.msra.mxu0 %v4340
    %4443 = vmatpush.bf16.msra.mxu0 %v4336
    %4444 = vmatmul.bf16.gmra.mxu0 %v4197
    %v4445 = vpop.f32.mrf.mxu0
    %v4446 = vadd.f32 0.0, %v4445
    %v4447 = vpop.f32.mrf.mxu0
    %4448 = vdwg.mxu0
    %v4449 = vadd.f32 %v4201, %v4407
    %v4450 = vadd.f32 %v4202, %v4420
    %v4451 = vadd.f32 %v4203, %v4433
    %v4452 = vadd.f32 %v4204, %v4446
    %v4453 = vxor.u32 %v4449, 2147483648
    %v4454 = vmul.f32 %v4453, 1.442695
    %v4455 = vpow.pop %v4454
    %v4456 = vadd.f32 %v4455, 1.0
    %v4457 = vrcp.pop %v4456
    %v4458 = vmul.f32 %v4456, %v4457
    %v4459 = vsub.f32 1.0, %v4458
    %v4460 = vmul.f32 %v4457, %v4459
    %v4461 = vadd.f32 %v4457, %v4460
    %vm4462 = vweird.f32 %v4456
    %vm4463 = vweird.f32 %v4457
    %vm4464 = vmor %vm4462, %vm4463
    %v4465 = vsel %vm4464, %v4457, %v4461
    %v4466 = vand.u32 2147483647, %v4456
    %vm4467 = vcmp.eq.f32.partialorder %v4466, 8.507059e+37
    %v4468 = vand.u32 %v4456, 2147483648
    %v4469 = vor.u32 1.1754944e-38, %v4468
    %v4470 = vsel %vm4467, %v4469, %v4465
    %v4471 = vmul.f32 1.0, %v4470
    %v4472 = vxor.u32 %v4450, 2147483648
    %v4473 = vmul.f32 %v4472, 1.442695
    %v4474 = vpow.pop %v4473
    %v4475 = vadd.f32 %v4474, 1.0
    %v4476 = vrcp.pop %v4475
    %v4477 = vmul.f32 %v4475, %v4476
    %v4478 = vsub.f32 1.0, %v4477
    %v4479 = vmul.f32 %v4476, %v4478
    %v4480 = vadd.f32 %v4476, %v4479
    %vm4481 = vweird.f32 %v4475
    %vm4482 = vweird.f32 %v4476
    %vm4483 = vmor %vm4481, %vm4482
    %v4484 = vsel %vm4483, %v4476, %v4480
    %v4485 = vand.u32 2147483647, %v4475
    %vm4486 = vcmp.eq.f32.partialorder %v4485, 8.507059e+37
    %v4487 = vand.u32 %v4475, 2147483648
    %v4488 = vor.u32 1.1754944e-38, %v4487
    %v4489 = vsel %vm4486, %v4488, %v4484
    %v4490 = vmul.f32 1.0, %v4489
    %v4491 = vtanh.pop %v4451
    %v4492 = vxor.u32 %v4452, 2147483648
    %v4493 = vmul.f32 %v4492, 1.442695
    %v4494 = vpow.pop %v4493
    %v4495 = vadd.f32 %v4494, 1.0
    %v4496 = vrcp.pop %v4495
    %v4497 = vmul.f32 %v4495, %v4496
    %v4498 = vsub.f32 1.0, %v4497
    %v4499 = vmul.f32 %v4496, %v4498
    %v4500 = vadd.f32 %v4496, %v4499
    %vm4501 = vweird.f32 %v4495
    %vm4502 = vweird.f32 %v4496
    %vm4503 = vmor %vm4501, %vm4502
    %v4504 = vsel %vm4503, %v4496, %v4500
    %v4505 = vand.u32 2147483647, %v4495
    %vm4506 = vcmp.eq.f32.partialorder %v4505, 8.507059e+37
    %v4507 = vand.u32 %v4495, 2147483648
    %v4508 = vor.u32 1.1754944e-38, %v4507
    %v4509 = vsel %vm4506, %v4508, %v4504
    %v4510 = vmul.f32 1.0, %v4509
    %v4511 = vmul.f32 %v4490, %v4194
    %v4512 = vmul.f32 %v4471, %v4491
    %v4513 = vadd.f32 %v4511, %v4512
    %v4514 = vtanh.pop %v4513
    %v4515 = vmul.f32 %v4510, %v4514
    %v4516 = vpack.c.bf16 %v4515, %v4515
    %4517 = vst [vmem:[#allocation9 + $0x34] sm:$0xf] %v4516
    %v4518 = vld [vmem:[#allocation6 + $0xe0] sm:$0xff]
    %v4519 = vld [vmem:[#allocation6 + $0xe8] sm:$0xff]
    %v4520 = vunpack.c.l.bf16 %v4518
    %v4521 = vunpack.c.h.bf16 %v4518
    %v4522 = vunpack.c.l.bf16 %v4519
    %v4523 = vunpack.c.h.bf16 %v4519
    %v4524 = vld [vmem:[#allocation2] sm:$0xff]
    %v4525 = vld [vmem:[#allocation2 + $0x8] sm:$0xff]
    %v4526 = vld [vmem:[#allocation2 + $0x10] sm:$0xff]
    %v4527 = vld [vmem:[#allocation2 + $0x18] sm:$0xff]
    %v4528 = vld [vmem:[#allocation2 + $0x20] sm:$0xff]
    %v4529 = vld [vmem:[#allocation2 + $0x28] sm:$0xff]
    %v4530 = vld [vmem:[#allocation2 + $0x30] sm:$0xff]
    %v4531 = vld [vmem:[#allocation2 + $0x38] sm:$0xff]
    %v4532 = vld [vmem:[#allocation2 + $0x40] sm:$0xff]
    %v4533 = vld [vmem:[#allocation2 + $0x48] sm:$0xff]
    %v4534 = vld [vmem:[#allocation2 + $0x50] sm:$0xff]
    %v4535 = vld [vmem:[#allocation2 + $0x58] sm:$0xff]
    %v4536 = vld [vmem:[#allocation2 + $0x60] sm:$0xff]
    %v4537 = vld [vmem:[#allocation2 + $0x68] sm:$0xff]
    %v4538 = vld [vmem:[#allocation2 + $0x70] sm:$0xff]
    %v4539 = vld [vmem:[#allocation2 + $0x78] sm:$0xff]
    %v4540 = vld [vmem:[#allocation2 + $0x80] sm:$0xff]
    %v4541 = vld [vmem:[#allocation2 + $0x88] sm:$0xff]
    %v4542 = vld [vmem:[#allocation2 + $0x90] sm:$0xff]
    %v4543 = vld [vmem:[#allocation2 + $0x98] sm:$0xff]
    %v4544 = vld [vmem:[#allocation2 + $0xa0] sm:$0xff]
    %v4545 = vld [vmem:[#allocation2 + $0xa8] sm:$0xff]
    %v4546 = vld [vmem:[#allocation2 + $0xb0] sm:$0xff]
    %v4547 = vld [vmem:[#allocation2 + $0xb8] sm:$0xff]
    %v4548 = vld [vmem:[#allocation2 + $0xc0] sm:$0xff]
    %v4549 = vld [vmem:[#allocation2 + $0xc8] sm:$0xff]
    %v4550 = vld [vmem:[#allocation2 + $0xd0] sm:$0xff]
    %v4551 = vld [vmem:[#allocation2 + $0xd8] sm:$0xff]
    %v4552 = vld [vmem:[#allocation2 + $0xe0] sm:$0xff]
    %v4553 = vld [vmem:[#allocation2 + $0xe8] sm:$0xff]
    %v4554 = vld [vmem:[#allocation2 + $0xf0] sm:$0xff]
    %v4555 = vld [vmem:[#allocation2 + $0xf8] sm:$0xff]
    %v4588 = vunpack.c.l.b16 %v4524
    %v4589 = vunpack.c.h.b16 %v4524
    %v4590 = vunpack.c.l.b16 %v4525
    %v4591 = vunpack.c.h.b16 %v4525
    %v4592 = vunpack.c.l.b16 %v4526
    %v4593 = vunpack.c.h.b16 %v4526
    %v4594 = vunpack.c.l.b16 %v4527
    %v4595 = vunpack.c.h.b16 %v4527
    %v4596 = vunpack.c.l.b16 %v4528
    %v4597 = vunpack.c.h.b16 %v4528
    %v4598 = vunpack.c.l.b16 %v4529
    %v4599 = vunpack.c.h.b16 %v4529
    %v4600 = vunpack.c.l.b16 %v4530
    %v4601 = vunpack.c.h.b16 %v4530
    %v4602 = vunpack.c.l.b16 %v4531
    %v4603 = vunpack.c.h.b16 %v4531
    %v4604 = vunpack.c.l.b16 %v4532
    %v4605 = vunpack.c.h.b16 %v4532
    %v4606 = vunpack.c.l.b16 %v4533
    %v4607 = vunpack.c.h.b16 %v4533
    %v4608 = vunpack.c.l.b16 %v4534
    %v4609 = vunpack.c.h.b16 %v4534
    %v4610 = vunpack.c.l.b16 %v4535
    %v4611 = vunpack.c.h.b16 %v4535
    %v4612 = vunpack.c.l.b16 %v4536
    %v4613 = vunpack.c.h.b16 %v4536
    %v4614 = vunpack.c.l.b16 %v4537
    %v4615 = vunpack.c.h.b16 %v4537
    %v4616 = vunpack.c.l.b16 %v4538
    %v4617 = vunpack.c.h.b16 %v4538
    %v4618 = vunpack.c.l.b16 %v4539
    %v4619 = vunpack.c.h.b16 %v4539
    %v4620 = vunpack.c.l.b16 %v4540
    %v4621 = vunpack.c.h.b16 %v4540
    %v4622 = vunpack.c.l.b16 %v4541
    %v4623 = vunpack.c.h.b16 %v4541
    %v4624 = vunpack.c.l.b16 %v4542
    %v4625 = vunpack.c.h.b16 %v4542
    %v4626 = vunpack.c.l.b16 %v4543
    %v4627 = vunpack.c.h.b16 %v4543
    %v4628 = vunpack.c.l.b16 %v4544
    %v4629 = vunpack.c.h.b16 %v4544
    %v4630 = vunpack.c.l.b16 %v4545
    %v4631 = vunpack.c.h.b16 %v4545
    %v4632 = vunpack.c.l.b16 %v4546
    %v4633 = vunpack.c.h.b16 %v4546
    %v4634 = vunpack.c.l.b16 %v4547
    %v4635 = vunpack.c.h.b16 %v4547
    %v4636 = vunpack.c.l.b16 %v4548
    %v4637 = vunpack.c.h.b16 %v4548
    %v4638 = vunpack.c.l.b16 %v4549
    %v4639 = vunpack.c.h.b16 %v4549
    %v4640 = vunpack.c.l.b16 %v4550
    %v4641 = vunpack.c.h.b16 %v4550
    %v4642 = vunpack.c.l.b16 %v4551
    %v4643 = vunpack.c.h.b16 %v4551
    %v4644 = vunpack.c.l.b16 %v4552
    %v4645 = vunpack.c.h.b16 %v4552
    %v4646 = vunpack.c.l.b16 %v4553
    %v4647 = vunpack.c.h.b16 %v4553
    %v4648 = vunpack.c.l.b16 %v4554
    %v4649 = vunpack.c.h.b16 %v4554
    %v4650 = vunpack.c.l.b16 %v4555
    %v4651 = vunpack.c.h.b16 %v4555
    %v4652 = vpack.c.b16 %v4592, %v4588
    %v4653 = vpack.c.b16 %v4593, %v4589
    %v4654 = vpack.c.b16 %v4594, %v4590
    %v4655 = vpack.c.b16 %v4595, %v4591
    %v4656 = vpack.c.b16 %v4600, %v4596
    %v4657 = vpack.c.b16 %v4601, %v4597
    %v4658 = vpack.c.b16 %v4602, %v4598
    %v4659 = vpack.c.b16 %v4603, %v4599
    %v4660 = vpack.c.b16 %v4608, %v4604
    %v4661 = vpack.c.b16 %v4609, %v4605
    %v4662 = vpack.c.b16 %v4610, %v4606
    %v4663 = vpack.c.b16 %v4611, %v4607
    %v4664 = vpack.c.b16 %v4616, %v4612
    %v4665 = vpack.c.b16 %v4617, %v4613
    %v4666 = vpack.c.b16 %v4618, %v4614
    %v4667 = vpack.c.b16 %v4619, %v4615
    %v4668 = vpack.c.b16 %v4624, %v4620
    %v4669 = vpack.c.b16 %v4625, %v4621
    %v4670 = vpack.c.b16 %v4626, %v4622
    %v4671 = vpack.c.b16 %v4627, %v4623
    %v4672 = vpack.c.b16 %v4632, %v4628
    %v4673 = vpack.c.b16 %v4633, %v4629
    %v4674 = vpack.c.b16 %v4634, %v4630
    %v4675 = vpack.c.b16 %v4635, %v4631
    %v4676 = vpack.c.b16 %v4640, %v4636
    %v4677 = vpack.c.b16 %v4641, %v4637
    %v4678 = vpack.c.b16 %v4642, %v4638
    %v4679 = vpack.c.b16 %v4643, %v4639
    %v4680 = vpack.c.b16 %v4648, %v4644
    %v4681 = vpack.c.b16 %v4649, %v4645
    %v4682 = vpack.c.b16 %v4650, %v4646
    %v4683 = vpack.c.b16 %v4651, %v4647
    %4716 = vmatpush.bf16.msra.mxu0 %v4680
    %4717 = vmatpush.bf16.msra.mxu0 %v4676
    %4718 = vmatpush.bf16.msra.mxu0 %v4672
    %4719 = vmatpush.bf16.msra.mxu0 %v4668
    %4720 = vmatpush.bf16.msra.mxu0 %v4664
    %4721 = vmatpush.bf16.msra.mxu0 %v4660
    %4722 = vmatpush.bf16.msra.mxu0 %v4656
    %4723 = vmatpush.bf16.msra.mxu0 %v4652
    %4724 = vmatmul.bf16.gmra.mxu0 %v4516
    %v4725 = vpop.f32.mrf.mxu0
    %v4726 = vadd.f32 0.0, %v4725
    %v4727 = vpop.f32.mrf.mxu0
    %4728 = vdwg.mxu0
    %4729 = vmatpush.bf16.msra.mxu0 %v4681
    %4730 = vmatpush.bf16.msra.mxu0 %v4677
    %4731 = vmatpush.bf16.msra.mxu0 %v4673
    %4732 = vmatpush.bf16.msra.mxu0 %v4669
    %4733 = vmatpush.bf16.msra.mxu0 %v4665
    %4734 = vmatpush.bf16.msra.mxu0 %v4661
    %4735 = vmatpush.bf16.msra.mxu0 %v4657
    %4736 = vmatpush.bf16.msra.mxu0 %v4653
    %4737 = vmatmul.bf16.gmra.mxu0 %v4516
    %v4738 = vpop.f32.mrf.mxu0
    %v4739 = vadd.f32 0.0, %v4738
    %v4740 = vpop.f32.mrf.mxu0
    %4741 = vdwg.mxu0
    %4742 = vmatpush.bf16.msra.mxu0 %v4682
    %4743 = vmatpush.bf16.msra.mxu0 %v4678
    %4744 = vmatpush.bf16.msra.mxu0 %v4674
    %4745 = vmatpush.bf16.msra.mxu0 %v4670
    %4746 = vmatpush.bf16.msra.mxu0 %v4666
    %4747 = vmatpush.bf16.msra.mxu0 %v4662
    %4748 = vmatpush.bf16.msra.mxu0 %v4658
    %4749 = vmatpush.bf16.msra.mxu0 %v4654
    %4750 = vmatmul.bf16.gmra.mxu0 %v4516
    %v4751 = vpop.f32.mrf.mxu0
    %v4752 = vadd.f32 0.0, %v4751
    %v4753 = vpop.f32.mrf.mxu0
    %4754 = vdwg.mxu0
    %4755 = vmatpush.bf16.msra.mxu0 %v4683
    %4756 = vmatpush.bf16.msra.mxu0 %v4679
    %4757 = vmatpush.bf16.msra.mxu0 %v4675
    %4758 = vmatpush.bf16.msra.mxu0 %v4671
    %4759 = vmatpush.bf16.msra.mxu0 %v4667
    %4760 = vmatpush.bf16.msra.mxu0 %v4663
    %4761 = vmatpush.bf16.msra.mxu0 %v4659
    %4762 = vmatpush.bf16.msra.mxu0 %v4655
    %4763 = vmatmul.bf16.gmra.mxu0 %v4516
    %v4764 = vpop.f32.mrf.mxu0
    %v4765 = vadd.f32 0.0, %v4764
    %v4766 = vpop.f32.mrf.mxu0
    %4767 = vdwg.mxu0
    %v4768 = vadd.f32 %v4520, %v4726
    %v4769 = vadd.f32 %v4521, %v4739
    %v4770 = vadd.f32 %v4522, %v4752
    %v4771 = vadd.f32 %v4523, %v4765
    %v4772 = vxor.u32 %v4768, 2147483648
    %v4773 = vmul.f32 %v4772, 1.442695
    %v4774 = vpow.pop %v4773
    %v4775 = vadd.f32 %v4774, 1.0
    %v4776 = vrcp.pop %v4775
    %v4777 = vmul.f32 %v4775, %v4776
    %v4778 = vsub.f32 1.0, %v4777
    %v4779 = vmul.f32 %v4776, %v4778
    %v4780 = vadd.f32 %v4776, %v4779
    %vm4781 = vweird.f32 %v4775
    %vm4782 = vweird.f32 %v4776
    %vm4783 = vmor %vm4781, %vm4782
    %v4784 = vsel %vm4783, %v4776, %v4780
    %v4785 = vand.u32 2147483647, %v4775
    %vm4786 = vcmp.eq.f32.partialorder %v4785, 8.507059e+37
    %v4787 = vand.u32 %v4775, 2147483648
    %v4788 = vor.u32 1.1754944e-38, %v4787
    %v4789 = vsel %vm4786, %v4788, %v4784
    %v4790 = vmul.f32 1.0, %v4789
    %v4791 = vxor.u32 %v4769, 2147483648
    %v4792 = vmul.f32 %v4791, 1.442695
    %v4793 = vpow.pop %v4792
    %v4794 = vadd.f32 %v4793, 1.0
    %v4795 = vrcp.pop %v4794
    %v4796 = vmul.f32 %v4794, %v4795
    %v4797 = vsub.f32 1.0, %v4796
    %v4798 = vmul.f32 %v4795, %v4797
    %v4799 = vadd.f32 %v4795, %v4798
    %vm4800 = vweird.f32 %v4794
    %vm4801 = vweird.f32 %v4795
    %vm4802 = vmor %vm4800, %vm4801
    %v4803 = vsel %vm4802, %v4795, %v4799
    %v4804 = vand.u32 2147483647, %v4794
    %vm4805 = vcmp.eq.f32.partialorder %v4804, 8.507059e+37
    %v4806 = vand.u32 %v4794, 2147483648
    %v4807 = vor.u32 1.1754944e-38, %v4806
    %v4808 = vsel %vm4805, %v4807, %v4803
    %v4809 = vmul.f32 1.0, %v4808
    %v4810 = vtanh.pop %v4770
    %v4811 = vxor.u32 %v4771, 2147483648
    %v4812 = vmul.f32 %v4811, 1.442695
    %v4813 = vpow.pop %v4812
    %v4814 = vadd.f32 %v4813, 1.0
    %v4815 = vrcp.pop %v4814
    %v4816 = vmul.f32 %v4814, %v4815
    %v4817 = vsub.f32 1.0, %v4816
    %v4818 = vmul.f32 %v4815, %v4817
    %v4819 = vadd.f32 %v4815, %v4818
    %vm4820 = vweird.f32 %v4814
    %vm4821 = vweird.f32 %v4815
    %vm4822 = vmor %vm4820, %vm4821
    %v4823 = vsel %vm4822, %v4815, %v4819
    %v4824 = vand.u32 2147483647, %v4814
    %vm4825 = vcmp.eq.f32.partialorder %v4824, 8.507059e+37
    %v4826 = vand.u32 %v4814, 2147483648
    %v4827 = vor.u32 1.1754944e-38, %v4826
    %v4828 = vsel %vm4825, %v4827, %v4823
    %v4829 = vmul.f32 1.0, %v4828
    %v4830 = vmul.f32 %v4809, %v4513
    %v4831 = vmul.f32 %v4790, %v4810
    %v4832 = vadd.f32 %v4830, %v4831
    %v4833 = vtanh.pop %v4832
    %v4834 = vmul.f32 %v4829, %v4833
    %v4835 = vpack.c.bf16 %v4834, %v4834
    %4836 = vst [vmem:[#allocation9 + $0x38] sm:$0xf] %v4835
    %v4837 = vld [vmem:[#allocation6 + $0xf0] sm:$0xff]
    %v4838 = vld [vmem:[#allocation6 + $0xf8] sm:$0xff]
    %v4839 = vunpack.c.l.bf16 %v4837
    %v4840 = vunpack.c.h.bf16 %v4837
    %v4841 = vunpack.c.l.bf16 %v4838
    %v4842 = vunpack.c.h.bf16 %v4838
    %v4843 = vld [vmem:[#allocation2] sm:$0xff]
    %v4844 = vld [vmem:[#allocation2 + $0x8] sm:$0xff]
    %v4845 = vld [vmem:[#allocation2 + $0x10] sm:$0xff]
    %v4846 = vld [vmem:[#allocation2 + $0x18] sm:$0xff]
    %v4847 = vld [vmem:[#allocation2 + $0x20] sm:$0xff]
    %v4848 = vld [vmem:[#allocation2 + $0x28] sm:$0xff]
    %v4849 = vld [vmem:[#allocation2 + $0x30] sm:$0xff]
    %v4850 = vld [vmem:[#allocation2 + $0x38] sm:$0xff]
    %v4851 = vld [vmem:[#allocation2 + $0x40] sm:$0xff]
    %v4852 = vld [vmem:[#allocation2 + $0x48] sm:$0xff]
    %v4853 = vld [vmem:[#allocation2 + $0x50] sm:$0xff]
    %v4854 = vld [vmem:[#allocation2 + $0x58] sm:$0xff]
    %v4855 = vld [vmem:[#allocation2 + $0x60] sm:$0xff]
    %v4856 = vld [vmem:[#allocation2 + $0x68] sm:$0xff]
    %v4857 = vld [vmem:[#allocation2 + $0x70] sm:$0xff]
    %v4858 = vld [vmem:[#allocation2 + $0x78] sm:$0xff]
    %v4859 = vld [vmem:[#allocation2 + $0x80] sm:$0xff]
    %v4860 = vld [vmem:[#allocation2 + $0x88] sm:$0xff]
    %v4861 = vld [vmem:[#allocation2 + $0x90] sm:$0xff]
    %v4862 = vld [vmem:[#allocation2 + $0x98] sm:$0xff]
    %v4863 = vld [vmem:[#allocation2 + $0xa0] sm:$0xff]
    %v4864 = vld [vmem:[#allocation2 + $0xa8] sm:$0xff]
    %v4865 = vld [vmem:[#allocation2 + $0xb0] sm:$0xff]
    %v4866 = vld [vmem:[#allocation2 + $0xb8] sm:$0xff]
    %v4867 = vld [vmem:[#allocation2 + $0xc0] sm:$0xff]
    %v4868 = vld [vmem:[#allocation2 + $0xc8] sm:$0xff]
    %v4869 = vld [vmem:[#allocation2 + $0xd0] sm:$0xff]
    %v4870 = vld [vmem:[#allocation2 + $0xd8] sm:$0xff]
    %v4871 = vld [vmem:[#allocation2 + $0xe0] sm:$0xff]
    %v4872 = vld [vmem:[#allocation2 + $0xe8] sm:$0xff]
    %v4873 = vld [vmem:[#allocation2 + $0xf0] sm:$0xff]
    %v4874 = vld [vmem:[#allocation2 + $0xf8] sm:$0xff]
    %v4907 = vunpack.c.l.b16 %v4843
    %v4908 = vunpack.c.h.b16 %v4843
    %v4909 = vunpack.c.l.b16 %v4844
    %v4910 = vunpack.c.h.b16 %v4844
    %v4911 = vunpack.c.l.b16 %v4845
    %v4912 = vunpack.c.h.b16 %v4845
    %v4913 = vunpack.c.l.b16 %v4846
    %v4914 = vunpack.c.h.b16 %v4846
    %v4915 = vunpack.c.l.b16 %v4847
    %v4916 = vunpack.c.h.b16 %v4847
    %v4917 = vunpack.c.l.b16 %v4848
    %v4918 = vunpack.c.h.b16 %v4848
    %v4919 = vunpack.c.l.b16 %v4849
    %v4920 = vunpack.c.h.b16 %v4849
    %v4921 = vunpack.c.l.b16 %v4850
    %v4922 = vunpack.c.h.b16 %v4850
    %v4923 = vunpack.c.l.b16 %v4851
    %v4924 = vunpack.c.h.b16 %v4851
    %v4925 = vunpack.c.l.b16 %v4852
    %v4926 = vunpack.c.h.b16 %v4852
    %v4927 = vunpack.c.l.b16 %v4853
    %v4928 = vunpack.c.h.b16 %v4853
    %v4929 = vunpack.c.l.b16 %v4854
    %v4930 = vunpack.c.h.b16 %v4854
    %v4931 = vunpack.c.l.b16 %v4855
    %v4932 = vunpack.c.h.b16 %v4855
    %v4933 = vunpack.c.l.b16 %v4856
    %v4934 = vunpack.c.h.b16 %v4856
    %v4935 = vunpack.c.l.b16 %v4857
    %v4936 = vunpack.c.h.b16 %v4857
    %v4937 = vunpack.c.l.b16 %v4858
    %v4938 = vunpack.c.h.b16 %v4858
    %v4939 = vunpack.c.l.b16 %v4859
    %v4940 = vunpack.c.h.b16 %v4859
    %v4941 = vunpack.c.l.b16 %v4860
    %v4942 = vunpack.c.h.b16 %v4860
    %v4943 = vunpack.c.l.b16 %v4861
    %v4944 = vunpack.c.h.b16 %v4861
    %v4945 = vunpack.c.l.b16 %v4862
    %v4946 = vunpack.c.h.b16 %v4862
    %v4947 = vunpack.c.l.b16 %v4863
    %v4948 = vunpack.c.h.b16 %v4863
    %v4949 = vunpack.c.l.b16 %v4864
    %v4950 = vunpack.c.h.b16 %v4864
    %v4951 = vunpack.c.l.b16 %v4865
    %v4952 = vunpack.c.h.b16 %v4865
    %v4953 = vunpack.c.l.b16 %v4866
    %v4954 = vunpack.c.h.b16 %v4866
    %v4955 = vunpack.c.l.b16 %v4867
    %v4956 = vunpack.c.h.b16 %v4867
    %v4957 = vunpack.c.l.b16 %v4868
    %v4958 = vunpack.c.h.b16 %v4868
    %v4959 = vunpack.c.l.b16 %v4869
    %v4960 = vunpack.c.h.b16 %v4869
    %v4961 = vunpack.c.l.b16 %v4870
    %v4962 = vunpack.c.h.b16 %v4870
    %v4963 = vunpack.c.l.b16 %v4871
    %v4964 = vunpack.c.h.b16 %v4871
    %v4965 = vunpack.c.l.b16 %v4872
    %v4966 = vunpack.c.h.b16 %v4872
    %v4967 = vunpack.c.l.b16 %v4873
    %v4968 = vunpack.c.h.b16 %v4873
    %v4969 = vunpack.c.l.b16 %v4874
    %v4970 = vunpack.c.h.b16 %v4874
    %v4971 = vpack.c.b16 %v4911, %v4907
    %v4972 = vpack.c.b16 %v4912, %v4908
    %v4973 = vpack.c.b16 %v4913, %v4909
    %v4974 = vpack.c.b16 %v4914, %v4910
    %v4975 = vpack.c.b16 %v4919, %v4915
    %v4976 = vpack.c.b16 %v4920, %v4916
    %v4977 = vpack.c.b16 %v4921, %v4917
    %v4978 = vpack.c.b16 %v4922, %v4918
    %v4979 = vpack.c.b16 %v4927, %v4923
    %v4980 = vpack.c.b16 %v4928, %v4924
    %v4981 = vpack.c.b16 %v4929, %v4925
    %v4982 = vpack.c.b16 %v4930, %v4926
    %v4983 = vpack.c.b16 %v4935, %v4931
    %v4984 = vpack.c.b16 %v4936, %v4932
    %v4985 = vpack.c.b16 %v4937, %v4933
    %v4986 = vpack.c.b16 %v4938, %v4934
    %v4987 = vpack.c.b16 %v4943, %v4939
    %v4988 = vpack.c.b16 %v4944, %v4940
    %v4989 = vpack.c.b16 %v4945, %v4941
    %v4990 = vpack.c.b16 %v4946, %v4942
    %v4991 = vpack.c.b16 %v4951, %v4947
    %v4992 = vpack.c.b16 %v4952, %v4948
    %v4993 = vpack.c.b16 %v4953, %v4949
    %v4994 = vpack.c.b16 %v4954, %v4950
    %v4995 = vpack.c.b16 %v4959, %v4955
    %v4996 = vpack.c.b16 %v4960, %v4956
    %v4997 = vpack.c.b16 %v4961, %v4957
    %v4998 = vpack.c.b16 %v4962, %v4958
    %v4999 = vpack.c.b16 %v4967, %v4963
    %v5000 = vpack.c.b16 %v4968, %v4964
    %v5001 = vpack.c.b16 %v4969, %v4965
    %v5002 = vpack.c.b16 %v4970, %v4966
    %5035 = vmatpush.bf16.msra.mxu0 %v4999
    %5036 = vmatpush.bf16.msra.mxu0 %v4995
    %5037 = vmatpush.bf16.msra.mxu0 %v4991
    %5038 = vmatpush.bf16.msra.mxu0 %v4987
    %5039 = vmatpush.bf16.msra.mxu0 %v4983
    %5040 = vmatpush.bf16.msra.mxu0 %v4979
    %5041 = vmatpush.bf16.msra.mxu0 %v4975
    %5042 = vmatpush.bf16.msra.mxu0 %v4971
    %5043 = vmatmul.bf16.gmra.mxu0 %v4835
    %v5044 = vpop.f32.mrf.mxu0
    %v5045 = vadd.f32 0.0, %v5044
    %v5046 = vpop.f32.mrf.mxu0
    %5047 = vdwg.mxu0
    %5048 = vmatpush.bf16.msra.mxu0 %v5000
    %5049 = vmatpush.bf16.msra.mxu0 %v4996
    %5050 = vmatpush.bf16.msra.mxu0 %v4992
    %5051 = vmatpush.bf16.msra.mxu0 %v4988
    %5052 = vmatpush.bf16.msra.mxu0 %v4984
    %5053 = vmatpush.bf16.msra.mxu0 %v4980
    %5054 = vmatpush.bf16.msra.mxu0 %v4976
    %5055 = vmatpush.bf16.msra.mxu0 %v4972
    %5056 = vmatmul.bf16.gmra.mxu0 %v4835
    %v5057 = vpop.f32.mrf.mxu0
    %v5058 = vadd.f32 0.0, %v5057
    %v5059 = vpop.f32.mrf.mxu0
    %5060 = vdwg.mxu0
    %5061 = vmatpush.bf16.msra.mxu0 %v5001
    %5062 = vmatpush.bf16.msra.mxu0 %v4997
    %5063 = vmatpush.bf16.msra.mxu0 %v4993
    %5064 = vmatpush.bf16.msra.mxu0 %v4989
    %5065 = vmatpush.bf16.msra.mxu0 %v4985
    %5066 = vmatpush.bf16.msra.mxu0 %v4981
    %5067 = vmatpush.bf16.msra.mxu0 %v4977
    %5068 = vmatpush.bf16.msra.mxu0 %v4973
    %5069 = vmatmul.bf16.gmra.mxu0 %v4835
    %v5070 = vpop.f32.mrf.mxu0
    %v5071 = vadd.f32 0.0, %v5070
    %v5072 = vpop.f32.mrf.mxu0
    %5073 = vdwg.mxu0
    %5074 = vmatpush.bf16.msra.mxu0 %v5002
    %5075 = vmatpush.bf16.msra.mxu0 %v4998
    %5076 = vmatpush.bf16.msra.mxu0 %v4994
    %5077 = vmatpush.bf16.msra.mxu0 %v4990
    %5078 = vmatpush.bf16.msra.mxu0 %v4986
    %5079 = vmatpush.bf16.msra.mxu0 %v4982
    %5080 = vmatpush.bf16.msra.mxu0 %v4978
    %5081 = vmatpush.bf16.msra.mxu0 %v4974
    %5082 = vmatmul.bf16.gmra.mxu0 %v4835
    %v5083 = vpop.f32.mrf.mxu0
    %v5084 = vadd.f32 0.0, %v5083
    %v5085 = vpop.f32.mrf.mxu0
    %5086 = vdwg.mxu0
    %v5087 = vadd.f32 %v4839, %v5045
    %v5088 = vadd.f32 %v4840, %v5058
    %v5089 = vadd.f32 %v4841, %v5071
    %v5090 = vadd.f32 %v4842, %v5084
    %v5091 = vxor.u32 %v5087, 2147483648
    %v5092 = vmul.f32 %v5091, 1.442695
    %v5093 = vpow.pop %v5092
    %v5094 = vadd.f32 %v5093, 1.0
    %v5095 = vrcp.pop %v5094
    %v5096 = vmul.f32 %v5094, %v5095
    %v5097 = vsub.f32 1.0, %v5096
    %v5098 = vmul.f32 %v5095, %v5097
    %v5099 = vadd.f32 %v5095, %v5098
    %vm5100 = vweird.f32 %v5094
    %vm5101 = vweird.f32 %v5095
    %vm5102 = vmor %vm5100, %vm5101
    %v5103 = vsel %vm5102, %v5095, %v5099
    %v5104 = vand.u32 2147483647, %v5094
    %vm5105 = vcmp.eq.f32.partialorder %v5104, 8.507059e+37
    %v5106 = vand.u32 %v5094, 2147483648
    %v5107 = vor.u32 1.1754944e-38, %v5106
    %v5108 = vsel %vm5105, %v5107, %v5103
    %v5109 = vmul.f32 1.0, %v5108
    %v5110 = vxor.u32 %v5088, 2147483648
    %v5111 = vmul.f32 %v5110, 1.442695
    %v5112 = vpow.pop %v5111
    %v5113 = vadd.f32 %v5112, 1.0
    %v5114 = vrcp.pop %v5113
    %v5115 = vmul.f32 %v5113, %v5114
    %v5116 = vsub.f32 1.0, %v5115
    %v5117 = vmul.f32 %v5114, %v5116
    %v5118 = vadd.f32 %v5114, %v5117
    %vm5119 = vweird.f32 %v5113
    %vm5120 = vweird.f32 %v5114
    %vm5121 = vmor %vm5119, %vm5120
    %v5122 = vsel %vm5121, %v5114, %v5118
    %v5123 = vand.u32 2147483647, %v5113
    %vm5124 = vcmp.eq.f32.partialorder %v5123, 8.507059e+37
    %v5125 = vand.u32 %v5113, 2147483648
    %v5126 = vor.u32 1.1754944e-38, %v5125
    %v5127 = vsel %vm5124, %v5126, %v5122
    %v5128 = vmul.f32 1.0, %v5127
    %v5129 = vtanh.pop %v5089
    %v5130 = vxor.u32 %v5090, 2147483648
    %v5131 = vmul.f32 %v5130, 1.442695
    %v5132 = vpow.pop %v5131
    %v5133 = vadd.f32 %v5132, 1.0
    %v5134 = vrcp.pop %v5133
    %v5135 = vmul.f32 %v5133, %v5134
    %v5136 = vsub.f32 1.0, %v5135
    %v5137 = vmul.f32 %v5134, %v5136
    %v5138 = vadd.f32 %v5134, %v5137
    %vm5139 = vweird.f32 %v5133
    %vm5140 = vweird.f32 %v5134
    %vm5141 = vmor %vm5139, %vm5140
    %v5142 = vsel %vm5141, %v5134, %v5138
    %v5143 = vand.u32 2147483647, %v5133
    %vm5144 = vcmp.eq.f32.partialorder %v5143, 8.507059e+37
    %v5145 = vand.u32 %v5133, 2147483648
    %v5146 = vor.u32 1.1754944e-38, %v5145
    %v5147 = vsel %vm5144, %v5146, %v5142
    %v5148 = vmul.f32 1.0, %v5147
    %v5149 = vmul.f32 %v5128, %v4832
    %v5150 = vmul.f32 %v5109, %v5129
    %v5151 = vadd.f32 %v5149, %v5150
    %v5152 = vtanh.pop %v5151
    %v5153 = vmul.f32 %v5148, %v5152
    %v5154 = vpack.c.bf16 %v5153, %v5153
    %5155 = vst [vmem:[#allocation9 + $0x3c] sm:$0xf] %v5154
    %5156 = vst [vmem:[#allocation4] sm:$0xff] %v5153
    %5157 = vst [vmem:[#allocation5] sm:$0xff] %v5151
    // Predicated region
    $region18: #{tpu_custom_call.1} parent=1 // pred_check
      _
    $region19: #{tpu_custom_call.1} parent=1 // pred_check_branch
      %5159 = sbr.rel (0) target = $region21
    $region20: #{tpu_custom_call.1} parent=1 // pred_region
      %5161 = vsyncadd [#allocation8], 0
      %s5162 = sshll.u32 [#allocation9], 4
      %s5163 = int_to_ptr.vmem [resolvable:$true] %s5162
      %s5164 = sshll.u32 %s2, 4
      %s5165 = int_to_ptr.hbm [resolvable:$true] %s5164
      %5170 = dma.vmem_to_hbm [thread:$0]  %s5163, 1024, %s5165, [#allocation8], 64, 64, 4
    $region21: #{tpu_custom_call.1} parent=1 // pred_fallthru
      _
    // Predicated region
    $region22: #{tpu_custom_call.1} parent=1 // pred_check
      _
    $region23: #{tpu_custom_call.1} parent=1 // pred_check_branch
      %5172 = sbr.rel (0) target = $region25
    $region24: #{tpu_custom_call.1} parent=1 // pred_region
      %5174 = dma.done [#allocation8], 1024
    $region25: #{tpu_custom_call.1} parent=1 // pred_fallthru
      _
    %5175 = vsyncpa [#allocation7], 1
    %5176 = vsyncpa [#allocation8], 1
  %5177 = vsyncmov [#allocation3]
  %s5178 = vpop.sfrf %5177
  %p5179 = scmp.eq.s32.totalorder %s5178, 0
  %p5180 = pneg %p5179
  %5182 = shalt.err (%p5180)

</llo_original>
